<compile_context>
chip_gen: v7x
topology: tpu7x:2x2x1
jax: 0.10.0
libtpu: 0.0.40
codegen_flags: <defaults>
</compile_context>

<pallas_src>
import functools

import numpy as np
import jax
import jax.numpy as jnp
from jax import lax
from jax.experimental import pallas as pl
from jax.experimental.pallas import tpu as pltpu

SCORE_THRESH = 0.05
NMS_THRESH = 0.5
BBOX_XFORM_CLIP = float(np.log(1000.0 / 16.0))
WX, WY, WW, WH = 10.0, 10.0, 5.0, 5.0
TO_REMOVE = 1.0


# ---------------------------------------------------------------------------
# Fused kernel: softmax + decode + clip + per-class NMS + nms_filter_duplicates
# ---------------------------------------------------------------------------
def _postprocess_kernel(imsize_ref,           # SMEM (B, 2) int32, [W, H] per image
                        logits_ref,           # VMEM (1, C, N)    f32
                        reg_ref,              # VMEM (1, 4, C, N) f32 (dx,dy,dw,dh planes)
                        prop_ref,             # VMEM (1, 4, N)    f32 (x1,y1,x2,y2 rows)
                        boxes_out_ref,        # VMEM (1, 4, C, N) f32 coordinate planes
                        dedup_out_ref,        # VMEM (1, 8, N)    f32
                        *, n, c):
    b = pl.program_id(0)
    img_w = imsize_ref[b, 0].astype(jnp.float32)
    img_h = imsize_ref[b, 1].astype(jnp.float32)

    # ---------------- softmax over classes (sublane reduce) ----------------
    logits = logits_ref[0].astype(jnp.float32)                     # (C, N)
    m = jnp.max(logits, axis=0, keepdims=True)                     # (1, N)
    e = jnp.exp(logits - m)
    prob = e / jnp.sum(e, axis=0, keepdims=True)                   # exact recip (one-time)

    # ---------------- BoxCoder.decode + clip_to_image ----------------------
    prop = prop_ref[0]                                             # (4, N)
    px1 = prop[0:1]
    py1 = prop[1:2]
    px2 = prop[2:3]
    py2 = prop[3:4]
    widths = px2 - px1 + TO_REMOVE                                 # (1, N)
    heights = py2 - py1 + TO_REMOVE
    ctr_x = px1 + 0.5 * widths
    ctr_y = py1 + 0.5 * heights

    reg = reg_ref[0]                                               # (4, C, N)
    dx = reg[0] * (1.0 / WX)                                       # (C, N)
    dy = reg[1] * (1.0 / WY)
    dw = jnp.minimum(reg[2] * (1.0 / WW), BBOX_XFORM_CLIP)
    dh = jnp.minimum(reg[3] * (1.0 / WH), BBOX_XFORM_CLIP)

    pred_ctr_x = dx * widths + ctr_x
    pred_ctr_y = dy * heights + ctr_y
    pred_w = jnp.exp(dw) * widths
    pred_h = jnp.exp(dh) * heights

    # clip_to_image(remove_empty=False)
    x1 = jnp.clip(pred_ctr_x - 0.5 * pred_w, 0.0, img_w - TO_REMOVE)
    y1 = jnp.clip(pred_ctr_y - 0.5 * pred_h, 0.0, img_h - TO_REMOVE)
    x2 = jnp.clip(pred_ctr_x + 0.5 * pred_w - 1.0, 0.0, img_w - TO_REMOVE)
    y2 = jnp.clip(pred_ctr_y + 0.5 * pred_h - 1.0, 0.0, img_h - TO_REMOVE)

    # lane-dense boxes_per_cls: four contiguous (C, N) full-tile plane stores
    boxes_out_ref[0, 0] = x1
    boxes_out_ref[0, 1] = y1
    boxes_out_ref[0, 2] = x2
    boxes_out_ref[0, 3] = y2

    area = (x2 - x1 + TO_REMOVE) * (y2 - y1 + TO_REMOVE)
    coords5 = jnp.stack([x1, y1, x2, y2, area], axis=0)            # (5, C, N)

    lane_cn = lax.broadcasted_iota(jnp.int32, (c, n), 1)
    row_cn = lax.broadcasted_iota(jnp.int32, (c, n), 0)

    # Packed (score, lowest-index-wins) key: a single lane-max does max+argmax.
    # prob >= 0 so its f32 bits are order-preserving as int32; low idx_bits
    # mantissa bits are traded for the tie-break index (relative tie window
    # ~2^-(23-idx_bits), far below any meaningful score difference).
    idx_bits = max(1, (n - 1).bit_length())
    score_bits = pltpu.bitcast(prob, jnp.int32)
    key = ((score_bits >> idx_bits) << idx_bits) | ((n - 1) - lane_cn)

    # class 0 is background (never processed); score threshold applied here.
    active0 = jnp.where((row_cn > 0) & (prob > SCORE_THRESH), 1.0, 0.0)
    kept0 = jnp.zeros((c, n), jnp.float32)

    # ---------------- greedy NMS, all classes in parallel -------------------
    def nms_body(_, carry):
        active, kept = carry
        masked_key = jnp.where(active > 0.0, key, -1)
        best_key = jnp.max(masked_key, axis=-1, keepdims=True)     # (C, 1) fused max+argmax
        valid = best_key >= 0                                      # any active in row?
        sel = (masked_key == best_key) & valid                     # exact one-hot (C, N)

        # gather [x1,y1,x2,y2,area] of the selected box with ONE stacked reduce
        g = jnp.sum(jnp.where(sel[None], coords5, 0.0),
                    axis=-1, keepdims=True)                        # (5, C, 1)
        bx1, by1, bx2, by2, bar = g[0], g[1], g[2], g[3], g[4]

        xx1 = jnp.maximum(x1, bx1)
        yy1 = jnp.maximum(y1, by1)
        xx2 = jnp.minimum(x2, bx2)
        yy2 = jnp.minimum(y2, by2)
        w = jnp.maximum(xx2 - xx1 + TO_REMOVE, 0.0)
        h = jnp.maximum(yy2 - yy1 + TO_REMOVE, 0.0)
        inter = w * h
        union = area + bar - inter
        # division-free IoU test; (union > 0) keeps degenerate/empty boxes
        # unsuppressed, matching the torch NMS kernel's NaN/negative-iou path.
        sup = (inter > NMS_THRESH * union) & (union > 0.0)

        new_active = jnp.where(sup | sel, 0.0, active)             # suppression + self-removal fused
        new_kept = jnp.where(sel, 1.0, kept)
        return new_active, new_kept

    unroll = True if n <= 32 else 8
    _, kept = lax.fori_loop(0, n, nms_body, (active0, kept0), unroll=unroll)
    # TODO(synk): post_nms_per_cls_topn (=300) cap not applied; N << 300 here.

    # ---------------- nms_filter_duplicates (sublane reduces) ---------------
    dist = prob * kept                                             # (C, N)
    scores_pre = jnp.max(dist, axis=0, keepdims=True)              # (1, N)
    labels_pre = jnp.min(jnp.where(dist == scores_pre, row_cn, c),
                         axis=0, keepdims=True)                    # (1, N) first max
    onehot = row_cn == labels_pre                                  # (C, N) bool
    fcoords = jnp.sum(jnp.where(onehot[None], coords5[:4], 0.0),
                      axis=1)                                      # (4, N) single stacked reduce

    dedup_out_ref[0] = jnp.concatenate(
        [scores_pre, labels_pre.astype(jnp.float32), fcoords,
         jnp.zeros((2, n), jnp.float32)], axis=0)                  # (8, N) lane-dense


# ---------------------------------------------------------------------------
# Batched device pipeline (one pallas_call for all images)
# ---------------------------------------------------------------------------
def _postprocess_batch(class_logits, box_regression, proposal_boxes, image_sizes):
    B, N, C = class_logits.shape
    # wrapper-side relayout to (C, N)-major — fused into the HBM pass XLA
    # already does to stage the inputs; kernel then never transposes.
    logits_cn = class_logits.transpose(0, 2, 1)                          # (B, C, N)
    reg_cn = box_regression.reshape(B, N, C, 4).transpose(0, 3, 2, 1)    # (B, 4, C, N)
    prop_cn = proposal_boxes.transpose(0, 2, 1)                          # (B, 4, N)

    kernel = functools.partial(_postprocess_kernel, n=N, c=C)
    grid_spec = pltpu.PrefetchScalarGridSpec(
        num_scalar_prefetch=1,          # image_sizes -> SMEM (no recompile on size change)
        grid=(B,),
        in_specs=[
            pl.BlockSpec((1, C, N), lambda b, imsz: (b, 0, 0)),
            pl.BlockSpec((1, 4, C, N), lambda b, imsz: (b, 0, 0, 0)),
            pl.BlockSpec((1, 4, N), lambda b, imsz: (b, 0, 0)),
        ],
        out_specs=[
            pl.BlockSpec((1, 4, C, N), lambda b, imsz: (b, 0, 0, 0)),
            pl.BlockSpec((1, 8, N), lambda b, imsz: (b, 0, 0)),
        ],
    )
    # NOTE: at toy sizes VMEM is tiny; if N/C scale up (C~150, N~300) re-derive
    # the per-image block budget and set vmem_limit_bytes explicitly for v7x.
    boxes_out, dedup_out = pl.pallas_call(
        kernel,
        grid_spec=grid_spec,
        out_shape=[jax.ShapeDtypeStruct((B, 4, C, N), jnp.float32),
                   jax.ShapeDtypeStruct((B, 8, N), jnp.float32)],
        compiler_params=pltpu.CompilerParams(
            dimension_semantics=("parallel",)),   # images independent -> both v7x TCs
    )(image_sizes, logits_cn, reg_cn, prop_cn)
    return boxes_out, dedup_out


postprocess_batch = jax.jit(_postprocess_batch)


# ---------------------------------------------------------------------------
# Host glue: dynamic-shape compaction (final_inds = nonzero(scores_pre))
# ---------------------------------------------------------------------------
def finalize_results(boxes_np, dedup_np, logits_np, feats_np):
    B = boxes_np.shape[0]
    results, feats_all = [], []
    for b in range(B):
        scores_pre = dedup_np[b, 0]                                  # (N,)
        labels_pre = dedup_np[b, 1].astype(np.int64)                 # (N,)
        final_boxes = dedup_np[b, 2:6].T                             # (N, 4)
        boxes_per_cls = np.ascontiguousarray(
            boxes_np[b].transpose(2, 1, 0))                          # (N, C, 4)
        final_inds = np.nonzero(scores_pre > 0)[0]
        # TODO(synk): detections_per_img (=100) kthvalue cap not applied; N << 100.
        results.append({
            "bbox": final_boxes[final_inds],
            "pred_scores": scores_pre[final_inds],
            "pred_labels": labels_pre[final_inds],
            "boxes_per_cls": boxes_per_cls[final_inds],
            "predict_logits": logits_np[b][final_inds],
        })
        feats_all.append(feats_np[b][final_inds])
    nms_features = np.concatenate(feats_all, axis=0)
    return nms_features, results


if __name__ == "__main__":
    key = jax.random.PRNGKey(0)
    B, N, C, D = 2, 16, 8, 64            # images / proposals / classes (incl. bg) / feat dim
    image_sizes = [(64, 48), (80, 56)]   # (W, H) per image — data, not a compile constant

    logits_l, reg_l, prop_l, feat_l = [], [], [], []
    for _ in range(B):
        key, k1, k2, k3, k4, k5 = jax.random.split(key, 6)
        logits_l.append(jax.random.normal(k1, (N, C), dtype=jnp.float32))
        reg_l.append(0.5 * jax.random.normal(k2, (N, 4 * C), dtype=jnp.float32))
        xy = jax.random.uniform(k3, (N, 2), minval=0.0, maxval=40.0)
        wh = jax.random.uniform(k4, (N, 2), minval=4.0, maxval=20.0)
        prop_l.append(jnp.concatenate([xy, xy + wh], axis=1).astype(jnp.float32))
        feat_l.append(jax.random.normal(k5, (N, D), dtype=jnp.float32))

    class_logits_b = jnp.stack(logits_l)                    # (B, N, C)
    box_regression_b = jnp.stack(reg_l)                     # (B, N, 4C)
    proposal_boxes_b = jnp.stack(prop_l)                    # (B, N, 4)
    features_b = jnp.stack(feat_l)                          # (B, N, D)
    image_sizes_b = jnp.asarray(image_sizes, dtype=jnp.int32)  # (B, 2)

    # one dispatch for the whole batch
    boxes_out, dedup_out = postprocess_batch(
        class_logits_b, box_regression_b, proposal_boxes_b, image_sizes_b)
    jax.block_until_ready((boxes_out, dedup_out))

    # one host round-trip for everything the dynamic-shape glue needs
    boxes_np, dedup_np, logits_np, feats_np = jax.device_get(
        (boxes_out, dedup_out, class_logits_b, features_b))
    nms_features, results = finalize_results(boxes_np, dedup_np, logits_np, feats_np)

    assert nms_features.shape[1] == D
    assert len(results) == B
    print("KERNEL_OK")
</pallas_src>

<mosaic_0001>
module attributes {stable_mosaic.version = 11 : i64} {
  func.func @_postprocess_kernel(%arg0: i32, %arg1: memref<2x2xi32, #tpu.memory_space<smem>>, %arg2: memref<1x8x16xf32, #tpu.memory_space<vmem>>, %arg3: memref<1x4x8x16xf32, #tpu.memory_space<vmem>>, %arg4: memref<1x4x16xf32, #tpu.memory_space<vmem>>, %arg5: memref<1x4x8x16xf32, #tpu.memory_space<vmem>>, %arg6: memref<1x8x16xf32, #tpu.memory_space<vmem>>) attributes {dimension_semantics = [#tpu.dimension_semantics<parallel>], iteration_bounds = array<i64: 2>, scalar_prefetch = 1 : i64, scratch_operands = 0 : i64, tpu.core_type = #tpu.core_type<tc>, window_params = [{transform_indices = @transform_0, window_bounds = array<i64: 1, 8, 16>}, {transform_indices = @transform_1, window_bounds = array<i64: 1, 4, 8, 16>}, {transform_indices = @transform_2, window_bounds = array<i64: 1, 4, 16>}, {transform_indices = @transform_3, window_bounds = array<i64: 1, 4, 8, 16>}, {transform_indices = @transform_4, window_bounds = array<i64: 1, 8, 16>}]} {
    %0 = arith.index_cast %arg0 : i32 to index
    %c0 = arith.constant 0 : index
    %1 = memref.load %arg1[%0, %c0] : memref<2x2xi32, #tpu.memory_space<smem>>
    %2 = arith.sitofp %1 : i32 to f32
    %3 = arith.index_cast %arg0 : i32 to index
    %c1 = arith.constant 1 : index
    %4 = memref.load %arg1[%3, %c1] : memref<2x2xi32, #tpu.memory_space<smem>>
    %5 = arith.sitofp %4 : i32 to f32
    %c0_0 = arith.constant 0 : index
    %c0_1 = arith.constant 0 : index
    %c0_2 = arith.constant 0 : index
    %6 = vector.load %arg2[%c0_0, %c0_1, %c0_2] : memref<1x8x16xf32, #tpu.memory_space<vmem>>, vector<1x8x16xf32>
    %7 = vector.shape_cast %6 : vector<1x8x16xf32> to vector<8x16xf32>
    %cst = arith.constant dense<0xFF800000> : vector<16xf32>
    %8 = vector.multi_reduction <maximumf>, %7, %cst [0] : vector<8x16xf32> to vector<16xf32>
    %9 = vector.shape_cast %8 : vector<16xf32> to vector<1x16xf32>
    %10 = vector.broadcast %9 : vector<1x16xf32> to vector<8x16xf32>
    %11 = arith.subf %7, %10 : vector<8x16xf32>
    %12 = math.exp %11 : vector<8x16xf32>
    %cst_3 = arith.constant dense<0.000000e+00> : vector<16xf32>
    %13 = vector.multi_reduction <add>, %12, %cst_3 [0] : vector<8x16xf32> to vector<16xf32>
    %14 = vector.shape_cast %13 : vector<16xf32> to vector<1x16xf32>
    %15 = vector.broadcast %14 : vector<1x16xf32> to vector<8x16xf32>
    %16 = arith.divf %12, %15 : vector<8x16xf32>
    %c0_4 = arith.constant 0 : index
    %c0_5 = arith.constant 0 : index
    %c0_6 = arith.constant 0 : index
    %17 = vector.load %arg4[%c0_4, %c0_5, %c0_6] : memref<1x4x16xf32, #tpu.memory_space<vmem>>, vector<1x4x16xf32>
    %18 = vector.shape_cast %17 : vector<1x4x16xf32> to vector<4x16xf32>
    %19 = vector.extract_strided_slice %18 {offsets = [0, 0], sizes = [1, 16], strides = [1, 1]} : vector<4x16xf32> to vector<1x16xf32>
    %20 = vector.extract_strided_slice %18 {offsets = [1, 0], sizes = [1, 16], strides = [1, 1]} : vector<4x16xf32> to vector<1x16xf32>
    %21 = vector.extract_strided_slice %18 {offsets = [2, 0], sizes = [1, 16], strides = [1, 1]} : vector<4x16xf32> to vector<1x16xf32>
    %22 = vector.extract_strided_slice %18 {offsets = [3, 0], sizes = [1, 16], strides = [1, 1]} : vector<4x16xf32> to vector<1x16xf32>
    %23 = arith.subf %21, %19 : vector<1x16xf32>
    %cst_7 = arith.constant 1.000000e+00 : f32
    %24 = vector.broadcast %cst_7 : f32 to vector<1x16xf32>
    %25 = arith.addf %23, %24 : vector<1x16xf32>
    %26 = arith.subf %22, %20 : vector<1x16xf32>
    %cst_8 = arith.constant 1.000000e+00 : f32
    %27 = vector.broadcast %cst_8 : f32 to vector<1x16xf32>
    %28 = arith.addf %26, %27 : vector<1x16xf32>
    %cst_9 = arith.constant 5.000000e-01 : f32
    %29 = vector.broadcast %cst_9 : f32 to vector<1x16xf32>
    %30 = arith.mulf %29, %25 : vector<1x16xf32>
    %31 = arith.addf %19, %30 : vector<1x16xf32>
    %cst_10 = arith.constant 5.000000e-01 : f32
    %32 = vector.broadcast %cst_10 : f32 to vector<1x16xf32>
    %33 = arith.mulf %32, %28 : vector<1x16xf32>
    %34 = arith.addf %20, %33 : vector<1x16xf32>
    %c0_11 = arith.constant 0 : index
    %c0_12 = arith.constant 0 : index
    %c0_13 = arith.constant 0 : index
    %c0_14 = arith.constant 0 : index
    %35 = vector.load %arg3[%c0_11, %c0_12, %c0_13, %c0_14] : memref<1x4x8x16xf32, #tpu.memory_space<vmem>>, vector<1x4x8x16xf32>
    %36 = vector.shape_cast %35 : vector<1x4x8x16xf32> to vector<4x8x16xf32>
    %37 = vector.extract_strided_slice %36 {offsets = [0, 0, 0], sizes = [1, 8, 16], strides = [1, 1, 1]} : vector<4x8x16xf32> to vector<1x8x16xf32>
    %38 = vector.shape_cast %37 : vector<1x8x16xf32> to vector<8x16xf32>
    %cst_15 = arith.constant 1.000000e-01 : f32
    %39 = vector.broadcast %cst_15 : f32 to vector<8x16xf32>
    %40 = arith.mulf %38, %39 : vector<8x16xf32>
    %41 = vector.extract_strided_slice %36 {offsets = [1, 0, 0], sizes = [1, 8, 16], strides = [1, 1, 1]} : vector<4x8x16xf32> to vector<1x8x16xf32>
    %42 = vector.shape_cast %41 : vector<1x8x16xf32> to vector<8x16xf32>
    %cst_16 = arith.constant 1.000000e-01 : f32
    %43 = vector.broadcast %cst_16 : f32 to vector<8x16xf32>
    %44 = arith.mulf %42, %43 : vector<8x16xf32>
    %45 = vector.extract_strided_slice %36 {offsets = [2, 0, 0], sizes = [1, 8, 16], strides = [1, 1, 1]} : vector<4x8x16xf32> to vector<1x8x16xf32>
    %46 = vector.shape_cast %45 : vector<1x8x16xf32> to vector<8x16xf32>
    %cst_17 = arith.constant 2.000000e-01 : f32
    %47 = vector.broadcast %cst_17 : f32 to vector<8x16xf32>
    %48 = arith.mulf %46, %47 : vector<8x16xf32>
    %cst_18 = arith.constant 4.13516665 : f32
    %49 = vector.broadcast %cst_18 : f32 to vector<8x16xf32>
    %50 = arith.minimumf %48, %49 : vector<8x16xf32>
    %51 = vector.extract_strided_slice %36 {offsets = [3, 0, 0], sizes = [1, 8, 16], strides = [1, 1, 1]} : vector<4x8x16xf32> to vector<1x8x16xf32>
    %52 = vector.shape_cast %51 : vector<1x8x16xf32> to vector<8x16xf32>
    %cst_19 = arith.constant 2.000000e-01 : f32
    %53 = vector.broadcast %cst_19 : f32 to vector<8x16xf32>
    %54 = arith.mulf %52, %53 : vector<8x16xf32>
    %cst_20 = arith.constant 4.13516665 : f32
    %55 = vector.broadcast %cst_20 : f32 to vector<8x16xf32>
    %56 = arith.minimumf %54, %55 : vector<8x16xf32>
    %57 = vector.broadcast %25 : vector<1x16xf32> to vector<8x16xf32>
    %58 = arith.mulf %40, %57 : vector<8x16xf32>
    %59 = vector.broadcast %31 : vector<1x16xf32> to vector<8x16xf32>
    %60 = arith.addf %58, %59 : vector<8x16xf32>
    %61 = vector.broadcast %28 : vector<1x16xf32> to vector<8x16xf32>
    %62 = arith.mulf %44, %61 : vector<8x16xf32>
    %63 = vector.broadcast %34 : vector<1x16xf32> to vector<8x16xf32>
    %64 = arith.addf %62, %63 : vector<8x16xf32>
    %65 = math.exp %50 : vector<8x16xf32>
    %66 = vector.broadcast %25 : vector<1x16xf32> to vector<8x16xf32>
    %67 = arith.mulf %65, %66 : vector<8x16xf32>
    %68 = math.exp %56 : vector<8x16xf32>
    %69 = vector.broadcast %28 : vector<1x16xf32> to vector<8x16xf32>
    %70 = arith.mulf %68, %69 : vector<8x16xf32>
    %cst_21 = arith.constant 5.000000e-01 : f32
    %71 = vector.broadcast %cst_21 : f32 to vector<8x16xf32>
    %72 = arith.mulf %71, %67 : vector<8x16xf32>
    %73 = arith.subf %60, %72 : vector<8x16xf32>
    %cst_22 = arith.constant 1.000000e+00 : f32
    %74 = arith.subf %2, %cst_22 : f32
    %cst_23 = arith.constant 0.000000e+00 : f32
    %75 = vector.broadcast %cst_23 : f32 to vector<8x16xf32>
    %76 = arith.maximumf %75, %73 : vector<8x16xf32>
    %77 = vector.broadcast %74 : f32 to vector<8x16xf32>
    %78 = arith.minimumf %77, %76 : vector<8x16xf32>
    %cst_24 = arith.constant 5.000000e-01 : f32
    %79 = vector.broadcast %cst_24 : f32 to vector<8x16xf32>
    %80 = arith.mulf %79, %70 : vector<8x16xf32>
    %81 = arith.subf %64, %80 : vector<8x16xf32>
    %cst_25 = arith.constant 1.000000e+00 : f32
    %82 = arith.subf %5, %cst_25 : f32
    %cst_26 = arith.constant 0.000000e+00 : f32
    %83 = vector.broadcast %cst_26 : f32 to vector<8x16xf32>
    %84 = arith.maximumf %83, %81 : vector<8x16xf32>
    %85 = vector.broadcast %82 : f32 to vector<8x16xf32>
    %86 = arith.minimumf %85, %84 : vector<8x16xf32>
    %cst_27 = arith.constant 5.000000e-01 : f32
    %87 = vector.broadcast %cst_27 : f32 to vector<8x16xf32>
    %88 = arith.mulf %87, %67 : vector<8x16xf32>
    %89 = arith.addf %60, %88 : vector<8x16xf32>
    %cst_28 = arith.constant 1.000000e+00 : f32
    %90 = vector.broadcast %cst_28 : f32 to vector<8x16xf32>
    %91 = arith.subf %89, %90 : vector<8x16xf32>
    %cst_29 = arith.constant 1.000000e+00 : f32
    %92 = arith.subf %2, %cst_29 : f32
    %cst_30 = arith.constant 0.000000e+00 : f32
    %93 = vector.broadcast %cst_30 : f32 to vector<8x16xf32>
    %94 = arith.maximumf %93, %91 : vector<8x16xf32>
    %95 = vector.broadcast %92 : f32 to vector<8x16xf32>
    %96 = arith.minimumf %95, %94 : vector<8x16xf32>
    %cst_31 = arith.constant 5.000000e-01 : f32
    %97 = vector.broadcast %cst_31 : f32 to vector<8x16xf32>
    %98 = arith.mulf %97, %70 : vector<8x16xf32>
    %99 = arith.addf %64, %98 : vector<8x16xf32>
    %cst_32 = arith.constant 1.000000e+00 : f32
    %100 = vector.broadcast %cst_32 : f32 to vector<8x16xf32>
    %101 = arith.subf %99, %100 : vector<8x16xf32>
    %cst_33 = arith.constant 1.000000e+00 : f32
    %102 = arith.subf %5, %cst_33 : f32
    %cst_34 = arith.constant 0.000000e+00 : f32
    %103 = vector.broadcast %cst_34 : f32 to vector<8x16xf32>
    %104 = arith.maximumf %103, %101 : vector<8x16xf32>
    %105 = vector.broadcast %102 : f32 to vector<8x16xf32>
    %106 = arith.minimumf %105, %104 : vector<8x16xf32>
    %c0_35 = arith.constant 0 : index
    %c0_36 = arith.constant 0 : index
    %c0_37 = arith.constant 0 : index
    %c0_38 = arith.constant 0 : index
    %107 = vector.load %arg5[%c0_35, %c0_36, %c0_37, %c0_38] : memref<1x4x8x16xf32, #tpu.memory_space<vmem>>, vector<1x1x8x16xf32>
    %108 = vector.shape_cast %107 : vector<1x1x8x16xf32> to vector<8x16xf32>
    %109 = vector.shape_cast %78 : vector<8x16xf32> to vector<1x1x8x16xf32>
    tpu.vector_store %arg5[%c0_35, %c0_36, %c0_37, %c0_38], %109 {strides = array<i32>} : memref<1x4x8x16xf32, #tpu.memory_space<vmem>>, vector<1x1x8x16xf32>,
    %c0_39 = arith.constant 0 : index
    %c1_40 = arith.constant 1 : index
    %c0_41 = arith.constant 0 : index
    %c0_42 = arith.constant 0 : index
    %110 = vector.load %arg5[%c0_39, %c1_40, %c0_41, %c0_42] : memref<1x4x8x16xf32, #tpu.memory_space<vmem>>, vector<1x1x8x16xf32>
    %111 = vector.shape_cast %110 : vector<1x1x8x16xf32> to vector<8x16xf32>
    %112 = vector.shape_cast %86 : vector<8x16xf32> to vector<1x1x8x16xf32>
    tpu.vector_store %arg5[%c0_39, %c1_40, %c0_41, %c0_42], %112 {strides = array<i32>} : memref<1x4x8x16xf32, #tpu.memory_space<vmem>>, vector<1x1x8x16xf32>,
    %c0_43 = arith.constant 0 : index
    %c2 = arith.constant 2 : index
    %c0_44 = arith.constant 0 : index
    %c0_45 = arith.constant 0 : index
    %113 = vector.load %arg5[%c0_43, %c2, %c0_44, %c0_45] : memref<1x4x8x16xf32, #tpu.memory_space<vmem>>, vector<1x1x8x16xf32>
    %114 = vector.shape_cast %113 : vector<1x1x8x16xf32> to vector<8x16xf32>
    %115 = vector.shape_cast %96 : vector<8x16xf32> to vector<1x1x8x16xf32>
    tpu.vector_store %arg5[%c0_43, %c2, %c0_44, %c0_45], %115 {strides = array<i32>} : memref<1x4x8x16xf32, #tpu.memory_space<vmem>>, vector<1x1x8x16xf32>,
    %c0_46 = arith.constant 0 : index
    %c3 = arith.constant 3 : index
    %c0_47 = arith.constant 0 : index
    %c0_48 = arith.constant 0 : index
    %116 = vector.load %arg5[%c0_46, %c3, %c0_47, %c0_48] : memref<1x4x8x16xf32, #tpu.memory_space<vmem>>, vector<1x1x8x16xf32>
    %117 = vector.shape_cast %116 : vector<1x1x8x16xf32> to vector<8x16xf32>
    %118 = vector.shape_cast %106 : vector<8x16xf32> to vector<1x1x8x16xf32>
    tpu.vector_store %arg5[%c0_46, %c3, %c0_47, %c0_48], %118 {strides = array<i32>} : memref<1x4x8x16xf32, #tpu.memory_space<vmem>>, vector<1x1x8x16xf32>,
    %119 = arith.subf %96, %78 : vector<8x16xf32>
    %cst_49 = arith.constant 1.000000e+00 : f32
    %120 = vector.broadcast %cst_49 : f32 to vector<8x16xf32>
    %121 = arith.addf %119, %120 : vector<8x16xf32>
    %122 = arith.subf %106, %86 : vector<8x16xf32>
    %cst_50 = arith.constant 1.000000e+00 : f32
    %123 = vector.broadcast %cst_50 : f32 to vector<8x16xf32>
    %124 = arith.addf %122, %123 : vector<8x16xf32>
    %125 = arith.mulf %121, %124 : vector<8x16xf32>
    %126 = vector.shape_cast %78 : vector<8x16xf32> to vector<1x8x16xf32>
    %127 = vector.shape_cast %86 : vector<8x16xf32> to vector<1x8x16xf32>
    %128 = vector.shape_cast %96 : vector<8x16xf32> to vector<1x8x16xf32>
    %129 = vector.shape_cast %106 : vector<8x16xf32> to vector<1x8x16xf32>
    %130 = vector.shape_cast %125 : vector<8x16xf32> to vector<1x8x16xf32>
    %131 = tpu.concatenate %126, %127, %128, %129, %130 in 0 : vector<1x8x16xf32>, vector<1x8x16xf32>, vector<1x8x16xf32>, vector<1x8x16xf32>, vector<1x8x16xf32> -> vector<5x8x16xf32>
    %132 = tpu.iota {dimensions = array<i32: 1>} : vector<8x16xi32>
    %133 = tpu.iota {dimensions = array<i32: 0>} : vector<8x16xi32>
    %134 = tpu.bitcast %16 : vector<8x16xf32> -> vector<8x16xi32>
    %c4_i32 = arith.constant 4 : i32
    %135 = vector.broadcast %c4_i32 : i32 to vector<8x16xi32>
    %136 = arith.shrsi %134, %135 : vector<8x16xi32>
    %c4_i32_51 = arith.constant 4 : i32
    %137 = vector.broadcast %c4_i32_51 : i32 to vector<8x16xi32>
    %138 = arith.shli %136, %137 : vector<8x16xi32>
    %c15_i32 = arith.constant 15 : i32
    %139 = vector.broadcast %c15_i32 : i32 to vector<8x16xi32>
    %140 = arith.subi %139, %132 : vector<8x16xi32>
    %141 = arith.ori %138, %140 : vector<8x16xi32>
    %c0_i32 = arith.constant 0 : i32
    %142 = vector.broadcast %c0_i32 : i32 to vector<8x16xi32>
    %143 = arith.cmpi sgt, %133, %142 : vector<8x16xi32>
    %cst_52 = arith.constant 5.000000e-02 : f32
    %144 = vector.broadcast %cst_52 : f32 to vector<8x16xf32>
    %145 = arith.cmpf ogt, %16, %144 : vector<8x16xf32>
    %146 = arith.andi %143, %145 : vector<8x16xi1>
    %cst_53 = arith.constant 1.000000e+00 : f32
    %cst_54 = arith.constant 0.000000e+00 : f32
    %147 = vector.broadcast %cst_53 : f32 to vector<8x16xf32>
    %148 = vector.broadcast %cst_54 : f32 to vector<8x16xf32>
    %149 = arith.select %146, %147, %148 : vector<8x16xi1>, vector<8x16xf32>
    %cst_55 = arith.constant 0.000000e+00 : f32
    %150 = vector.broadcast %cst_55 : f32 to vector<8x16xf32>
    %c0_i32_56 = arith.constant 0 : i32
    %cst_57 = arith.constant 0.000000e+00 : f32
    %151 = vector.broadcast %cst_57 : f32 to vector<8x16xf32>
    %152 = arith.cmpf ogt, %149, %151 : vector<8x16xf32>
    %c-1_i32 = arith.constant -1 : i32
    %153 = vector.broadcast %c-1_i32 : i32 to vector<8x16xi32>
    %154 = arith.select %152, %141, %153 : vector<8x16xi1>, vector<8x16xi32>
    %cst_58 = arith.constant dense<-2147483648> : vector<8xi32>
    %155 = vector.multi_reduction <maxsi>, %154, %cst_58 [1] : vector<8x16xi32> to vector<8xi32>
    %156 = vector.shape_cast %155 : vector<8xi32> to vector<8x1xi32>
    %c0_i32_59 = arith.constant 0 : i32
    %157 = vector.broadcast %c0_i32_59 : i32 to vector<8x1xi32>
    %158 = arith.cmpi sge, %156, %157 : vector<8x1xi32>
    %159 = vector.broadcast %156 : vector<8x1xi32> to vector<8x16xi32>
    %160 = arith.cmpi eq, %154, %159 : vector<8x16xi32>
    %161 = vector.broadcast %158 : vector<8x1xi1> to vector<8x16xi1>
    %162 = arith.andi %160, %161 : vector<8x16xi1>
    %163 = vector.shape_cast %162 : vector<8x16xi1> to vector<1x8x16xi1>
    %cst_60 = arith.constant 0.000000e+00 : f32
    %164 = vector.shape_cast %163 : vector<1x8x16xi1> to vector<1x8x16xi1>
    %165 = vector.broadcast %164 : vector<1x8x16xi1> to vector<5x8x16xi1>
    %166 = vector.broadcast %cst_60 : f32 to vector<5x8x16xf32>
    %167 = arith.select %165, %131, %166 : vector<5x8x16xi1>, vector<5x8x16xf32>
    %cst_61 = arith.constant dense<0.000000e+00> : vector<5x8xf32>
    %168 = vector.multi_reduction <add>, %167, %cst_61 [2] : vector<5x8x16xf32> to vector<5x8xf32>
    %169 = vector.shape_cast %168 : vector<5x8xf32> to vector<5x8x1xf32>
    %170 = vector.extract_strided_slice %169 {offsets = [0, 0, 0], sizes = [1, 8, 1], strides = [1, 1, 1]} : vector<5x8x1xf32> to vector<1x8x1xf32>
    %171 = vector.shape_cast %170 : vector<1x8x1xf32> to vector<8x1xf32>
    %172 = vector.extract_strided_slice %169 {offsets = [1, 0, 0], sizes = [1, 8, 1], strides = [1, 1, 1]} : vector<5x8x1xf32> to vector<1x8x1xf32>
    %173 = vector.shape_cast %172 : vector<1x8x1xf32> to vector<8x1xf32>
    %174 = vector.extract_strided_slice %169 {offsets = [2, 0, 0], sizes = [1, 8, 1], strides = [1, 1, 1]} : vector<5x8x1xf32> to vector<1x8x1xf32>
    %175 = vector.shape_cast %174 : vector<1x8x1xf32> to vector<8x1xf32>
    %176 = vector.extract_strided_slice %169 {offsets = [3, 0, 0], sizes = [1, 8, 1], strides = [1, 1, 1]} : vector<5x8x1xf32> to vector<1x8x1xf32>
    %177 = vector.shape_cast %176 : vector<1x8x1xf32> to vector<8x1xf32>
    %178 = vector.extract_strided_slice %169 {offsets = [4, 0, 0], sizes = [1, 8, 1], strides = [1, 1, 1]} : vector<5x8x1xf32> to vector<1x8x1xf32>
    %179 = vector.shape_cast %178 : vector<1x8x1xf32> to vector<8x1xf32>
    %180 = vector.broadcast %171 : vector<8x1xf32> to vector<8x16xf32>
    %181 = arith.maximumf %78, %180 : vector<8x16xf32>
    %182 = vector.broadcast %173 : vector<8x1xf32> to vector<8x16xf32>
    %183 = arith.maximumf %86, %182 : vector<8x16xf32>
    %184 = vector.broadcast %175 : vector<8x1xf32> to vector<8x16xf32>
    %185 = arith.minimumf %96, %184 : vector<8x16xf32>
    %186 = vector.broadcast %177 : vector<8x1xf32> to vector<8x16xf32>
    %187 = arith.minimumf %106, %186 : vector<8x16xf32>
    %188 = arith.subf %185, %181 : vector<8x16xf32>
    %cst_62 = arith.constant 1.000000e+00 : f32
    %189 = vector.broadcast %cst_62 : f32 to vector<8x16xf32>
    %190 = arith.addf %188, %189 : vector<8x16xf32>
    %cst_63 = arith.constant 0.000000e+00 : f32
    %191 = vector.broadcast %cst_63 : f32 to vector<8x16xf32>
    %192 = arith.maximumf %190, %191 : vector<8x16xf32>
    %193 = arith.subf %187, %183 : vector<8x16xf32>
    %cst_64 = arith.constant 1.000000e+00 : f32
    %194 = vector.broadcast %cst_64 : f32 to vector<8x16xf32>
    %195 = arith.addf %193, %194 : vector<8x16xf32>
    %cst_65 = arith.constant 0.000000e+00 : f32
    %196 = vector.broadcast %cst_65 : f32 to vector<8x16xf32>
    %197 = arith.maximumf %195, %196 : vector<8x16xf32>
    %198 = arith.mulf %192, %197 : vector<8x16xf32>
    %199 = vector.broadcast %179 : vector<8x1xf32> to vector<8x16xf32>
    %200 = arith.addf %125, %199 : vector<8x16xf32>
    %201 = arith.subf %200, %198 : vector<8x16xf32>
    %cst_66 = arith.constant 5.000000e-01 : f32
    %202 = vector.broadcast %cst_66 : f32 to vector<8x16xf32>
    %203 = arith.mulf %202, %201 : vector<8x16xf32>
    %204 = arith.cmpf ogt, %198, %203 : vector<8x16xf32>
    %cst_67 = arith.constant 0.000000e+00 : f32
    %205 = vector.broadcast %cst_67 : f32 to vector<8x16xf32>
    %206 = arith.cmpf ogt, %201, %205 : vector<8x16xf32>
    %207 = arith.andi %204, %206 : vector<8x16xi1>
    %208 = arith.ori %207, %162 : vector<8x16xi1>
    %cst_68 = arith.constant 0.000000e+00 : f32
    %209 = vector.broadcast %cst_68 : f32 to vector<8x16xf32>
    %210 = arith.select %208, %209, %149 : vector<8x16xi1>, vector<8x16xf32>
    %cst_69 = arith.constant 1.000000e+00 : f32
    %211 = vector.broadcast %cst_69 : f32 to vector<8x16xf32>
    %212 = arith.select %162, %211, %150 : vector<8x16xi1>, vector<8x16xf32>
    %c1_i32 = arith.constant 1 : i32
    %cst_70 = arith.constant 0.000000e+00 : f32
    %213 = vector.broadcast %cst_70 : f32 to vector<8x16xf32>
    %214 = arith.cmpf ogt, %210, %213 : vector<8x16xf32>
    %c-1_i32_71 = arith.constant -1 : i32
    %215 = vector.broadcast %c-1_i32_71 : i32 to vector<8x16xi32>
    %216 = arith.select %214, %141, %215 : vector<8x16xi1>, vector<8x16xi32>
    %cst_72 = arith.constant dense<-2147483648> : vector<8xi32>
    %217 = vector.multi_reduction <maxsi>, %216, %cst_72 [1] : vector<8x16xi32> to vector<8xi32>
    %218 = vector.shape_cast %217 : vector<8xi32> to vector<8x1xi32>
    %c0_i32_73 = arith.constant 0 : i32
    %219 = vector.broadcast %c0_i32_73 : i32 to vector<8x1xi32>
    %220 = arith.cmpi sge, %218, %219 : vector<8x1xi32>
    %221 = vector.broadcast %218 : vector<8x1xi32> to vector<8x16xi32>
    %222 = arith.cmpi eq, %216, %221 : vector<8x16xi32>
    %223 = vector.broadcast %220 : vector<8x1xi1> to vector<8x16xi1>
    %224 = arith.andi %222, %223 : vector<8x16xi1>
    %225 = vector.shape_cast %224 : vector<8x16xi1> to vector<1x8x16xi1>
    %cst_74 = arith.constant 0.000000e+00 : f32
    %226 = vector.shape_cast %225 : vector<1x8x16xi1> to vector<1x8x16xi1>
    %227 = vector.broadcast %226 : vector<1x8x16xi1> to vector<5x8x16xi1>
    %228 = vector.broadcast %cst_74 : f32 to vector<5x8x16xf32>
    %229 = arith.select %227, %131, %228 : vector<5x8x16xi1>, vector<5x8x16xf32>
    %cst_75 = arith.constant dense<0.000000e+00> : vector<5x8xf32>
    %230 = vector.multi_reduction <add>, %229, %cst_75 [2] : vector<5x8x16xf32> to vector<5x8xf32>
    %231 = vector.shape_cast %230 : vector<5x8xf32> to vector<5x8x1xf32>
    %232 = vector.extract_strided_slice %231 {offsets = [0, 0, 0], sizes = [1, 8, 1], strides = [1, 1, 1]} : vector<5x8x1xf32> to vector<1x8x1xf32>
    %233 = vector.shape_cast %232 : vector<1x8x1xf32> to vector<8x1xf32>
    %234 = vector.extract_strided_slice %231 {offsets = [1, 0, 0], sizes = [1, 8, 1], strides = [1, 1, 1]} : vector<5x8x1xf32> to vector<1x8x1xf32>
    %235 = vector.shape_cast %234 : vector<1x8x1xf32> to vector<8x1xf32>
    %236 = vector.extract_strided_slice %231 {offsets = [2, 0, 0], sizes = [1, 8, 1], strides = [1, 1, 1]} : vector<5x8x1xf32> to vector<1x8x1xf32>
    %237 = vector.shape_cast %236 : vector<1x8x1xf32> to vector<8x1xf32>
    %238 = vector.extract_strided_slice %231 {offsets = [3, 0, 0], sizes = [1, 8, 1], strides = [1, 1, 1]} : vector<5x8x1xf32> to vector<1x8x1xf32>
    %239 = vector.shape_cast %238 : vector<1x8x1xf32> to vector<8x1xf32>
    %240 = vector.extract_strided_slice %231 {offsets = [4, 0, 0], sizes = [1, 8, 1], strides = [1, 1, 1]} : vector<5x8x1xf32> to vector<1x8x1xf32>
    %241 = vector.shape_cast %240 : vector<1x8x1xf32> to vector<8x1xf32>
    %242 = vector.broadcast %233 : vector<8x1xf32> to vector<8x16xf32>
    %243 = arith.maximumf %78, %242 : vector<8x16xf32>
    %244 = vector.broadcast %235 : vector<8x1xf32> to vector<8x16xf32>
    %245 = arith.maximumf %86, %244 : vector<8x16xf32>
    %246 = vector.broadcast %237 : vector<8x1xf32> to vector<8x16xf32>
    %247 = arith.minimumf %96, %246 : vector<8x16xf32>
    %248 = vector.broadcast %239 : vector<8x1xf32> to vector<8x16xf32>
    %249 = arith.minimumf %106, %248 : vector<8x16xf32>
    %250 = arith.subf %247, %243 : vector<8x16xf32>
    %cst_76 = arith.constant 1.000000e+00 : f32
    %251 = vector.broadcast %cst_76 : f32 to vector<8x16xf32>
    %252 = arith.addf %250, %251 : vector<8x16xf32>
    %cst_77 = arith.constant 0.000000e+00 : f32
    %253 = vector.broadcast %cst_77 : f32 to vector<8x16xf32>
    %254 = arith.maximumf %252, %253 : vector<8x16xf32>
    %255 = arith.subf %249, %245 : vector<8x16xf32>
    %cst_78 = arith.constant 1.000000e+00 : f32
    %256 = vector.broadcast %cst_78 : f32 to vector<8x16xf32>
    %257 = arith.addf %255, %256 : vector<8x16xf32>
    %cst_79 = arith.constant 0.000000e+00 : f32
    %258 = vector.broadcast %cst_79 : f32 to vector<8x16xf32>
    %259 = arith.maximumf %257, %258 : vector<8x16xf32>
    %260 = arith.mulf %254, %259 : vector<8x16xf32>
    %261 = vector.broadcast %241 : vector<8x1xf32> to vector<8x16xf32>
    %262 = arith.addf %125, %261 : vector<8x16xf32>
    %263 = arith.subf %262, %260 : vector<8x16xf32>
    %cst_80 = arith.constant 5.000000e-01 : f32
    %264 = vector.broadcast %cst_80 : f32 to vector<8x16xf32>
    %265 = arith.mulf %264, %263 : vector<8x16xf32>
    %266 = arith.cmpf ogt, %260, %265 : vector<8x16xf32>
    %cst_81 = arith.constant 0.000000e+00 : f32
    %267 = vector.broadcast %cst_81 : f32 to vector<8x16xf32>
    %268 = arith.cmpf ogt, %263, %267 : vector<8x16xf32>
    %269 = arith.andi %266, %268 : vector<8x16xi1>
    %270 = arith.ori %269, %224 : vector<8x16xi1>
    %cst_82 = arith.constant 0.000000e+00 : f32
    %271 = vector.broadcast %cst_82 : f32 to vector<8x16xf32>
    %272 = arith.select %270, %271, %210 : vector<8x16xi1>, vector<8x16xf32>
    %cst_83 = arith.constant 1.000000e+00 : f32
    %273 = vector.broadcast %cst_83 : f32 to vector<8x16xf32>
    %274 = arith.select %224, %273, %212 : vector<8x16xi1>, vector<8x16xf32>
    %c2_i32 = arith.constant 2 : i32
    %cst_84 = arith.constant 0.000000e+00 : f32
    %275 = vector.broadcast %cst_84 : f32 to vector<8x16xf32>
    %276 = arith.cmpf ogt, %272, %275 : vector<8x16xf32>
    %c-1_i32_85 = arith.constant -1 : i32
    %277 = vector.broadcast %c-1_i32_85 : i32 to vector<8x16xi32>
    %278 = arith.select %276, %141, %277 : vector<8x16xi1>, vector<8x16xi32>
    %cst_86 = arith.constant dense<-2147483648> : vector<8xi32>
    %279 = vector.multi_reduction <maxsi>, %278, %cst_86 [1] : vector<8x16xi32> to vector<8xi32>
    %280 = vector.shape_cast %279 : vector<8xi32> to vector<8x1xi32>
    %c0_i32_87 = arith.constant 0 : i32
    %281 = vector.broadcast %c0_i32_87 : i32 to vector<8x1xi32>
    %282 = arith.cmpi sge, %280, %281 : vector<8x1xi32>
    %283 = vector.broadcast %280 : vector<8x1xi32> to vector<8x16xi32>
    %284 = arith.cmpi eq, %278, %283 : vector<8x16xi32>
    %285 = vector.broadcast %282 : vector<8x1xi1> to vector<8x16xi1>
    %286 = arith.andi %284, %285 : vector<8x16xi1>
    %287 = vector.shape_cast %286 : vector<8x16xi1> to vector<1x8x16xi1>
    %cst_88 = arith.constant 0.000000e+00 : f32
    %288 = vector.shape_cast %287 : vector<1x8x16xi1> to vector<1x8x16xi1>
    %289 = vector.broadcast %288 : vector<1x8x16xi1> to vector<5x8x16xi1>
    %290 = vector.broadcast %cst_88 : f32 to vector<5x8x16xf32>
    %291 = arith.select %289, %131, %290 : vector<5x8x16xi1>, vector<5x8x16xf32>
    %cst_89 = arith.constant dense<0.000000e+00> : vector<5x8xf32>
    %292 = vector.multi_reduction <add>, %291, %cst_89 [2] : vector<5x8x16xf32> to vector<5x8xf32>
    %293 = vector.shape_cast %292 : vector<5x8xf32> to vector<5x8x1xf32>
    %294 = vector.extract_strided_slice %293 {offsets = [0, 0, 0], sizes = [1, 8, 1], strides = [1, 1, 1]} : vector<5x8x1xf32> to vector<1x8x1xf32>
    %295 = vector.shape_cast %294 : vector<1x8x1xf32> to vector<8x1xf32>
    %296 = vector.extract_strided_slice %293 {offsets = [1, 0, 0], sizes = [1, 8, 1], strides = [1, 1, 1]} : vector<5x8x1xf32> to vector<1x8x1xf32>
    %297 = vector.shape_cast %296 : vector<1x8x1xf32> to vector<8x1xf32>
    %298 = vector.extract_strided_slice %293 {offsets = [2, 0, 0], sizes = [1, 8, 1], strides = [1, 1, 1]} : vector<5x8x1xf32> to vector<1x8x1xf32>
    %299 = vector.shape_cast %298 : vector<1x8x1xf32> to vector<8x1xf32>
    %300 = vector.extract_strided_slice %293 {offsets = [3, 0, 0], sizes = [1, 8, 1], strides = [1, 1, 1]} : vector<5x8x1xf32> to vector<1x8x1xf32>
    %301 = vector.shape_cast %300 : vector<1x8x1xf32> to vector<8x1xf32>
    %302 = vector.extract_strided_slice %293 {offsets = [4, 0, 0], sizes = [1, 8, 1], strides = [1, 1, 1]} : vector<5x8x1xf32> to vector<1x8x1xf32>
    %303 = vector.shape_cast %302 : vector<1x8x1xf32> to vector<8x1xf32>
    %304 = vector.broadcast %295 : vector<8x1xf32> to vector<8x16xf32>
    %305 = arith.maximumf %78, %304 : vector<8x16xf32>
    %306 = vector.broadcast %297 : vector<8x1xf32> to vector<8x16xf32>
    %307 = arith.maximumf %86, %306 : vector<8x16xf32>
    %308 = vector.broadcast %299 : vector<8x1xf32> to vector<8x16xf32>
    %309 = arith.minimumf %96, %308 : vector<8x16xf32>
    %310 = vector.broadcast %301 : vector<8x1xf32> to vector<8x16xf32>
    %311 = arith.minimumf %106, %310 : vector<8x16xf32>
    %312 = arith.subf %309, %305 : vector<8x16xf32>
    %cst_90 = arith.constant 1.000000e+00 : f32
    %313 = vector.broadcast %cst_90 : f32 to vector<8x16xf32>
    %314 = arith.addf %312, %313 : vector<8x16xf32>
    %cst_91 = arith.constant 0.000000e+00 : f32
    %315 = vector.broadcast %cst_91 : f32 to vector<8x16xf32>
    %316 = arith.maximumf %314, %315 : vector<8x16xf32>
    %317 = arith.subf %311, %307 : vector<8x16xf32>
    %cst_92 = arith.constant 1.000000e+00 : f32
    %318 = vector.broadcast %cst_92 : f32 to vector<8x16xf32>
    %319 = arith.addf %317, %318 : vector<8x16xf32>
    %cst_93 = arith.constant 0.000000e+00 : f32
    %320 = vector.broadcast %cst_93 : f32 to vector<8x16xf32>
    %321 = arith.maximumf %319, %320 : vector<8x16xf32>
    %322 = arith.mulf %316, %321 : vector<8x16xf32>
    %323 = vector.broadcast %303 : vector<8x1xf32> to vector<8x16xf32>
    %324 = arith.addf %125, %323 : vector<8x16xf32>
    %325 = arith.subf %324, %322 : vector<8x16xf32>
    %cst_94 = arith.constant 5.000000e-01 : f32
    %326 = vector.broadcast %cst_94 : f32 to vector<8x16xf32>
    %327 = arith.mulf %326, %325 : vector<8x16xf32>
    %328 = arith.cmpf ogt, %322, %327 : vector<8x16xf32>
    %cst_95 = arith.constant 0.000000e+00 : f32
    %329 = vector.broadcast %cst_95 : f32 to vector<8x16xf32>
    %330 = arith.cmpf ogt, %325, %329 : vector<8x16xf32>
    %331 = arith.andi %328, %330 : vector<8x16xi1>
    %332 = arith.ori %331, %286 : vector<8x16xi1>
    %cst_96 = arith.constant 0.000000e+00 : f32
    %333 = vector.broadcast %cst_96 : f32 to vector<8x16xf32>
    %334 = arith.select %332, %333, %272 : vector<8x16xi1>, vector<8x16xf32>
    %cst_97 = arith.constant 1.000000e+00 : f32
    %335 = vector.broadcast %cst_97 : f32 to vector<8x16xf32>
    %336 = arith.select %286, %335, %274 : vector<8x16xi1>, vector<8x16xf32>
    %c3_i32 = arith.constant 3 : i32
    %cst_98 = arith.constant 0.000000e+00 : f32
    %337 = vector.broadcast %cst_98 : f32 to vector<8x16xf32>
    %338 = arith.cmpf ogt, %334, %337 : vector<8x16xf32>
    %c-1_i32_99 = arith.constant -1 : i32
    %339 = vector.broadcast %c-1_i32_99 : i32 to vector<8x16xi32>
    %340 = arith.select %338, %141, %339 : vector<8x16xi1>, vector<8x16xi32>
    %cst_100 = arith.constant dense<-2147483648> : vector<8xi32>
    %341 = vector.multi_reduction <maxsi>, %340, %cst_100 [1] : vector<8x16xi32> to vector<8xi32>
    %342 = vector.shape_cast %341 : vector<8xi32> to vector<8x1xi32>
    %c0_i32_101 = arith.constant 0 : i32
    %343 = vector.broadcast %c0_i32_101 : i32 to vector<8x1xi32>
    %344 = arith.cmpi sge, %342, %343 : vector<8x1xi32>
    %345 = vector.broadcast %342 : vector<8x1xi32> to vector<8x16xi32>
    %346 = arith.cmpi eq, %340, %345 : vector<8x16xi32>
    %347 = vector.broadcast %344 : vector<8x1xi1> to vector<8x16xi1>
    %348 = arith.andi %346, %347 : vector<8x16xi1>
    %349 = vector.shape_cast %348 : vector<8x16xi1> to vector<1x8x16xi1>
    %cst_102 = arith.constant 0.000000e+00 : f32
    %350 = vector.shape_cast %349 : vector<1x8x16xi1> to vector<1x8x16xi1>
    %351 = vector.broadcast %350 : vector<1x8x16xi1> to vector<5x8x16xi1>
    %352 = vector.broadcast %cst_102 : f32 to vector<5x8x16xf32>
    %353 = arith.select %351, %131, %352 : vector<5x8x16xi1>, vector<5x8x16xf32>
    %cst_103 = arith.constant dense<0.000000e+00> : vector<5x8xf32>
    %354 = vector.multi_reduction <add>, %353, %cst_103 [2] : vector<5x8x16xf32> to vector<5x8xf32>
    %355 = vector.shape_cast %354 : vector<5x8xf32> to vector<5x8x1xf32>
    %356 = vector.extract_strided_slice %355 {offsets = [0, 0, 0], sizes = [1, 8, 1], strides = [1, 1, 1]} : vector<5x8x1xf32> to vector<1x8x1xf32>
    %357 = vector.shape_cast %356 : vector<1x8x1xf32> to vector<8x1xf32>
    %358 = vector.extract_strided_slice %355 {offsets = [1, 0, 0], sizes = [1, 8, 1], strides = [1, 1, 1]} : vector<5x8x1xf32> to vector<1x8x1xf32>
    %359 = vector.shape_cast %358 : vector<1x8x1xf32> to vector<8x1xf32>
    %360 = vector.extract_strided_slice %355 {offsets = [2, 0, 0], sizes = [1, 8, 1], strides = [1, 1, 1]} : vector<5x8x1xf32> to vector<1x8x1xf32>
    %361 = vector.shape_cast %360 : vector<1x8x1xf32> to vector<8x1xf32>
    %362 = vector.extract_strided_slice %355 {offsets = [3, 0, 0], sizes = [1, 8, 1], strides = [1, 1, 1]} : vector<5x8x1xf32> to vector<1x8x1xf32>
    %363 = vector.shape_cast %362 : vector<1x8x1xf32> to vector<8x1xf32>
    %364 = vector.extract_strided_slice %355 {offsets = [4, 0, 0], sizes = [1, 8, 1], strides = [1, 1, 1]} : vector<5x8x1xf32> to vector<1x8x1xf32>
    %365 = vector.shape_cast %364 : vector<1x8x1xf32> to vector<8x1xf32>
    %366 = vector.broadcast %357 : vector<8x1xf32> to vector<8x16xf32>
    %367 = arith.maximumf %78, %366 : vector<8x16xf32>
    %368 = vector.broadcast %359 : vector<8x1xf32> to vector<8x16xf32>
    %369 = arith.maximumf %86, %368 : vector<8x16xf32>
    %370 = vector.broadcast %361 : vector<8x1xf32> to vector<8x16xf32>
    %371 = arith.minimumf %96, %370 : vector<8x16xf32>
    %372 = vector.broadcast %363 : vector<8x1xf32> to vector<8x16xf32>
    %373 = arith.minimumf %106, %372 : vector<8x16xf32>
    %374 = arith.subf %371, %367 : vector<8x16xf32>
    %cst_104 = arith.constant 1.000000e+00 : f32
    %375 = vector.broadcast %cst_104 : f32 to vector<8x16xf32>
    %376 = arith.addf %374, %375 : vector<8x16xf32>
    %cst_105 = arith.constant 0.000000e+00 : f32
    %377 = vector.broadcast %cst_105 : f32 to vector<8x16xf32>
    %378 = arith.maximumf %376, %377 : vector<8x16xf32>
    %379 = arith.subf %373, %369 : vector<8x16xf32>
    %cst_106 = arith.constant 1.000000e+00 : f32
    %380 = vector.broadcast %cst_106 : f32 to vector<8x16xf32>
    %381 = arith.addf %379, %380 : vector<8x16xf32>
    %cst_107 = arith.constant 0.000000e+00 : f32
    %382 = vector.broadcast %cst_107 : f32 to vector<8x16xf32>
    %383 = arith.maximumf %381, %382 : vector<8x16xf32>
    %384 = arith.mulf %378, %383 : vector<8x16xf32>
    %385 = vector.broadcast %365 : vector<8x1xf32> to vector<8x16xf32>
    %386 = arith.addf %125, %385 : vector<8x16xf32>
    %387 = arith.subf %386, %384 : vector<8x16xf32>
    %cst_108 = arith.constant 5.000000e-01 : f32
    %388 = vector.broadcast %cst_108 : f32 to vector<8x16xf32>
    %389 = arith.mulf %388, %387 : vector<8x16xf32>
    %390 = arith.cmpf ogt, %384, %389 : vector<8x16xf32>
    %cst_109 = arith.constant 0.000000e+00 : f32
    %391 = vector.broadcast %cst_109 : f32 to vector<8x16xf32>
    %392 = arith.cmpf ogt, %387, %391 : vector<8x16xf32>
    %393 = arith.andi %390, %392 : vector<8x16xi1>
    %394 = arith.ori %393, %348 : vector<8x16xi1>
    %cst_110 = arith.constant 0.000000e+00 : f32
    %395 = vector.broadcast %cst_110 : f32 to vector<8x16xf32>
    %396 = arith.select %394, %395, %334 : vector<8x16xi1>, vector<8x16xf32>
    %cst_111 = arith.constant 1.000000e+00 : f32
    %397 = vector.broadcast %cst_111 : f32 to vector<8x16xf32>
    %398 = arith.select %348, %397, %336 : vector<8x16xi1>, vector<8x16xf32>
    %c4_i32_112 = arith.constant 4 : i32
    %cst_113 = arith.constant 0.000000e+00 : f32
    %399 = vector.broadcast %cst_113 : f32 to vector<8x16xf32>
    %400 = arith.cmpf ogt, %396, %399 : vector<8x16xf32>
    %c-1_i32_114 = arith.constant -1 : i32
    %401 = vector.broadcast %c-1_i32_114 : i32 to vector<8x16xi32>
    %402 = arith.select %400, %141, %401 : vector<8x16xi1>, vector<8x16xi32>
    %cst_115 = arith.constant dense<-2147483648> : vector<8xi32>
    %403 = vector.multi_reduction <maxsi>, %402, %cst_115 [1] : vector<8x16xi32> to vector<8xi32>
    %404 = vector.shape_cast %403 : vector<8xi32> to vector<8x1xi32>
    %c0_i32_116 = arith.constant 0 : i32
    %405 = vector.broadcast %c0_i32_116 : i32 to vector<8x1xi32>
    %406 = arith.cmpi sge, %404, %405 : vector<8x1xi32>
    %407 = vector.broadcast %404 : vector<8x1xi32> to vector<8x16xi32>
    %408 = arith.cmpi eq, %402, %407 : vector<8x16xi32>
    %409 = vector.broadcast %406 : vector<8x1xi1> to vector<8x16xi1>
    %410 = arith.andi %408, %409 : vector<8x16xi1>
    %411 = vector.shape_cast %410 : vector<8x16xi1> to vector<1x8x16xi1>
    %cst_117 = arith.constant 0.000000e+00 : f32
    %412 = vector.shape_cast %411 : vector<1x8x16xi1> to vector<1x8x16xi1>
    %413 = vector.broadcast %412 : vector<1x8x16xi1> to vector<5x8x16xi1>
    %414 = vector.broadcast %cst_117 : f32 to vector<5x8x16xf32>
    %415 = arith.select %413, %131, %414 : vector<5x8x16xi1>, vector<5x8x16xf32>
    %cst_118 = arith.constant dense<0.000000e+00> : vector<5x8xf32>
    %416 = vector.multi_reduction <add>, %415, %cst_118 [2] : vector<5x8x16xf32> to vector<5x8xf32>
    %417 = vector.shape_cast %416 : vector<5x8xf32> to vector<5x8x1xf32>
    %418 = vector.extract_strided_slice %417 {offsets = [0, 0, 0], sizes = [1, 8, 1], strides = [1, 1, 1]} : vector<5x8x1xf32> to vector<1x8x1xf32>
    %419 = vector.shape_cast %418 : vector<1x8x1xf32> to vector<8x1xf32>
    %420 = vector.extract_strided_slice %417 {offsets = [1, 0, 0], sizes = [1, 8, 1], strides = [1, 1, 1]} : vector<5x8x1xf32> to vector<1x8x1xf32>
    %421 = vector.shape_cast %420 : vector<1x8x1xf32> to vector<8x1xf32>
    %422 = vector.extract_strided_slice %417 {offsets = [2, 0, 0], sizes = [1, 8, 1], strides = [1, 1, 1]} : vector<5x8x1xf32> to vector<1x8x1xf32>
    %423 = vector.shape_cast %422 : vector<1x8x1xf32> to vector<8x1xf32>
    %424 = vector.extract_strided_slice %417 {offsets = [3, 0, 0], sizes = [1, 8, 1], strides = [1, 1, 1]} : vector<5x8x1xf32> to vector<1x8x1xf32>
    %425 = vector.shape_cast %424 : vector<1x8x1xf32> to vector<8x1xf32>
    %426 = vector.extract_strided_slice %417 {offsets = [4, 0, 0], sizes = [1, 8, 1], strides = [1, 1, 1]} : vector<5x8x1xf32> to vector<1x8x1xf32>
    %427 = vector.shape_cast %426 : vector<1x8x1xf32> to vector<8x1xf32>
    %428 = vector.broadcast %419 : vector<8x1xf32> to vector<8x16xf32>
    %429 = arith.maximumf %78, %428 : vector<8x16xf32>
    %430 = vector.broadcast %421 : vector<8x1xf32> to vector<8x16xf32>
    %431 = arith.maximumf %86, %430 : vector<8x16xf32>
    %432 = vector.broadcast %423 : vector<8x1xf32> to vector<8x16xf32>
    %433 = arith.minimumf %96, %432 : vector<8x16xf32>
    %434 = vector.broadcast %425 : vector<8x1xf32> to vector<8x16xf32>
    %435 = arith.minimumf %106, %434 : vector<8x16xf32>
    %436 = arith.subf %433, %429 : vector<8x16xf32>
    %cst_119 = arith.constant 1.000000e+00 : f32
    %437 = vector.broadcast %cst_119 : f32 to vector<8x16xf32>
    %438 = arith.addf %436, %437 : vector<8x16xf32>
    %cst_120 = arith.constant 0.000000e+00 : f32
    %439 = vector.broadcast %cst_120 : f32 to vector<8x16xf32>
    %440 = arith.maximumf %438, %439 : vector<8x16xf32>
    %441 = arith.subf %435, %431 : vector<8x16xf32>
    %cst_121 = arith.constant 1.000000e+00 : f32
    %442 = vector.broadcast %cst_121 : f32 to vector<8x16xf32>
    %443 = arith.addf %441, %442 : vector<8x16xf32>
    %cst_122 = arith.constant 0.000000e+00 : f32
    %444 = vector.broadcast %cst_122 : f32 to vector<8x16xf32>
    %445 = arith.maximumf %443, %444 : vector<8x16xf32>
    %446 = arith.mulf %440, %445 : vector<8x16xf32>
    %447 = vector.broadcast %427 : vector<8x1xf32> to vector<8x16xf32>
    %448 = arith.addf %125, %447 : vector<8x16xf32>
    %449 = arith.subf %448, %446 : vector<8x16xf32>
    %cst_123 = arith.constant 5.000000e-01 : f32
    %450 = vector.broadcast %cst_123 : f32 to vector<8x16xf32>
    %451 = arith.mulf %450, %449 : vector<8x16xf32>
    %452 = arith.cmpf ogt, %446, %451 : vector<8x16xf32>
    %cst_124 = arith.constant 0.000000e+00 : f32
    %453 = vector.broadcast %cst_124 : f32 to vector<8x16xf32>
    %454 = arith.cmpf ogt, %449, %453 : vector<8x16xf32>
    %455 = arith.andi %452, %454 : vector<8x16xi1>
    %456 = arith.ori %455, %410 : vector<8x16xi1>
    %cst_125 = arith.constant 0.000000e+00 : f32
    %457 = vector.broadcast %cst_125 : f32 to vector<8x16xf32>
    %458 = arith.select %456, %457, %396 : vector<8x16xi1>, vector<8x16xf32>
    %cst_126 = arith.constant 1.000000e+00 : f32
    %459 = vector.broadcast %cst_126 : f32 to vector<8x16xf32>
    %460 = arith.select %410, %459, %398 : vector<8x16xi1>, vector<8x16xf32>
    %c5_i32 = arith.constant 5 : i32
    %cst_127 = arith.constant 0.000000e+00 : f32
    %461 = vector.broadcast %cst_127 : f32 to vector<8x16xf32>
    %462 = arith.cmpf ogt, %458, %461 : vector<8x16xf32>
    %c-1_i32_128 = arith.constant -1 : i32
    %463 = vector.broadcast %c-1_i32_128 : i32 to vector<8x16xi32>
    %464 = arith.select %462, %141, %463 : vector<8x16xi1>, vector<8x16xi32>
    %cst_129 = arith.constant dense<-2147483648> : vector<8xi32>
    %465 = vector.multi_reduction <maxsi>, %464, %cst_129 [1] : vector<8x16xi32> to vector<8xi32>
    %466 = vector.shape_cast %465 : vector<8xi32> to vector<8x1xi32>
    %c0_i32_130 = arith.constant 0 : i32
    %467 = vector.broadcast %c0_i32_130 : i32 to vector<8x1xi32>
    %468 = arith.cmpi sge, %466, %467 : vector<8x1xi32>
    %469 = vector.broadcast %466 : vector<8x1xi32> to vector<8x16xi32>
    %470 = arith.cmpi eq, %464, %469 : vector<8x16xi32>
    %471 = vector.broadcast %468 : vector<8x1xi1> to vector<8x16xi1>
    %472 = arith.andi %470, %471 : vector<8x16xi1>
    %473 = vector.shape_cast %472 : vector<8x16xi1> to vector<1x8x16xi1>
    %cst_131 = arith.constant 0.000000e+00 : f32
    %474 = vector.shape_cast %473 : vector<1x8x16xi1> to vector<1x8x16xi1>
    %475 = vector.broadcast %474 : vector<1x8x16xi1> to vector<5x8x16xi1>
    %476 = vector.broadcast %cst_131 : f32 to vector<5x8x16xf32>
    %477 = arith.select %475, %131, %476 : vector<5x8x16xi1>, vector<5x8x16xf32>
    %cst_132 = arith.constant dense<0.000000e+00> : vector<5x8xf32>
    %478 = vector.multi_reduction <add>, %477, %cst_132 [2] : vector<5x8x16xf32> to vector<5x8xf32>
    %479 = vector.shape_cast %478 : vector<5x8xf32> to vector<5x8x1xf32>
    %480 = vector.extract_strided_slice %479 {offsets = [0, 0, 0], sizes = [1, 8, 1], strides = [1, 1, 1]} : vector<5x8x1xf32> to vector<1x8x1xf32>
    %481 = vector.shape_cast %480 : vector<1x8x1xf32> to vector<8x1xf32>
    %482 = vector.extract_strided_slice %479 {offsets = [1, 0, 0], sizes = [1, 8, 1], strides = [1, 1, 1]} : vector<5x8x1xf32> to vector<1x8x1xf32>
    %483 = vector.shape_cast %482 : vector<1x8x1xf32> to vector<8x1xf32>
    %484 = vector.extract_strided_slice %479 {offsets = [2, 0, 0], sizes = [1, 8, 1], strides = [1, 1, 1]} : vector<5x8x1xf32> to vector<1x8x1xf32>
    %485 = vector.shape_cast %484 : vector<1x8x1xf32> to vector<8x1xf32>
    %486 = vector.extract_strided_slice %479 {offsets = [3, 0, 0], sizes = [1, 8, 1], strides = [1, 1, 1]} : vector<5x8x1xf32> to vector<1x8x1xf32>
    %487 = vector.shape_cast %486 : vector<1x8x1xf32> to vector<8x1xf32>
    %488 = vector.extract_strided_slice %479 {offsets = [4, 0, 0], sizes = [1, 8, 1], strides = [1, 1, 1]} : vector<5x8x1xf32> to vector<1x8x1xf32>
    %489 = vector.shape_cast %488 : vector<1x8x1xf32> to vector<8x1xf32>
    %490 = vector.broadcast %481 : vector<8x1xf32> to vector<8x16xf32>
    %491 = arith.maximumf %78, %490 : vector<8x16xf32>
    %492 = vector.broadcast %483 : vector<8x1xf32> to vector<8x16xf32>
    %493 = arith.maximumf %86, %492 : vector<8x16xf32>
    %494 = vector.broadcast %485 : vector<8x1xf32> to vector<8x16xf32>
    %495 = arith.minimumf %96, %494 : vector<8x16xf32>
    %496 = vector.broadcast %487 : vector<8x1xf32> to vector<8x16xf32>
    %497 = arith.minimumf %106, %496 : vector<8x16xf32>
    %498 = arith.subf %495, %491 : vector<8x16xf32>
    %cst_133 = arith.constant 1.000000e+00 : f32
    %499 = vector.broadcast %cst_133 : f32 to vector<8x16xf32>
    %500 = arith.addf %498, %499 : vector<8x16xf32>
    %cst_134 = arith.constant 0.000000e+00 : f32
    %501 = vector.broadcast %cst_134 : f32 to vector<8x16xf32>
    %502 = arith.maximumf %500, %501 : vector<8x16xf32>
    %503 = arith.subf %497, %493 : vector<8x16xf32>
    %cst_135 = arith.constant 1.000000e+00 : f32
    %504 = vector.broadcast %cst_135 : f32 to vector<8x16xf32>
    %505 = arith.addf %503, %504 : vector<8x16xf32>
    %cst_136 = arith.constant 0.000000e+00 : f32
    %506 = vector.broadcast %cst_136 : f32 to vector<8x16xf32>
    %507 = arith.maximumf %505, %506 : vector<8x16xf32>
    %508 = arith.mulf %502, %507 : vector<8x16xf32>
    %509 = vector.broadcast %489 : vector<8x1xf32> to vector<8x16xf32>
    %510 = arith.addf %125, %509 : vector<8x16xf32>
    %511 = arith.subf %510, %508 : vector<8x16xf32>
    %cst_137 = arith.constant 5.000000e-01 : f32
    %512 = vector.broadcast %cst_137 : f32 to vector<8x16xf32>
    %513 = arith.mulf %512, %511 : vector<8x16xf32>
    %514 = arith.cmpf ogt, %508, %513 : vector<8x16xf32>
    %cst_138 = arith.constant 0.000000e+00 : f32
    %515 = vector.broadcast %cst_138 : f32 to vector<8x16xf32>
    %516 = arith.cmpf ogt, %511, %515 : vector<8x16xf32>
    %517 = arith.andi %514, %516 : vector<8x16xi1>
    %518 = arith.ori %517, %472 : vector<8x16xi1>
    %cst_139 = arith.constant 0.000000e+00 : f32
    %519 = vector.broadcast %cst_139 : f32 to vector<8x16xf32>
    %520 = arith.select %518, %519, %458 : vector<8x16xi1>, vector<8x16xf32>
    %cst_140 = arith.constant 1.000000e+00 : f32
    %521 = vector.broadcast %cst_140 : f32 to vector<8x16xf32>
    %522 = arith.select %472, %521, %460 : vector<8x16xi1>, vector<8x16xf32>
    %c6_i32 = arith.constant 6 : i32
    %cst_141 = arith.constant 0.000000e+00 : f32
    %523 = vector.broadcast %cst_141 : f32 to vector<8x16xf32>
    %524 = arith.cmpf ogt, %520, %523 : vector<8x16xf32>
    %c-1_i32_142 = arith.constant -1 : i32
    %525 = vector.broadcast %c-1_i32_142 : i32 to vector<8x16xi32>
    %526 = arith.select %524, %141, %525 : vector<8x16xi1>, vector<8x16xi32>
    %cst_143 = arith.constant dense<-2147483648> : vector<8xi32>
    %527 = vector.multi_reduction <maxsi>, %526, %cst_143 [1] : vector<8x16xi32> to vector<8xi32>
    %528 = vector.shape_cast %527 : vector<8xi32> to vector<8x1xi32>
    %c0_i32_144 = arith.constant 0 : i32
    %529 = vector.broadcast %c0_i32_144 : i32 to vector<8x1xi32>
    %530 = arith.cmpi sge, %528, %529 : vector<8x1xi32>
    %531 = vector.broadcast %528 : vector<8x1xi32> to vector<8x16xi32>
    %532 = arith.cmpi eq, %526, %531 : vector<8x16xi32>
    %533 = vector.broadcast %530 : vector<8x1xi1> to vector<8x16xi1>
    %534 = arith.andi %532, %533 : vector<8x16xi1>
    %535 = vector.shape_cast %534 : vector<8x16xi1> to vector<1x8x16xi1>
    %cst_145 = arith.constant 0.000000e+00 : f32
    %536 = vector.shape_cast %535 : vector<1x8x16xi1> to vector<1x8x16xi1>
    %537 = vector.broadcast %536 : vector<1x8x16xi1> to vector<5x8x16xi1>
    %538 = vector.broadcast %cst_145 : f32 to vector<5x8x16xf32>
    %539 = arith.select %537, %131, %538 : vector<5x8x16xi1>, vector<5x8x16xf32>
    %cst_146 = arith.constant dense<0.000000e+00> : vector<5x8xf32>
    %540 = vector.multi_reduction <add>, %539, %cst_146 [2] : vector<5x8x16xf32> to vector<5x8xf32>
    %541 = vector.shape_cast %540 : vector<5x8xf32> to vector<5x8x1xf32>
    %542 = vector.extract_strided_slice %541 {offsets = [0, 0, 0], sizes = [1, 8, 1], strides = [1, 1, 1]} : vector<5x8x1xf32> to vector<1x8x1xf32>
    %543 = vector.shape_cast %542 : vector<1x8x1xf32> to vector<8x1xf32>
    %544 = vector.extract_strided_slice %541 {offsets = [1, 0, 0], sizes = [1, 8, 1], strides = [1, 1, 1]} : vector<5x8x1xf32> to vector<1x8x1xf32>
    %545 = vector.shape_cast %544 : vector<1x8x1xf32> to vector<8x1xf32>
    %546 = vector.extract_strided_slice %541 {offsets = [2, 0, 0], sizes = [1, 8, 1], strides = [1, 1, 1]} : vector<5x8x1xf32> to vector<1x8x1xf32>
    %547 = vector.shape_cast %546 : vector<1x8x1xf32> to vector<8x1xf32>
    %548 = vector.extract_strided_slice %541 {offsets = [3, 0, 0], sizes = [1, 8, 1], strides = [1, 1, 1]} : vector<5x8x1xf32> to vector<1x8x1xf32>
    %549 = vector.shape_cast %548 : vector<1x8x1xf32> to vector<8x1xf32>
    %550 = vector.extract_strided_slice %541 {offsets = [4, 0, 0], sizes = [1, 8, 1], strides = [1, 1, 1]} : vector<5x8x1xf32> to vector<1x8x1xf32>
    %551 = vector.shape_cast %550 : vector<1x8x1xf32> to vector<8x1xf32>
    %552 = vector.broadcast %543 : vector<8x1xf32> to vector<8x16xf32>
    %553 = arith.maximumf %78, %552 : vector<8x16xf32>
    %554 = vector.broadcast %545 : vector<8x1xf32> to vector<8x16xf32>
    %555 = arith.maximumf %86, %554 : vector<8x16xf32>
    %556 = vector.broadcast %547 : vector<8x1xf32> to vector<8x16xf32>
    %557 = arith.minimumf %96, %556 : vector<8x16xf32>
    %558 = vector.broadcast %549 : vector<8x1xf32> to vector<8x16xf32>
    %559 = arith.minimumf %106, %558 : vector<8x16xf32>
    %560 = arith.subf %557, %553 : vector<8x16xf32>
    %cst_147 = arith.constant 1.000000e+00 : f32
    %561 = vector.broadcast %cst_147 : f32 to vector<8x16xf32>
    %562 = arith.addf %560, %561 : vector<8x16xf32>
    %cst_148 = arith.constant 0.000000e+00 : f32
    %563 = vector.broadcast %cst_148 : f32 to vector<8x16xf32>
    %564 = arith.maximumf %562, %563 : vector<8x16xf32>
    %565 = arith.subf %559, %555 : vector<8x16xf32>
    %cst_149 = arith.constant 1.000000e+00 : f32
    %566 = vector.broadcast %cst_149 : f32 to vector<8x16xf32>
    %567 = arith.addf %565, %566 : vector<8x16xf32>
    %cst_150 = arith.constant 0.000000e+00 : f32
    %568 = vector.broadcast %cst_150 : f32 to vector<8x16xf32>
    %569 = arith.maximumf %567, %568 : vector<8x16xf32>
    %570 = arith.mulf %564, %569 : vector<8x16xf32>
    %571 = vector.broadcast %551 : vector<8x1xf32> to vector<8x16xf32>
    %572 = arith.addf %125, %571 : vector<8x16xf32>
    %573 = arith.subf %572, %570 : vector<8x16xf32>
    %cst_151 = arith.constant 5.000000e-01 : f32
    %574 = vector.broadcast %cst_151 : f32 to vector<8x16xf32>
    %575 = arith.mulf %574, %573 : vector<8x16xf32>
    %576 = arith.cmpf ogt, %570, %575 : vector<8x16xf32>
    %cst_152 = arith.constant 0.000000e+00 : f32
    %577 = vector.broadcast %cst_152 : f32 to vector<8x16xf32>
    %578 = arith.cmpf ogt, %573, %577 : vector<8x16xf32>
    %579 = arith.andi %576, %578 : vector<8x16xi1>
    %580 = arith.ori %579, %534 : vector<8x16xi1>
    %cst_153 = arith.constant 0.000000e+00 : f32
    %581 = vector.broadcast %cst_153 : f32 to vector<8x16xf32>
    %582 = arith.select %580, %581, %520 : vector<8x16xi1>, vector<8x16xf32>
    %cst_154 = arith.constant 1.000000e+00 : f32
    %583 = vector.broadcast %cst_154 : f32 to vector<8x16xf32>
    %584 = arith.select %534, %583, %522 : vector<8x16xi1>, vector<8x16xf32>
    %c7_i32 = arith.constant 7 : i32
    %cst_155 = arith.constant 0.000000e+00 : f32
    %585 = vector.broadcast %cst_155 : f32 to vector<8x16xf32>
    %586 = arith.cmpf ogt, %582, %585 : vector<8x16xf32>
    %c-1_i32_156 = arith.constant -1 : i32
    %587 = vector.broadcast %c-1_i32_156 : i32 to vector<8x16xi32>
    %588 = arith.select %586, %141, %587 : vector<8x16xi1>, vector<8x16xi32>
    %cst_157 = arith.constant dense<-2147483648> : vector<8xi32>
    %589 = vector.multi_reduction <maxsi>, %588, %cst_157 [1] : vector<8x16xi32> to vector<8xi32>
    %590 = vector.shape_cast %589 : vector<8xi32> to vector<8x1xi32>
    %c0_i32_158 = arith.constant 0 : i32
    %591 = vector.broadcast %c0_i32_158 : i32 to vector<8x1xi32>
    %592 = arith.cmpi sge, %590, %591 : vector<8x1xi32>
    %593 = vector.broadcast %590 : vector<8x1xi32> to vector<8x16xi32>
    %594 = arith.cmpi eq, %588, %593 : vector<8x16xi32>
    %595 = vector.broadcast %592 : vector<8x1xi1> to vector<8x16xi1>
    %596 = arith.andi %594, %595 : vector<8x16xi1>
    %597 = vector.shape_cast %596 : vector<8x16xi1> to vector<1x8x16xi1>
    %cst_159 = arith.constant 0.000000e+00 : f32
    %598 = vector.shape_cast %597 : vector<1x8x16xi1> to vector<1x8x16xi1>
    %599 = vector.broadcast %598 : vector<1x8x16xi1> to vector<5x8x16xi1>
    %600 = vector.broadcast %cst_159 : f32 to vector<5x8x16xf32>
    %601 = arith.select %599, %131, %600 : vector<5x8x16xi1>, vector<5x8x16xf32>
    %cst_160 = arith.constant dense<0.000000e+00> : vector<5x8xf32>
    %602 = vector.multi_reduction <add>, %601, %cst_160 [2] : vector<5x8x16xf32> to vector<5x8xf32>
    %603 = vector.shape_cast %602 : vector<5x8xf32> to vector<5x8x1xf32>
    %604 = vector.extract_strided_slice %603 {offsets = [0, 0, 0], sizes = [1, 8, 1], strides = [1, 1, 1]} : vector<5x8x1xf32> to vector<1x8x1xf32>
    %605 = vector.shape_cast %604 : vector<1x8x1xf32> to vector<8x1xf32>
    %606 = vector.extract_strided_slice %603 {offsets = [1, 0, 0], sizes = [1, 8, 1], strides = [1, 1, 1]} : vector<5x8x1xf32> to vector<1x8x1xf32>
    %607 = vector.shape_cast %606 : vector<1x8x1xf32> to vector<8x1xf32>
    %608 = vector.extract_strided_slice %603 {offsets = [2, 0, 0], sizes = [1, 8, 1], strides = [1, 1, 1]} : vector<5x8x1xf32> to vector<1x8x1xf32>
    %609 = vector.shape_cast %608 : vector<1x8x1xf32> to vector<8x1xf32>
    %610 = vector.extract_strided_slice %603 {offsets = [3, 0, 0], sizes = [1, 8, 1], strides = [1, 1, 1]} : vector<5x8x1xf32> to vector<1x8x1xf32>
    %611 = vector.shape_cast %610 : vector<1x8x1xf32> to vector<8x1xf32>
    %612 = vector.extract_strided_slice %603 {offsets = [4, 0, 0], sizes = [1, 8, 1], strides = [1, 1, 1]} : vector<5x8x1xf32> to vector<1x8x1xf32>
    %613 = vector.shape_cast %612 : vector<1x8x1xf32> to vector<8x1xf32>
    %614 = vector.broadcast %605 : vector<8x1xf32> to vector<8x16xf32>
    %615 = arith.maximumf %78, %614 : vector<8x16xf32>
    %616 = vector.broadcast %607 : vector<8x1xf32> to vector<8x16xf32>
    %617 = arith.maximumf %86, %616 : vector<8x16xf32>
    %618 = vector.broadcast %609 : vector<8x1xf32> to vector<8x16xf32>
    %619 = arith.minimumf %96, %618 : vector<8x16xf32>
    %620 = vector.broadcast %611 : vector<8x1xf32> to vector<8x16xf32>
    %621 = arith.minimumf %106, %620 : vector<8x16xf32>
    %622 = arith.subf %619, %615 : vector<8x16xf32>
    %cst_161 = arith.constant 1.000000e+00 : f32
    %623 = vector.broadcast %cst_161 : f32 to vector<8x16xf32>
    %624 = arith.addf %622, %623 : vector<8x16xf32>
    %cst_162 = arith.constant 0.000000e+00 : f32
    %625 = vector.broadcast %cst_162 : f32 to vector<8x16xf32>
    %626 = arith.maximumf %624, %625 : vector<8x16xf32>
    %627 = arith.subf %621, %617 : vector<8x16xf32>
    %cst_163 = arith.constant 1.000000e+00 : f32
    %628 = vector.broadcast %cst_163 : f32 to vector<8x16xf32>
    %629 = arith.addf %627, %628 : vector<8x16xf32>
    %cst_164 = arith.constant 0.000000e+00 : f32
    %630 = vector.broadcast %cst_164 : f32 to vector<8x16xf32>
    %631 = arith.maximumf %629, %630 : vector<8x16xf32>
    %632 = arith.mulf %626, %631 : vector<8x16xf32>
    %633 = vector.broadcast %613 : vector<8x1xf32> to vector<8x16xf32>
    %634 = arith.addf %125, %633 : vector<8x16xf32>
    %635 = arith.subf %634, %632 : vector<8x16xf32>
    %cst_165 = arith.constant 5.000000e-01 : f32
    %636 = vector.broadcast %cst_165 : f32 to vector<8x16xf32>
    %637 = arith.mulf %636, %635 : vector<8x16xf32>
    %638 = arith.cmpf ogt, %632, %637 : vector<8x16xf32>
    %cst_166 = arith.constant 0.000000e+00 : f32
    %639 = vector.broadcast %cst_166 : f32 to vector<8x16xf32>
    %640 = arith.cmpf ogt, %635, %639 : vector<8x16xf32>
    %641 = arith.andi %638, %640 : vector<8x16xi1>
    %642 = arith.ori %641, %596 : vector<8x16xi1>
    %cst_167 = arith.constant 0.000000e+00 : f32
    %643 = vector.broadcast %cst_167 : f32 to vector<8x16xf32>
    %644 = arith.select %642, %643, %582 : vector<8x16xi1>, vector<8x16xf32>
    %cst_168 = arith.constant 1.000000e+00 : f32
    %645 = vector.broadcast %cst_168 : f32 to vector<8x16xf32>
    %646 = arith.select %596, %645, %584 : vector<8x16xi1>, vector<8x16xf32>
    %c8_i32 = arith.constant 8 : i32
    %cst_169 = arith.constant 0.000000e+00 : f32
    %647 = vector.broadcast %cst_169 : f32 to vector<8x16xf32>
    %648 = arith.cmpf ogt, %644, %647 : vector<8x16xf32>
    %c-1_i32_170 = arith.constant -1 : i32
    %649 = vector.broadcast %c-1_i32_170 : i32 to vector<8x16xi32>
    %650 = arith.select %648, %141, %649 : vector<8x16xi1>, vector<8x16xi32>
    %cst_171 = arith.constant dense<-2147483648> : vector<8xi32>
    %651 = vector.multi_reduction <maxsi>, %650, %cst_171 [1] : vector<8x16xi32> to vector<8xi32>
    %652 = vector.shape_cast %651 : vector<8xi32> to vector<8x1xi32>
    %c0_i32_172 = arith.constant 0 : i32
    %653 = vector.broadcast %c0_i32_172 : i32 to vector<8x1xi32>
    %654 = arith.cmpi sge, %652, %653 : vector<8x1xi32>
    %655 = vector.broadcast %652 : vector<8x1xi32> to vector<8x16xi32>
    %656 = arith.cmpi eq, %650, %655 : vector<8x16xi32>
    %657 = vector.broadcast %654 : vector<8x1xi1> to vector<8x16xi1>
    %658 = arith.andi %656, %657 : vector<8x16xi1>
    %659 = vector.shape_cast %658 : vector<8x16xi1> to vector<1x8x16xi1>
    %cst_173 = arith.constant 0.000000e+00 : f32
    %660 = vector.shape_cast %659 : vector<1x8x16xi1> to vector<1x8x16xi1>
    %661 = vector.broadcast %660 : vector<1x8x16xi1> to vector<5x8x16xi1>
    %662 = vector.broadcast %cst_173 : f32 to vector<5x8x16xf32>
    %663 = arith.select %661, %131, %662 : vector<5x8x16xi1>, vector<5x8x16xf32>
    %cst_174 = arith.constant dense<0.000000e+00> : vector<5x8xf32>
    %664 = vector.multi_reduction <add>, %663, %cst_174 [2] : vector<5x8x16xf32> to vector<5x8xf32>
    %665 = vector.shape_cast %664 : vector<5x8xf32> to vector<5x8x1xf32>
    %666 = vector.extract_strided_slice %665 {offsets = [0, 0, 0], sizes = [1, 8, 1], strides = [1, 1, 1]} : vector<5x8x1xf32> to vector<1x8x1xf32>
    %667 = vector.shape_cast %666 : vector<1x8x1xf32> to vector<8x1xf32>
    %668 = vector.extract_strided_slice %665 {offsets = [1, 0, 0], sizes = [1, 8, 1], strides = [1, 1, 1]} : vector<5x8x1xf32> to vector<1x8x1xf32>
    %669 = vector.shape_cast %668 : vector<1x8x1xf32> to vector<8x1xf32>
    %670 = vector.extract_strided_slice %665 {offsets = [2, 0, 0], sizes = [1, 8, 1], strides = [1, 1, 1]} : vector<5x8x1xf32> to vector<1x8x1xf32>
    %671 = vector.shape_cast %670 : vector<1x8x1xf32> to vector<8x1xf32>
    %672 = vector.extract_strided_slice %665 {offsets = [3, 0, 0], sizes = [1, 8, 1], strides = [1, 1, 1]} : vector<5x8x1xf32> to vector<1x8x1xf32>
    %673 = vector.shape_cast %672 : vector<1x8x1xf32> to vector<8x1xf32>
    %674 = vector.extract_strided_slice %665 {offsets = [4, 0, 0], sizes = [1, 8, 1], strides = [1, 1, 1]} : vector<5x8x1xf32> to vector<1x8x1xf32>
    %675 = vector.shape_cast %674 : vector<1x8x1xf32> to vector<8x1xf32>
    %676 = vector.broadcast %667 : vector<8x1xf32> to vector<8x16xf32>
    %677 = arith.maximumf %78, %676 : vector<8x16xf32>
    %678 = vector.broadcast %669 : vector<8x1xf32> to vector<8x16xf32>
    %679 = arith.maximumf %86, %678 : vector<8x16xf32>
    %680 = vector.broadcast %671 : vector<8x1xf32> to vector<8x16xf32>
    %681 = arith.minimumf %96, %680 : vector<8x16xf32>
    %682 = vector.broadcast %673 : vector<8x1xf32> to vector<8x16xf32>
    %683 = arith.minimumf %106, %682 : vector<8x16xf32>
    %684 = arith.subf %681, %677 : vector<8x16xf32>
    %cst_175 = arith.constant 1.000000e+00 : f32
    %685 = vector.broadcast %cst_175 : f32 to vector<8x16xf32>
    %686 = arith.addf %684, %685 : vector<8x16xf32>
    %cst_176 = arith.constant 0.000000e+00 : f32
    %687 = vector.broadcast %cst_176 : f32 to vector<8x16xf32>
    %688 = arith.maximumf %686, %687 : vector<8x16xf32>
    %689 = arith.subf %683, %679 : vector<8x16xf32>
    %cst_177 = arith.constant 1.000000e+00 : f32
    %690 = vector.broadcast %cst_177 : f32 to vector<8x16xf32>
    %691 = arith.addf %689, %690 : vector<8x16xf32>
    %cst_178 = arith.constant 0.000000e+00 : f32
    %692 = vector.broadcast %cst_178 : f32 to vector<8x16xf32>
    %693 = arith.maximumf %691, %692 : vector<8x16xf32>
    %694 = arith.mulf %688, %693 : vector<8x16xf32>
    %695 = vector.broadcast %675 : vector<8x1xf32> to vector<8x16xf32>
    %696 = arith.addf %125, %695 : vector<8x16xf32>
    %697 = arith.subf %696, %694 : vector<8x16xf32>
    %cst_179 = arith.constant 5.000000e-01 : f32
    %698 = vector.broadcast %cst_179 : f32 to vector<8x16xf32>
    %699 = arith.mulf %698, %697 : vector<8x16xf32>
    %700 = arith.cmpf ogt, %694, %699 : vector<8x16xf32>
    %cst_180 = arith.constant 0.000000e+00 : f32
    %701 = vector.broadcast %cst_180 : f32 to vector<8x16xf32>
    %702 = arith.cmpf ogt, %697, %701 : vector<8x16xf32>
    %703 = arith.andi %700, %702 : vector<8x16xi1>
    %704 = arith.ori %703, %658 : vector<8x16xi1>
    %cst_181 = arith.constant 0.000000e+00 : f32
    %705 = vector.broadcast %cst_181 : f32 to vector<8x16xf32>
    %706 = arith.select %704, %705, %644 : vector<8x16xi1>, vector<8x16xf32>
    %cst_182 = arith.constant 1.000000e+00 : f32
    %707 = vector.broadcast %cst_182 : f32 to vector<8x16xf32>
    %708 = arith.select %658, %707, %646 : vector<8x16xi1>, vector<8x16xf32>
    %c9_i32 = arith.constant 9 : i32
    %cst_183 = arith.constant 0.000000e+00 : f32
    %709 = vector.broadcast %cst_183 : f32 to vector<8x16xf32>
    %710 = arith.cmpf ogt, %706, %709 : vector<8x16xf32>
    %c-1_i32_184 = arith.constant -1 : i32
    %711 = vector.broadcast %c-1_i32_184 : i32 to vector<8x16xi32>
    %712 = arith.select %710, %141, %711 : vector<8x16xi1>, vector<8x16xi32>
    %cst_185 = arith.constant dense<-2147483648> : vector<8xi32>
    %713 = vector.multi_reduction <maxsi>, %712, %cst_185 [1] : vector<8x16xi32> to vector<8xi32>
    %714 = vector.shape_cast %713 : vector<8xi32> to vector<8x1xi32>
    %c0_i32_186 = arith.constant 0 : i32
    %715 = vector.broadcast %c0_i32_186 : i32 to vector<8x1xi32>
    %716 = arith.cmpi sge, %714, %715 : vector<8x1xi32>
    %717 = vector.broadcast %714 : vector<8x1xi32> to vector<8x16xi32>
    %718 = arith.cmpi eq, %712, %717 : vector<8x16xi32>
    %719 = vector.broadcast %716 : vector<8x1xi1> to vector<8x16xi1>
    %720 = arith.andi %718, %719 : vector<8x16xi1>
    %721 = vector.shape_cast %720 : vector<8x16xi1> to vector<1x8x16xi1>
    %cst_187 = arith.constant 0.000000e+00 : f32
    %722 = vector.shape_cast %721 : vector<1x8x16xi1> to vector<1x8x16xi1>
    %723 = vector.broadcast %722 : vector<1x8x16xi1> to vector<5x8x16xi1>
    %724 = vector.broadcast %cst_187 : f32 to vector<5x8x16xf32>
    %725 = arith.select %723, %131, %724 : vector<5x8x16xi1>, vector<5x8x16xf32>
    %cst_188 = arith.constant dense<0.000000e+00> : vector<5x8xf32>
    %726 = vector.multi_reduction <add>, %725, %cst_188 [2] : vector<5x8x16xf32> to vector<5x8xf32>
    %727 = vector.shape_cast %726 : vector<5x8xf32> to vector<5x8x1xf32>
    %728 = vector.extract_strided_slice %727 {offsets = [0, 0, 0], sizes = [1, 8, 1], strides = [1, 1, 1]} : vector<5x8x1xf32> to vector<1x8x1xf32>
    %729 = vector.shape_cast %728 : vector<1x8x1xf32> to vector<8x1xf32>
    %730 = vector.extract_strided_slice %727 {offsets = [1, 0, 0], sizes = [1, 8, 1], strides = [1, 1, 1]} : vector<5x8x1xf32> to vector<1x8x1xf32>
    %731 = vector.shape_cast %730 : vector<1x8x1xf32> to vector<8x1xf32>
    %732 = vector.extract_strided_slice %727 {offsets = [2, 0, 0], sizes = [1, 8, 1], strides = [1, 1, 1]} : vector<5x8x1xf32> to vector<1x8x1xf32>
    %733 = vector.shape_cast %732 : vector<1x8x1xf32> to vector<8x1xf32>
    %734 = vector.extract_strided_slice %727 {offsets = [3, 0, 0], sizes = [1, 8, 1], strides = [1, 1, 1]} : vector<5x8x1xf32> to vector<1x8x1xf32>
    %735 = vector.shape_cast %734 : vector<1x8x1xf32> to vector<8x1xf32>
    %736 = vector.extract_strided_slice %727 {offsets = [4, 0, 0], sizes = [1, 8, 1], strides = [1, 1, 1]} : vector<5x8x1xf32> to vector<1x8x1xf32>
    %737 = vector.shape_cast %736 : vector<1x8x1xf32> to vector<8x1xf32>
    %738 = vector.broadcast %729 : vector<8x1xf32> to vector<8x16xf32>
    %739 = arith.maximumf %78, %738 : vector<8x16xf32>
    %740 = vector.broadcast %731 : vector<8x1xf32> to vector<8x16xf32>
    %741 = arith.maximumf %86, %740 : vector<8x16xf32>
    %742 = vector.broadcast %733 : vector<8x1xf32> to vector<8x16xf32>
    %743 = arith.minimumf %96, %742 : vector<8x16xf32>
    %744 = vector.broadcast %735 : vector<8x1xf32> to vector<8x16xf32>
    %745 = arith.minimumf %106, %744 : vector<8x16xf32>
    %746 = arith.subf %743, %739 : vector<8x16xf32>
    %cst_189 = arith.constant 1.000000e+00 : f32
    %747 = vector.broadcast %cst_189 : f32 to vector<8x16xf32>
    %748 = arith.addf %746, %747 : vector<8x16xf32>
    %cst_190 = arith.constant 0.000000e+00 : f32
    %749 = vector.broadcast %cst_190 : f32 to vector<8x16xf32>
    %750 = arith.maximumf %748, %749 : vector<8x16xf32>
    %751 = arith.subf %745, %741 : vector<8x16xf32>
    %cst_191 = arith.constant 1.000000e+00 : f32
    %752 = vector.broadcast %cst_191 : f32 to vector<8x16xf32>
    %753 = arith.addf %751, %752 : vector<8x16xf32>
    %cst_192 = arith.constant 0.000000e+00 : f32
    %754 = vector.broadcast %cst_192 : f32 to vector<8x16xf32>
    %755 = arith.maximumf %753, %754 : vector<8x16xf32>
    %756 = arith.mulf %750, %755 : vector<8x16xf32>
    %757 = vector.broadcast %737 : vector<8x1xf32> to vector<8x16xf32>
    %758 = arith.addf %125, %757 : vector<8x16xf32>
    %759 = arith.subf %758, %756 : vector<8x16xf32>
    %cst_193 = arith.constant 5.000000e-01 : f32
    %760 = vector.broadcast %cst_193 : f32 to vector<8x16xf32>
    %761 = arith.mulf %760, %759 : vector<8x16xf32>
    %762 = arith.cmpf ogt, %756, %761 : vector<8x16xf32>
    %cst_194 = arith.constant 0.000000e+00 : f32
    %763 = vector.broadcast %cst_194 : f32 to vector<8x16xf32>
    %764 = arith.cmpf ogt, %759, %763 : vector<8x16xf32>
    %765 = arith.andi %762, %764 : vector<8x16xi1>
    %766 = arith.ori %765, %720 : vector<8x16xi1>
    %cst_195 = arith.constant 0.000000e+00 : f32
    %767 = vector.broadcast %cst_195 : f32 to vector<8x16xf32>
    %768 = arith.select %766, %767, %706 : vector<8x16xi1>, vector<8x16xf32>
    %cst_196 = arith.constant 1.000000e+00 : f32
    %769 = vector.broadcast %cst_196 : f32 to vector<8x16xf32>
    %770 = arith.select %720, %769, %708 : vector<8x16xi1>, vector<8x16xf32>
    %c10_i32 = arith.constant 10 : i32
    %cst_197 = arith.constant 0.000000e+00 : f32
    %771 = vector.broadcast %cst_197 : f32 to vector<8x16xf32>
    %772 = arith.cmpf ogt, %768, %771 : vector<8x16xf32>
    %c-1_i32_198 = arith.constant -1 : i32
    %773 = vector.broadcast %c-1_i32_198 : i32 to vector<8x16xi32>
    %774 = arith.select %772, %141, %773 : vector<8x16xi1>, vector<8x16xi32>
    %cst_199 = arith.constant dense<-2147483648> : vector<8xi32>
    %775 = vector.multi_reduction <maxsi>, %774, %cst_199 [1] : vector<8x16xi32> to vector<8xi32>
    %776 = vector.shape_cast %775 : vector<8xi32> to vector<8x1xi32>
    %c0_i32_200 = arith.constant 0 : i32
    %777 = vector.broadcast %c0_i32_200 : i32 to vector<8x1xi32>
    %778 = arith.cmpi sge, %776, %777 : vector<8x1xi32>
    %779 = vector.broadcast %776 : vector<8x1xi32> to vector<8x16xi32>
    %780 = arith.cmpi eq, %774, %779 : vector<8x16xi32>
    %781 = vector.broadcast %778 : vector<8x1xi1> to vector<8x16xi1>
    %782 = arith.andi %780, %781 : vector<8x16xi1>
    %783 = vector.shape_cast %782 : vector<8x16xi1> to vector<1x8x16xi1>
    %cst_201 = arith.constant 0.000000e+00 : f32
    %784 = vector.shape_cast %783 : vector<1x8x16xi1> to vector<1x8x16xi1>
    %785 = vector.broadcast %784 : vector<1x8x16xi1> to vector<5x8x16xi1>
    %786 = vector.broadcast %cst_201 : f32 to vector<5x8x16xf32>
    %787 = arith.select %785, %131, %786 : vector<5x8x16xi1>, vector<5x8x16xf32>
    %cst_202 = arith.constant dense<0.000000e+00> : vector<5x8xf32>
    %788 = vector.multi_reduction <add>, %787, %cst_202 [2] : vector<5x8x16xf32> to vector<5x8xf32>
    %789 = vector.shape_cast %788 : vector<5x8xf32> to vector<5x8x1xf32>
    %790 = vector.extract_strided_slice %789 {offsets = [0, 0, 0], sizes = [1, 8, 1], strides = [1, 1, 1]} : vector<5x8x1xf32> to vector<1x8x1xf32>
    %791 = vector.shape_cast %790 : vector<1x8x1xf32> to vector<8x1xf32>
    %792 = vector.extract_strided_slice %789 {offsets = [1, 0, 0], sizes = [1, 8, 1], strides = [1, 1, 1]} : vector<5x8x1xf32> to vector<1x8x1xf32>
    %793 = vector.shape_cast %792 : vector<1x8x1xf32> to vector<8x1xf32>
    %794 = vector.extract_strided_slice %789 {offsets = [2, 0, 0], sizes = [1, 8, 1], strides = [1, 1, 1]} : vector<5x8x1xf32> to vector<1x8x1xf32>
    %795 = vector.shape_cast %794 : vector<1x8x1xf32> to vector<8x1xf32>
    %796 = vector.extract_strided_slice %789 {offsets = [3, 0, 0], sizes = [1, 8, 1], strides = [1, 1, 1]} : vector<5x8x1xf32> to vector<1x8x1xf32>
    %797 = vector.shape_cast %796 : vector<1x8x1xf32> to vector<8x1xf32>
    %798 = vector.extract_strided_slice %789 {offsets = [4, 0, 0], sizes = [1, 8, 1], strides = [1, 1, 1]} : vector<5x8x1xf32> to vector<1x8x1xf32>
    %799 = vector.shape_cast %798 : vector<1x8x1xf32> to vector<8x1xf32>
    %800 = vector.broadcast %791 : vector<8x1xf32> to vector<8x16xf32>
    %801 = arith.maximumf %78, %800 : vector<8x16xf32>
    %802 = vector.broadcast %793 : vector<8x1xf32> to vector<8x16xf32>
    %803 = arith.maximumf %86, %802 : vector<8x16xf32>
    %804 = vector.broadcast %795 : vector<8x1xf32> to vector<8x16xf32>
    %805 = arith.minimumf %96, %804 : vector<8x16xf32>
    %806 = vector.broadcast %797 : vector<8x1xf32> to vector<8x16xf32>
    %807 = arith.minimumf %106, %806 : vector<8x16xf32>
    %808 = arith.subf %805, %801 : vector<8x16xf32>
    %cst_203 = arith.constant 1.000000e+00 : f32
    %809 = vector.broadcast %cst_203 : f32 to vector<8x16xf32>
    %810 = arith.addf %808, %809 : vector<8x16xf32>
    %cst_204 = arith.constant 0.000000e+00 : f32
    %811 = vector.broadcast %cst_204 : f32 to vector<8x16xf32>
    %812 = arith.maximumf %810, %811 : vector<8x16xf32>
    %813 = arith.subf %807, %803 : vector<8x16xf32>
    %cst_205 = arith.constant 1.000000e+00 : f32
    %814 = vector.broadcast %cst_205 : f32 to vector<8x16xf32>
    %815 = arith.addf %813, %814 : vector<8x16xf32>
    %cst_206 = arith.constant 0.000000e+00 : f32
    %816 = vector.broadcast %cst_206 : f32 to vector<8x16xf32>
    %817 = arith.maximumf %815, %816 : vector<8x16xf32>
    %818 = arith.mulf %812, %817 : vector<8x16xf32>
    %819 = vector.broadcast %799 : vector<8x1xf32> to vector<8x16xf32>
    %820 = arith.addf %125, %819 : vector<8x16xf32>
    %821 = arith.subf %820, %818 : vector<8x16xf32>
    %cst_207 = arith.constant 5.000000e-01 : f32
    %822 = vector.broadcast %cst_207 : f32 to vector<8x16xf32>
    %823 = arith.mulf %822, %821 : vector<8x16xf32>
    %824 = arith.cmpf ogt, %818, %823 : vector<8x16xf32>
    %cst_208 = arith.constant 0.000000e+00 : f32
    %825 = vector.broadcast %cst_208 : f32 to vector<8x16xf32>
    %826 = arith.cmpf ogt, %821, %825 : vector<8x16xf32>
    %827 = arith.andi %824, %826 : vector<8x16xi1>
    %828 = arith.ori %827, %782 : vector<8x16xi1>
    %cst_209 = arith.constant 0.000000e+00 : f32
    %829 = vector.broadcast %cst_209 : f32 to vector<8x16xf32>
    %830 = arith.select %828, %829, %768 : vector<8x16xi1>, vector<8x16xf32>
    %cst_210 = arith.constant 1.000000e+00 : f32
    %831 = vector.broadcast %cst_210 : f32 to vector<8x16xf32>
    %832 = arith.select %782, %831, %770 : vector<8x16xi1>, vector<8x16xf32>
    %c11_i32 = arith.constant 11 : i32
    %cst_211 = arith.constant 0.000000e+00 : f32
    %833 = vector.broadcast %cst_211 : f32 to vector<8x16xf32>
    %834 = arith.cmpf ogt, %830, %833 : vector<8x16xf32>
    %c-1_i32_212 = arith.constant -1 : i32
    %835 = vector.broadcast %c-1_i32_212 : i32 to vector<8x16xi32>
    %836 = arith.select %834, %141, %835 : vector<8x16xi1>, vector<8x16xi32>
    %cst_213 = arith.constant dense<-2147483648> : vector<8xi32>
    %837 = vector.multi_reduction <maxsi>, %836, %cst_213 [1] : vector<8x16xi32> to vector<8xi32>
    %838 = vector.shape_cast %837 : vector<8xi32> to vector<8x1xi32>
    %c0_i32_214 = arith.constant 0 : i32
    %839 = vector.broadcast %c0_i32_214 : i32 to vector<8x1xi32>
    %840 = arith.cmpi sge, %838, %839 : vector<8x1xi32>
    %841 = vector.broadcast %838 : vector<8x1xi32> to vector<8x16xi32>
    %842 = arith.cmpi eq, %836, %841 : vector<8x16xi32>
    %843 = vector.broadcast %840 : vector<8x1xi1> to vector<8x16xi1>
    %844 = arith.andi %842, %843 : vector<8x16xi1>
    %845 = vector.shape_cast %844 : vector<8x16xi1> to vector<1x8x16xi1>
    %cst_215 = arith.constant 0.000000e+00 : f32
    %846 = vector.shape_cast %845 : vector<1x8x16xi1> to vector<1x8x16xi1>
    %847 = vector.broadcast %846 : vector<1x8x16xi1> to vector<5x8x16xi1>
    %848 = vector.broadcast %cst_215 : f32 to vector<5x8x16xf32>
    %849 = arith.select %847, %131, %848 : vector<5x8x16xi1>, vector<5x8x16xf32>
    %cst_216 = arith.constant dense<0.000000e+00> : vector<5x8xf32>
    %850 = vector.multi_reduction <add>, %849, %cst_216 [2] : vector<5x8x16xf32> to vector<5x8xf32>
    %851 = vector.shape_cast %850 : vector<5x8xf32> to vector<5x8x1xf32>
    %852 = vector.extract_strided_slice %851 {offsets = [0, 0, 0], sizes = [1, 8, 1], strides = [1, 1, 1]} : vector<5x8x1xf32> to vector<1x8x1xf32>
    %853 = vector.shape_cast %852 : vector<1x8x1xf32> to vector<8x1xf32>
    %854 = vector.extract_strided_slice %851 {offsets = [1, 0, 0], sizes = [1, 8, 1], strides = [1, 1, 1]} : vector<5x8x1xf32> to vector<1x8x1xf32>
    %855 = vector.shape_cast %854 : vector<1x8x1xf32> to vector<8x1xf32>
    %856 = vector.extract_strided_slice %851 {offsets = [2, 0, 0], sizes = [1, 8, 1], strides = [1, 1, 1]} : vector<5x8x1xf32> to vector<1x8x1xf32>
    %857 = vector.shape_cast %856 : vector<1x8x1xf32> to vector<8x1xf32>
    %858 = vector.extract_strided_slice %851 {offsets = [3, 0, 0], sizes = [1, 8, 1], strides = [1, 1, 1]} : vector<5x8x1xf32> to vector<1x8x1xf32>
    %859 = vector.shape_cast %858 : vector<1x8x1xf32> to vector<8x1xf32>
    %860 = vector.extract_strided_slice %851 {offsets = [4, 0, 0], sizes = [1, 8, 1], strides = [1, 1, 1]} : vector<5x8x1xf32> to vector<1x8x1xf32>
    %861 = vector.shape_cast %860 : vector<1x8x1xf32> to vector<8x1xf32>
    %862 = vector.broadcast %853 : vector<8x1xf32> to vector<8x16xf32>
    %863 = arith.maximumf %78, %862 : vector<8x16xf32>
    %864 = vector.broadcast %855 : vector<8x1xf32> to vector<8x16xf32>
    %865 = arith.maximumf %86, %864 : vector<8x16xf32>
    %866 = vector.broadcast %857 : vector<8x1xf32> to vector<8x16xf32>
    %867 = arith.minimumf %96, %866 : vector<8x16xf32>
    %868 = vector.broadcast %859 : vector<8x1xf32> to vector<8x16xf32>
    %869 = arith.minimumf %106, %868 : vector<8x16xf32>
    %870 = arith.subf %867, %863 : vector<8x16xf32>
    %cst_217 = arith.constant 1.000000e+00 : f32
    %871 = vector.broadcast %cst_217 : f32 to vector<8x16xf32>
    %872 = arith.addf %870, %871 : vector<8x16xf32>
    %cst_218 = arith.constant 0.000000e+00 : f32
    %873 = vector.broadcast %cst_218 : f32 to vector<8x16xf32>
    %874 = arith.maximumf %872, %873 : vector<8x16xf32>
    %875 = arith.subf %869, %865 : vector<8x16xf32>
    %cst_219 = arith.constant 1.000000e+00 : f32
    %876 = vector.broadcast %cst_219 : f32 to vector<8x16xf32>
    %877 = arith.addf %875, %876 : vector<8x16xf32>
    %cst_220 = arith.constant 0.000000e+00 : f32
    %878 = vector.broadcast %cst_220 : f32 to vector<8x16xf32>
    %879 = arith.maximumf %877, %878 : vector<8x16xf32>
    %880 = arith.mulf %874, %879 : vector<8x16xf32>
    %881 = vector.broadcast %861 : vector<8x1xf32> to vector<8x16xf32>
    %882 = arith.addf %125, %881 : vector<8x16xf32>
    %883 = arith.subf %882, %880 : vector<8x16xf32>
    %cst_221 = arith.constant 5.000000e-01 : f32
    %884 = vector.broadcast %cst_221 : f32 to vector<8x16xf32>
    %885 = arith.mulf %884, %883 : vector<8x16xf32>
    %886 = arith.cmpf ogt, %880, %885 : vector<8x16xf32>
    %cst_222 = arith.constant 0.000000e+00 : f32
    %887 = vector.broadcast %cst_222 : f32 to vector<8x16xf32>
    %888 = arith.cmpf ogt, %883, %887 : vector<8x16xf32>
    %889 = arith.andi %886, %888 : vector<8x16xi1>
    %890 = arith.ori %889, %844 : vector<8x16xi1>
    %cst_223 = arith.constant 0.000000e+00 : f32
    %891 = vector.broadcast %cst_223 : f32 to vector<8x16xf32>
    %892 = arith.select %890, %891, %830 : vector<8x16xi1>, vector<8x16xf32>
    %cst_224 = arith.constant 1.000000e+00 : f32
    %893 = vector.broadcast %cst_224 : f32 to vector<8x16xf32>
    %894 = arith.select %844, %893, %832 : vector<8x16xi1>, vector<8x16xf32>
    %c12_i32 = arith.constant 12 : i32
    %cst_225 = arith.constant 0.000000e+00 : f32
    %895 = vector.broadcast %cst_225 : f32 to vector<8x16xf32>
    %896 = arith.cmpf ogt, %892, %895 : vector<8x16xf32>
    %c-1_i32_226 = arith.constant -1 : i32
    %897 = vector.broadcast %c-1_i32_226 : i32 to vector<8x16xi32>
    %898 = arith.select %896, %141, %897 : vector<8x16xi1>, vector<8x16xi32>
    %cst_227 = arith.constant dense<-2147483648> : vector<8xi32>
    %899 = vector.multi_reduction <maxsi>, %898, %cst_227 [1] : vector<8x16xi32> to vector<8xi32>
    %900 = vector.shape_cast %899 : vector<8xi32> to vector<8x1xi32>
    %c0_i32_228 = arith.constant 0 : i32
    %901 = vector.broadcast %c0_i32_228 : i32 to vector<8x1xi32>
    %902 = arith.cmpi sge, %900, %901 : vector<8x1xi32>
    %903 = vector.broadcast %900 : vector<8x1xi32> to vector<8x16xi32>
    %904 = arith.cmpi eq, %898, %903 : vector<8x16xi32>
    %905 = vector.broadcast %902 : vector<8x1xi1> to vector<8x16xi1>
    %906 = arith.andi %904, %905 : vector<8x16xi1>
    %907 = vector.shape_cast %906 : vector<8x16xi1> to vector<1x8x16xi1>
    %cst_229 = arith.constant 0.000000e+00 : f32
    %908 = vector.shape_cast %907 : vector<1x8x16xi1> to vector<1x8x16xi1>
    %909 = vector.broadcast %908 : vector<1x8x16xi1> to vector<5x8x16xi1>
    %910 = vector.broadcast %cst_229 : f32 to vector<5x8x16xf32>
    %911 = arith.select %909, %131, %910 : vector<5x8x16xi1>, vector<5x8x16xf32>
    %cst_230 = arith.constant dense<0.000000e+00> : vector<5x8xf32>
    %912 = vector.multi_reduction <add>, %911, %cst_230 [2] : vector<5x8x16xf32> to vector<5x8xf32>
    %913 = vector.shape_cast %912 : vector<5x8xf32> to vector<5x8x1xf32>
    %914 = vector.extract_strided_slice %913 {offsets = [0, 0, 0], sizes = [1, 8, 1], strides = [1, 1, 1]} : vector<5x8x1xf32> to vector<1x8x1xf32>
    %915 = vector.shape_cast %914 : vector<1x8x1xf32> to vector<8x1xf32>
    %916 = vector.extract_strided_slice %913 {offsets = [1, 0, 0], sizes = [1, 8, 1], strides = [1, 1, 1]} : vector<5x8x1xf32> to vector<1x8x1xf32>
    %917 = vector.shape_cast %916 : vector<1x8x1xf32> to vector<8x1xf32>
    %918 = vector.extract_strided_slice %913 {offsets = [2, 0, 0], sizes = [1, 8, 1], strides = [1, 1, 1]} : vector<5x8x1xf32> to vector<1x8x1xf32>
    %919 = vector.shape_cast %918 : vector<1x8x1xf32> to vector<8x1xf32>
    %920 = vector.extract_strided_slice %913 {offsets = [3, 0, 0], sizes = [1, 8, 1], strides = [1, 1, 1]} : vector<5x8x1xf32> to vector<1x8x1xf32>
    %921 = vector.shape_cast %920 : vector<1x8x1xf32> to vector<8x1xf32>
    %922 = vector.extract_strided_slice %913 {offsets = [4, 0, 0], sizes = [1, 8, 1], strides = [1, 1, 1]} : vector<5x8x1xf32> to vector<1x8x1xf32>
    %923 = vector.shape_cast %922 : vector<1x8x1xf32> to vector<8x1xf32>
    %924 = vector.broadcast %915 : vector<8x1xf32> to vector<8x16xf32>
    %925 = arith.maximumf %78, %924 : vector<8x16xf32>
    %926 = vector.broadcast %917 : vector<8x1xf32> to vector<8x16xf32>
    %927 = arith.maximumf %86, %926 : vector<8x16xf32>
    %928 = vector.broadcast %919 : vector<8x1xf32> to vector<8x16xf32>
    %929 = arith.minimumf %96, %928 : vector<8x16xf32>
    %930 = vector.broadcast %921 : vector<8x1xf32> to vector<8x16xf32>
    %931 = arith.minimumf %106, %930 : vector<8x16xf32>
    %932 = arith.subf %929, %925 : vector<8x16xf32>
    %cst_231 = arith.constant 1.000000e+00 : f32
    %933 = vector.broadcast %cst_231 : f32 to vector<8x16xf32>
    %934 = arith.addf %932, %933 : vector<8x16xf32>
    %cst_232 = arith.constant 0.000000e+00 : f32
    %935 = vector.broadcast %cst_232 : f32 to vector<8x16xf32>
    %936 = arith.maximumf %934, %935 : vector<8x16xf32>
    %937 = arith.subf %931, %927 : vector<8x16xf32>
    %cst_233 = arith.constant 1.000000e+00 : f32
    %938 = vector.broadcast %cst_233 : f32 to vector<8x16xf32>
    %939 = arith.addf %937, %938 : vector<8x16xf32>
    %cst_234 = arith.constant 0.000000e+00 : f32
    %940 = vector.broadcast %cst_234 : f32 to vector<8x16xf32>
    %941 = arith.maximumf %939, %940 : vector<8x16xf32>
    %942 = arith.mulf %936, %941 : vector<8x16xf32>
    %943 = vector.broadcast %923 : vector<8x1xf32> to vector<8x16xf32>
    %944 = arith.addf %125, %943 : vector<8x16xf32>
    %945 = arith.subf %944, %942 : vector<8x16xf32>
    %cst_235 = arith.constant 5.000000e-01 : f32
    %946 = vector.broadcast %cst_235 : f32 to vector<8x16xf32>
    %947 = arith.mulf %946, %945 : vector<8x16xf32>
    %948 = arith.cmpf ogt, %942, %947 : vector<8x16xf32>
    %cst_236 = arith.constant 0.000000e+00 : f32
    %949 = vector.broadcast %cst_236 : f32 to vector<8x16xf32>
    %950 = arith.cmpf ogt, %945, %949 : vector<8x16xf32>
    %951 = arith.andi %948, %950 : vector<8x16xi1>
    %952 = arith.ori %951, %906 : vector<8x16xi1>
    %cst_237 = arith.constant 0.000000e+00 : f32
    %953 = vector.broadcast %cst_237 : f32 to vector<8x16xf32>
    %954 = arith.select %952, %953, %892 : vector<8x16xi1>, vector<8x16xf32>
    %cst_238 = arith.constant 1.000000e+00 : f32
    %955 = vector.broadcast %cst_238 : f32 to vector<8x16xf32>
    %956 = arith.select %906, %955, %894 : vector<8x16xi1>, vector<8x16xf32>
    %c13_i32 = arith.constant 13 : i32
    %cst_239 = arith.constant 0.000000e+00 : f32
    %957 = vector.broadcast %cst_239 : f32 to vector<8x16xf32>
    %958 = arith.cmpf ogt, %954, %957 : vector<8x16xf32>
    %c-1_i32_240 = arith.constant -1 : i32
    %959 = vector.broadcast %c-1_i32_240 : i32 to vector<8x16xi32>
    %960 = arith.select %958, %141, %959 : vector<8x16xi1>, vector<8x16xi32>
    %cst_241 = arith.constant dense<-2147483648> : vector<8xi32>
    %961 = vector.multi_reduction <maxsi>, %960, %cst_241 [1] : vector<8x16xi32> to vector<8xi32>
    %962 = vector.shape_cast %961 : vector<8xi32> to vector<8x1xi32>
    %c0_i32_242 = arith.constant 0 : i32
    %963 = vector.broadcast %c0_i32_242 : i32 to vector<8x1xi32>
    %964 = arith.cmpi sge, %962, %963 : vector<8x1xi32>
    %965 = vector.broadcast %962 : vector<8x1xi32> to vector<8x16xi32>
    %966 = arith.cmpi eq, %960, %965 : vector<8x16xi32>
    %967 = vector.broadcast %964 : vector<8x1xi1> to vector<8x16xi1>
    %968 = arith.andi %966, %967 : vector<8x16xi1>
    %969 = vector.shape_cast %968 : vector<8x16xi1> to vector<1x8x16xi1>
    %cst_243 = arith.constant 0.000000e+00 : f32
    %970 = vector.shape_cast %969 : vector<1x8x16xi1> to vector<1x8x16xi1>
    %971 = vector.broadcast %970 : vector<1x8x16xi1> to vector<5x8x16xi1>
    %972 = vector.broadcast %cst_243 : f32 to vector<5x8x16xf32>
    %973 = arith.select %971, %131, %972 : vector<5x8x16xi1>, vector<5x8x16xf32>
    %cst_244 = arith.constant dense<0.000000e+00> : vector<5x8xf32>
    %974 = vector.multi_reduction <add>, %973, %cst_244 [2] : vector<5x8x16xf32> to vector<5x8xf32>
    %975 = vector.shape_cast %974 : vector<5x8xf32> to vector<5x8x1xf32>
    %976 = vector.extract_strided_slice %975 {offsets = [0, 0, 0], sizes = [1, 8, 1], strides = [1, 1, 1]} : vector<5x8x1xf32> to vector<1x8x1xf32>
    %977 = vector.shape_cast %976 : vector<1x8x1xf32> to vector<8x1xf32>
    %978 = vector.extract_strided_slice %975 {offsets = [1, 0, 0], sizes = [1, 8, 1], strides = [1, 1, 1]} : vector<5x8x1xf32> to vector<1x8x1xf32>
    %979 = vector.shape_cast %978 : vector<1x8x1xf32> to vector<8x1xf32>
    %980 = vector.extract_strided_slice %975 {offsets = [2, 0, 0], sizes = [1, 8, 1], strides = [1, 1, 1]} : vector<5x8x1xf32> to vector<1x8x1xf32>
    %981 = vector.shape_cast %980 : vector<1x8x1xf32> to vector<8x1xf32>
    %982 = vector.extract_strided_slice %975 {offsets = [3, 0, 0], sizes = [1, 8, 1], strides = [1, 1, 1]} : vector<5x8x1xf32> to vector<1x8x1xf32>
    %983 = vector.shape_cast %982 : vector<1x8x1xf32> to vector<8x1xf32>
    %984 = vector.extract_strided_slice %975 {offsets = [4, 0, 0], sizes = [1, 8, 1], strides = [1, 1, 1]} : vector<5x8x1xf32> to vector<1x8x1xf32>
    %985 = vector.shape_cast %984 : vector<1x8x1xf32> to vector<8x1xf32>
    %986 = vector.broadcast %977 : vector<8x1xf32> to vector<8x16xf32>
    %987 = arith.maximumf %78, %986 : vector<8x16xf32>
    %988 = vector.broadcast %979 : vector<8x1xf32> to vector<8x16xf32>
    %989 = arith.maximumf %86, %988 : vector<8x16xf32>
    %990 = vector.broadcast %981 : vector<8x1xf32> to vector<8x16xf32>
    %991 = arith.minimumf %96, %990 : vector<8x16xf32>
    %992 = vector.broadcast %983 : vector<8x1xf32> to vector<8x16xf32>
    %993 = arith.minimumf %106, %992 : vector<8x16xf32>
    %994 = arith.subf %991, %987 : vector<8x16xf32>
    %cst_245 = arith.constant 1.000000e+00 : f32
    %995 = vector.broadcast %cst_245 : f32 to vector<8x16xf32>
    %996 = arith.addf %994, %995 : vector<8x16xf32>
    %cst_246 = arith.constant 0.000000e+00 : f32
    %997 = vector.broadcast %cst_246 : f32 to vector<8x16xf32>
    %998 = arith.maximumf %996, %997 : vector<8x16xf32>
    %999 = arith.subf %993, %989 : vector<8x16xf32>
    %cst_247 = arith.constant 1.000000e+00 : f32
    %1000 = vector.broadcast %cst_247 : f32 to vector<8x16xf32>
    %1001 = arith.addf %999, %1000 : vector<8x16xf32>
    %cst_248 = arith.constant 0.000000e+00 : f32
    %1002 = vector.broadcast %cst_248 : f32 to vector<8x16xf32>
    %1003 = arith.maximumf %1001, %1002 : vector<8x16xf32>
    %1004 = arith.mulf %998, %1003 : vector<8x16xf32>
    %1005 = vector.broadcast %985 : vector<8x1xf32> to vector<8x16xf32>
    %1006 = arith.addf %125, %1005 : vector<8x16xf32>
    %1007 = arith.subf %1006, %1004 : vector<8x16xf32>
    %cst_249 = arith.constant 5.000000e-01 : f32
    %1008 = vector.broadcast %cst_249 : f32 to vector<8x16xf32>
    %1009 = arith.mulf %1008, %1007 : vector<8x16xf32>
    %1010 = arith.cmpf ogt, %1004, %1009 : vector<8x16xf32>
    %cst_250 = arith.constant 0.000000e+00 : f32
    %1011 = vector.broadcast %cst_250 : f32 to vector<8x16xf32>
    %1012 = arith.cmpf ogt, %1007, %1011 : vector<8x16xf32>
    %1013 = arith.andi %1010, %1012 : vector<8x16xi1>
    %1014 = arith.ori %1013, %968 : vector<8x16xi1>
    %cst_251 = arith.constant 0.000000e+00 : f32
    %1015 = vector.broadcast %cst_251 : f32 to vector<8x16xf32>
    %1016 = arith.select %1014, %1015, %954 : vector<8x16xi1>, vector<8x16xf32>
    %cst_252 = arith.constant 1.000000e+00 : f32
    %1017 = vector.broadcast %cst_252 : f32 to vector<8x16xf32>
    %1018 = arith.select %968, %1017, %956 : vector<8x16xi1>, vector<8x16xf32>
    %c14_i32 = arith.constant 14 : i32
    %cst_253 = arith.constant 0.000000e+00 : f32
    %1019 = vector.broadcast %cst_253 : f32 to vector<8x16xf32>
    %1020 = arith.cmpf ogt, %1016, %1019 : vector<8x16xf32>
    %c-1_i32_254 = arith.constant -1 : i32
    %1021 = vector.broadcast %c-1_i32_254 : i32 to vector<8x16xi32>
    %1022 = arith.select %1020, %141, %1021 : vector<8x16xi1>, vector<8x16xi32>
    %cst_255 = arith.constant dense<-2147483648> : vector<8xi32>
    %1023 = vector.multi_reduction <maxsi>, %1022, %cst_255 [1] : vector<8x16xi32> to vector<8xi32>
    %1024 = vector.shape_cast %1023 : vector<8xi32> to vector<8x1xi32>
    %c0_i32_256 = arith.constant 0 : i32
    %1025 = vector.broadcast %c0_i32_256 : i32 to vector<8x1xi32>
    %1026 = arith.cmpi sge, %1024, %1025 : vector<8x1xi32>
    %1027 = vector.broadcast %1024 : vector<8x1xi32> to vector<8x16xi32>
    %1028 = arith.cmpi eq, %1022, %1027 : vector<8x16xi32>
    %1029 = vector.broadcast %1026 : vector<8x1xi1> to vector<8x16xi1>
    %1030 = arith.andi %1028, %1029 : vector<8x16xi1>
    %1031 = vector.shape_cast %1030 : vector<8x16xi1> to vector<1x8x16xi1>
    %cst_257 = arith.constant 0.000000e+00 : f32
    %1032 = vector.shape_cast %1031 : vector<1x8x16xi1> to vector<1x8x16xi1>
    %1033 = vector.broadcast %1032 : vector<1x8x16xi1> to vector<5x8x16xi1>
    %1034 = vector.broadcast %cst_257 : f32 to vector<5x8x16xf32>
    %1035 = arith.select %1033, %131, %1034 : vector<5x8x16xi1>, vector<5x8x16xf32>
    %cst_258 = arith.constant dense<0.000000e+00> : vector<5x8xf32>
    %1036 = vector.multi_reduction <add>, %1035, %cst_258 [2] : vector<5x8x16xf32> to vector<5x8xf32>
    %1037 = vector.shape_cast %1036 : vector<5x8xf32> to vector<5x8x1xf32>
    %1038 = vector.extract_strided_slice %1037 {offsets = [0, 0, 0], sizes = [1, 8, 1], strides = [1, 1, 1]} : vector<5x8x1xf32> to vector<1x8x1xf32>
    %1039 = vector.shape_cast %1038 : vector<1x8x1xf32> to vector<8x1xf32>
    %1040 = vector.extract_strided_slice %1037 {offsets = [1, 0, 0], sizes = [1, 8, 1], strides = [1, 1, 1]} : vector<5x8x1xf32> to vector<1x8x1xf32>
    %1041 = vector.shape_cast %1040 : vector<1x8x1xf32> to vector<8x1xf32>
    %1042 = vector.extract_strided_slice %1037 {offsets = [2, 0, 0], sizes = [1, 8, 1], strides = [1, 1, 1]} : vector<5x8x1xf32> to vector<1x8x1xf32>
    %1043 = vector.shape_cast %1042 : vector<1x8x1xf32> to vector<8x1xf32>
    %1044 = vector.extract_strided_slice %1037 {offsets = [3, 0, 0], sizes = [1, 8, 1], strides = [1, 1, 1]} : vector<5x8x1xf32> to vector<1x8x1xf32>
    %1045 = vector.shape_cast %1044 : vector<1x8x1xf32> to vector<8x1xf32>
    %1046 = vector.extract_strided_slice %1037 {offsets = [4, 0, 0], sizes = [1, 8, 1], strides = [1, 1, 1]} : vector<5x8x1xf32> to vector<1x8x1xf32>
    %1047 = vector.shape_cast %1046 : vector<1x8x1xf32> to vector<8x1xf32>
    %1048 = vector.broadcast %1039 : vector<8x1xf32> to vector<8x16xf32>
    %1049 = arith.maximumf %78, %1048 : vector<8x16xf32>
    %1050 = vector.broadcast %1041 : vector<8x1xf32> to vector<8x16xf32>
    %1051 = arith.maximumf %86, %1050 : vector<8x16xf32>
    %1052 = vector.broadcast %1043 : vector<8x1xf32> to vector<8x16xf32>
    %1053 = arith.minimumf %96, %1052 : vector<8x16xf32>
    %1054 = vector.broadcast %1045 : vector<8x1xf32> to vector<8x16xf32>
    %1055 = arith.minimumf %106, %1054 : vector<8x16xf32>
    %1056 = arith.subf %1053, %1049 : vector<8x16xf32>
    %cst_259 = arith.constant 1.000000e+00 : f32
    %1057 = vector.broadcast %cst_259 : f32 to vector<8x16xf32>
    %1058 = arith.addf %1056, %1057 : vector<8x16xf32>
    %cst_260 = arith.constant 0.000000e+00 : f32
    %1059 = vector.broadcast %cst_260 : f32 to vector<8x16xf32>
    %1060 = arith.maximumf %1058, %1059 : vector<8x16xf32>
    %1061 = arith.subf %1055, %1051 : vector<8x16xf32>
    %cst_261 = arith.constant 1.000000e+00 : f32
    %1062 = vector.broadcast %cst_261 : f32 to vector<8x16xf32>
    %1063 = arith.addf %1061, %1062 : vector<8x16xf32>
    %cst_262 = arith.constant 0.000000e+00 : f32
    %1064 = vector.broadcast %cst_262 : f32 to vector<8x16xf32>
    %1065 = arith.maximumf %1063, %1064 : vector<8x16xf32>
    %1066 = arith.mulf %1060, %1065 : vector<8x16xf32>
    %1067 = vector.broadcast %1047 : vector<8x1xf32> to vector<8x16xf32>
    %1068 = arith.addf %125, %1067 : vector<8x16xf32>
    %1069 = arith.subf %1068, %1066 : vector<8x16xf32>
    %cst_263 = arith.constant 5.000000e-01 : f32
    %1070 = vector.broadcast %cst_263 : f32 to vector<8x16xf32>
    %1071 = arith.mulf %1070, %1069 : vector<8x16xf32>
    %1072 = arith.cmpf ogt, %1066, %1071 : vector<8x16xf32>
    %cst_264 = arith.constant 0.000000e+00 : f32
    %1073 = vector.broadcast %cst_264 : f32 to vector<8x16xf32>
    %1074 = arith.cmpf ogt, %1069, %1073 : vector<8x16xf32>
    %1075 = arith.andi %1072, %1074 : vector<8x16xi1>
    %1076 = arith.ori %1075, %1030 : vector<8x16xi1>
    %cst_265 = arith.constant 0.000000e+00 : f32
    %1077 = vector.broadcast %cst_265 : f32 to vector<8x16xf32>
    %1078 = arith.select %1076, %1077, %1016 : vector<8x16xi1>, vector<8x16xf32>
    %cst_266 = arith.constant 1.000000e+00 : f32
    %1079 = vector.broadcast %cst_266 : f32 to vector<8x16xf32>
    %1080 = arith.select %1030, %1079, %1018 : vector<8x16xi1>, vector<8x16xf32>
    %c15_i32_267 = arith.constant 15 : i32
    %cst_268 = arith.constant 0.000000e+00 : f32
    %1081 = vector.broadcast %cst_268 : f32 to vector<8x16xf32>
    %1082 = arith.cmpf ogt, %1078, %1081 : vector<8x16xf32>
    %c-1_i32_269 = arith.constant -1 : i32
    %1083 = vector.broadcast %c-1_i32_269 : i32 to vector<8x16xi32>
    %1084 = arith.select %1082, %141, %1083 : vector<8x16xi1>, vector<8x16xi32>
    %cst_270 = arith.constant dense<-2147483648> : vector<8xi32>
    %1085 = vector.multi_reduction <maxsi>, %1084, %cst_270 [1] : vector<8x16xi32> to vector<8xi32>
    %1086 = vector.shape_cast %1085 : vector<8xi32> to vector<8x1xi32>
    %c0_i32_271 = arith.constant 0 : i32
    %1087 = vector.broadcast %c0_i32_271 : i32 to vector<8x1xi32>
    %1088 = arith.cmpi sge, %1086, %1087 : vector<8x1xi32>
    %1089 = vector.broadcast %1086 : vector<8x1xi32> to vector<8x16xi32>
    %1090 = arith.cmpi eq, %1084, %1089 : vector<8x16xi32>
    %1091 = vector.broadcast %1088 : vector<8x1xi1> to vector<8x16xi1>
    %1092 = arith.andi %1090, %1091 : vector<8x16xi1>
    %1093 = vector.shape_cast %1092 : vector<8x16xi1> to vector<1x8x16xi1>
    %cst_272 = arith.constant 0.000000e+00 : f32
    %1094 = vector.shape_cast %1093 : vector<1x8x16xi1> to vector<1x8x16xi1>
    %1095 = vector.broadcast %1094 : vector<1x8x16xi1> to vector<5x8x16xi1>
    %1096 = vector.broadcast %cst_272 : f32 to vector<5x8x16xf32>
    %1097 = arith.select %1095, %131, %1096 : vector<5x8x16xi1>, vector<5x8x16xf32>
    %cst_273 = arith.constant dense<0.000000e+00> : vector<5x8xf32>
    %1098 = vector.multi_reduction <add>, %1097, %cst_273 [2] : vector<5x8x16xf32> to vector<5x8xf32>
    %1099 = vector.shape_cast %1098 : vector<5x8xf32> to vector<5x8x1xf32>
    %1100 = vector.extract_strided_slice %1099 {offsets = [0, 0, 0], sizes = [1, 8, 1], strides = [1, 1, 1]} : vector<5x8x1xf32> to vector<1x8x1xf32>
    %1101 = vector.shape_cast %1100 : vector<1x8x1xf32> to vector<8x1xf32>
    %1102 = vector.extract_strided_slice %1099 {offsets = [1, 0, 0], sizes = [1, 8, 1], strides = [1, 1, 1]} : vector<5x8x1xf32> to vector<1x8x1xf32>
    %1103 = vector.shape_cast %1102 : vector<1x8x1xf32> to vector<8x1xf32>
    %1104 = vector.extract_strided_slice %1099 {offsets = [2, 0, 0], sizes = [1, 8, 1], strides = [1, 1, 1]} : vector<5x8x1xf32> to vector<1x8x1xf32>
    %1105 = vector.shape_cast %1104 : vector<1x8x1xf32> to vector<8x1xf32>
    %1106 = vector.extract_strided_slice %1099 {offsets = [3, 0, 0], sizes = [1, 8, 1], strides = [1, 1, 1]} : vector<5x8x1xf32> to vector<1x8x1xf32>
    %1107 = vector.shape_cast %1106 : vector<1x8x1xf32> to vector<8x1xf32>
    %1108 = vector.extract_strided_slice %1099 {offsets = [4, 0, 0], sizes = [1, 8, 1], strides = [1, 1, 1]} : vector<5x8x1xf32> to vector<1x8x1xf32>
    %1109 = vector.shape_cast %1108 : vector<1x8x1xf32> to vector<8x1xf32>
    %1110 = vector.broadcast %1101 : vector<8x1xf32> to vector<8x16xf32>
    %1111 = arith.maximumf %78, %1110 : vector<8x16xf32>
    %1112 = vector.broadcast %1103 : vector<8x1xf32> to vector<8x16xf32>
    %1113 = arith.maximumf %86, %1112 : vector<8x16xf32>
    %1114 = vector.broadcast %1105 : vector<8x1xf32> to vector<8x16xf32>
    %1115 = arith.minimumf %96, %1114 : vector<8x16xf32>
    %1116 = vector.broadcast %1107 : vector<8x1xf32> to vector<8x16xf32>
    %1117 = arith.minimumf %106, %1116 : vector<8x16xf32>
    %1118 = arith.subf %1115, %1111 : vector<8x16xf32>
    %cst_274 = arith.constant 1.000000e+00 : f32
    %1119 = vector.broadcast %cst_274 : f32 to vector<8x16xf32>
    %1120 = arith.addf %1118, %1119 : vector<8x16xf32>
    %cst_275 = arith.constant 0.000000e+00 : f32
    %1121 = vector.broadcast %cst_275 : f32 to vector<8x16xf32>
    %1122 = arith.maximumf %1120, %1121 : vector<8x16xf32>
    %1123 = arith.subf %1117, %1113 : vector<8x16xf32>
    %cst_276 = arith.constant 1.000000e+00 : f32
    %1124 = vector.broadcast %cst_276 : f32 to vector<8x16xf32>
    %1125 = arith.addf %1123, %1124 : vector<8x16xf32>
    %cst_277 = arith.constant 0.000000e+00 : f32
    %1126 = vector.broadcast %cst_277 : f32 to vector<8x16xf32>
    %1127 = arith.maximumf %1125, %1126 : vector<8x16xf32>
    %1128 = arith.mulf %1122, %1127 : vector<8x16xf32>
    %1129 = vector.broadcast %1109 : vector<8x1xf32> to vector<8x16xf32>
    %1130 = arith.addf %125, %1129 : vector<8x16xf32>
    %1131 = arith.subf %1130, %1128 : vector<8x16xf32>
    %cst_278 = arith.constant 5.000000e-01 : f32
    %1132 = vector.broadcast %cst_278 : f32 to vector<8x16xf32>
    %1133 = arith.mulf %1132, %1131 : vector<8x16xf32>
    %1134 = arith.cmpf ogt, %1128, %1133 : vector<8x16xf32>
    %cst_279 = arith.constant 0.000000e+00 : f32
    %1135 = vector.broadcast %cst_279 : f32 to vector<8x16xf32>
    %1136 = arith.cmpf ogt, %1131, %1135 : vector<8x16xf32>
    %1137 = arith.andi %1134, %1136 : vector<8x16xi1>
    %1138 = arith.ori %1137, %1092 : vector<8x16xi1>
    %cst_280 = arith.constant 0.000000e+00 : f32
    %1139 = vector.broadcast %cst_280 : f32 to vector<8x16xf32>
    %1140 = arith.select %1138, %1139, %1078 : vector<8x16xi1>, vector<8x16xf32>
    %cst_281 = arith.constant 1.000000e+00 : f32
    %1141 = vector.broadcast %cst_281 : f32 to vector<8x16xf32>
    %1142 = arith.select %1092, %1141, %1080 : vector<8x16xi1>, vector<8x16xf32>
    %1143 = arith.mulf %16, %1142 : vector<8x16xf32>
    %cst_282 = arith.constant dense<0xFF800000> : vector<16xf32>
    %1144 = vector.multi_reduction <maximumf>, %1143, %cst_282 [0] : vector<8x16xf32> to vector<16xf32>
    %1145 = vector.shape_cast %1144 : vector<16xf32> to vector<1x16xf32>
    %1146 = vector.broadcast %1145 : vector<1x16xf32> to vector<8x16xf32>
    %1147 = arith.cmpf oeq, %1143, %1146 : vector<8x16xf32>
    %c8_i32_283 = arith.constant 8 : i32
    %1148 = vector.broadcast %c8_i32_283 : i32 to vector<8x16xi32>
    %1149 = arith.select %1147, %133, %1148 : vector<8x16xi1>, vector<8x16xi32>
    %cst_284 = arith.constant dense<2147483647> : vector<16xi32>
    %1150 = vector.multi_reduction <minsi>, %1149, %cst_284 [0] : vector<8x16xi32> to vector<16xi32>
    %1151 = vector.shape_cast %1150 : vector<16xi32> to vector<1x16xi32>
    %1152 = vector.broadcast %1151 : vector<1x16xi32> to vector<8x16xi32>
    %1153 = arith.cmpi eq, %133, %1152 : vector<8x16xi32>
    %1154 = vector.shape_cast %1153 : vector<8x16xi1> to vector<1x8x16xi1>
    %1155 = vector.extract_strided_slice %131 {offsets = [0, 0, 0], sizes = [4, 8, 16], strides = [1, 1, 1]} : vector<5x8x16xf32> to vector<4x8x16xf32>
    %cst_285 = arith.constant 0.000000e+00 : f32
    %1156 = vector.shape_cast %1154 : vector<1x8x16xi1> to vector<1x8x16xi1>
    %1157 = vector.broadcast %1156 : vector<1x8x16xi1> to vector<4x8x16xi1>
    %1158 = vector.broadcast %cst_285 : f32 to vector<4x8x16xf32>
    %1159 = arith.select %1157, %1155, %1158 : vector<4x8x16xi1>, vector<4x8x16xf32>
    %cst_286 = arith.constant dense<0.000000e+00> : vector<4x16xf32>
    %1160 = vector.multi_reduction <add>, %1159, %cst_286 [1] : vector<4x8x16xf32> to vector<4x16xf32>
    %1161 = arith.sitofp %1151 : vector<1x16xi32> to vector<1x16xf32>
    %cst_287 = arith.constant 0.000000e+00 : f32
    %1162 = vector.broadcast %cst_287 : f32 to vector<2x16xf32>
    %1163 = tpu.concatenate %1145, %1161, %1160, %1162 in 0 : vector<1x16xf32>, vector<1x16xf32>, vector<4x16xf32>, vector<2x16xf32> -> vector<8x16xf32>
    %c0_288 = arith.constant 0 : index
    %c0_289 = arith.constant 0 : index
    %c0_290 = arith.constant 0 : index
    %1164 = vector.load %arg6[%c0_288, %c0_289, %c0_290] : memref<1x8x16xf32, #tpu.memory_space<vmem>>, vector<1x8x16xf32>
    %1165 = vector.shape_cast %1164 : vector<1x8x16xf32> to vector<8x16xf32>
    %1166 = vector.shape_cast %1163 : vector<8x16xf32> to vector<1x8x16xf32>
    tpu.vector_store %arg6[%c0_288, %c0_289, %c0_290], %1166 {strides = array<i32>} : memref<1x8x16xf32, #tpu.memory_space<vmem>>, vector<1x8x16xf32>,
    return
  }
  func.func @transform_0(%arg0: i32, %arg1: memref<2x2xi32, #tpu.memory_space<smem>>) -> (i32, i32, i32) {
    %c0_i32 = arith.constant 0 : i32
    %c0_i32_0 = arith.constant 0 : i32
    %c0_i32_1 = arith.constant 0 : i32
    return %arg0, %c0_i32, %c0_i32_0 : i32, i32, i32
  }
  func.func @transform_1(%arg0: i32, %arg1: memref<2x2xi32, #tpu.memory_space<smem>>) -> (i32, i32, i32, i32) {
    %c0_i32 = arith.constant 0 : i32
    %c0_i32_0 = arith.constant 0 : i32
    %c0_i32_1 = arith.constant 0 : i32
    %c0_i32_2 = arith.constant 0 : i32
    return %arg0, %c0_i32, %c0_i32_0, %c0_i32_1 : i32, i32, i32, i32
  }
  func.func @transform_2(%arg0: i32, %arg1: memref<2x2xi32, #tpu.memory_space<smem>>) -> (i32, i32, i32) {
    %c0_i32 = arith.constant 0 : i32
    %c0_i32_0 = arith.constant 0 : i32
    %c0_i32_1 = arith.constant 0 : i32
    return %arg0, %c0_i32, %c0_i32_0 : i32, i32, i32
  }
  func.func @transform_3(%arg0: i32, %arg1: memref<2x2xi32, #tpu.memory_space<smem>>) -> (i32, i32, i32, i32) {
    %c0_i32 = arith.constant 0 : i32
    %c0_i32_0 = arith.constant 0 : i32
    %c0_i32_1 = arith.constant 0 : i32
    %c0_i32_2 = arith.constant 0 : i32
    return %arg0, %c0_i32, %c0_i32_0, %c0_i32_1 : i32, i32, i32, i32
  }
  func.func @transform_4(%arg0: i32, %arg1: memref<2x2xi32, #tpu.memory_space<smem>>) -> (i32, i32, i32) {
    %c0_i32 = arith.constant 0 : i32
    %c0_i32_0 = arith.constant 0 : i32
    %c0_i32_1 = arith.constant 0 : i32
    return %arg0, %c0_i32, %c0_i32_0 : i32, i32, i32
  }
}

</mosaic_0001>

<llo_original>
// kernel: _postprocess_batch.1
$region0: #{_postprocess_batch.1}
  #allocation0 [shape = 'u32[]', space=smem, size = 0x4, offset = 0x4, fixed_abs, tag = 'smem constant byte address 0x4 - core index']
  #allocation1 [shape = 'u32[144,128]{1,0:T(1,128)}', space=vmem, size = 0x12000, scoped, tag = 'internal scratch']
  #allocation2 [shape = 's32[1]{0}', space=sflag, size = 0x4, scoped, tag = 'scoped memory for _postprocess_batch.1']
  #allocation3 [shape = 'u8[1024]{0}', space=smem, size = 0x400, scoped, tag = 'prefetched SMEM operand 0']
  %s0 = inlined_call_operand.vmem [shape: s32[2,2], index: 0, kind: input, shape index: {}]
  %s1 = inlined_call_operand.vmem [shape: f32[2,8,16], index: 1, kind: input, shape index: {}]
  %s2 = inlined_call_operand.vmem [shape: f32[2,4,8,16], index: 2, kind: input, shape index: {}]
  %s3 = inlined_call_operand.vmem [shape: f32[2,4,16], index: 3, kind: input, shape index: {}]
  %s4 = inlined_call_operand.hbm [shape: f32[2,4,8,16], index: 4, kind: output, shape index: {0}]
  %s5 = inlined_call_operand.hbm [shape: f32[2,8,16], index: 5, kind: output, shape index: {1}]
  %6 = xla_tuple %s4, %s5
  %s7 = sld [smem:[#allocation0]]
  $region53: #{_postprocess_batch.1} parent=0
    _
  %s9 = ssub.s32 1, %s7
  %s10 = scalar_select 0, %s9, %s7
  %s11 = sshll.u32 %s0, 4
  %s12 = int_to_ptr.vmem [resolvable:$true] %s11
  %14 = dma.vmem_to_smem %s12, 32, [#allocation3], [#allocation2]
  %15 = dma.done [#allocation2], 32
  %16 = sfence
  $region1: #{_postprocess_batch.1} parent=0
    #allocation4 [shape = 'u8[32768]{0}', space=vmem, size = 0x8000, scoped, tag = 'output window, operand 0']
    #allocation5 [shape = 's32[2]{0}', space=sflag, size = 0x8, scoped, tag = 'scoped memory for _postprocess_batch.1']
    #allocation6 [shape = 'u8[8192]{0}', space=vmem, size = 0x2000, scoped, tag = 'output window, operand 1']
    #allocation7 [shape = 's32[2]{0}', space=sflag, size = 0x8, scoped, tag = 'scoped memory for _postprocess_batch.1']
    %17 = vsyncpa [#allocation5], 0
    %s18 = scalar_lea.sflag [#allocation5], 1
    %19 = vsyncpa %s18, 0
    %20 = vsyncpa [#allocation7], 0
    %s21 = scalar_lea.sflag [#allocation7], 1
    %22 = vsyncpa %s21, 0
    loop: start=0, step=1, limit=4
    $region2: #{_postprocess_batch.1} parent=1 // loop_pre_header
      _
    $region3: #{_postprocess_batch.1} parent=1 // loop_header
      %s24 = sphi 0, %s28
      %p25 = scmp.ge.s32.totalorder %s24, 4
      %s34 = sphi 0, %s36
      %s37 = sphi 0, %s34
      %s38 = sphi 0, %s37
      %s54 = sphi 0, %s38
      %s60 = sphi 0, %s62
      %s63 = sphi 0, %s60
      %s64 = sphi 0, %s63
      %s80 = sphi 0, %s64
      %s86 = sphi 0, %s88
      %s89 = sphi 0, %s86
      %s90 = sphi 0, %s89
      %s106 = sphi 0, %s90
      %s112 = sphi 0, %s114
      %s115 = sphi 0, %s112
      %s116 = sphi 0, %s115
      %s132 = sphi 0, %s116
      %s138 = sphi 0, %s140
      %s141 = sphi 0, %s138
      %s142 = sphi 0, %s141
      %s158 = sphi 0, %s142
    $region4: #{_postprocess_batch.1} parent=1 // loop_header_branch
      %27 = sbr.rel (%p25) target = $region8
    $region5: #{_postprocess_batch.1} parent=1 // loop_body
      %s29 = ssub.s32 %s24, 1
      %s30 = ssub.s32 %s24, 2
      %s31 = sadd.s32 %s24, 1
      %s32 = ssub.s32 %s24, %s31
      %p33 = scmp.eq.s32.totalorder %s32, 0
      %s35 = sadd.s32 %s34, 1
      %s36 = scalar_select %p33, %s34, %s35
      %p39 = pneg %p33
      %p40 = scmp.eq.s32.totalorder %s24, 1
      %p41 = por %p39, %p40
      %p42 = scmp.ne.s32.totalorder %s34, %s37
      %p43 = scmp.eq.s32.totalorder %s24, 0
      %p44 = por %p42, %p43
      %p45 = scmp.ne.s32.totalorder %s34, %s37
      %p46 = scmp.eq.s32.totalorder %s29, 1
      %p47 = por %p45, %p46
      %p48 = scmp.ne.s32.totalorder %s37, %s38
      %p49 = scmp.eq.s32.totalorder %s29, 0
      %p50 = por %p48, %p49
      %p51 = scmp.ne.s32.totalorder %s37, %s38
      %p52 = scmp.eq.s32.totalorder %s30, 1
      %p53 = por %p51, %p52
      %p55 = scmp.ne.s32.totalorder %s38, %s54
      %p56 = scmp.eq.s32.totalorder %s30, 0
      %p57 = por %p55, %p56
      %s58 = ssub.s32 %s24, %s31
      %p59 = scmp.eq.s32.totalorder %s58, 0
      %s61 = sadd.s32 %s60, 1
      %s62 = scalar_select %p59, %s60, %s61
      %p65 = pneg %p59
      %p66 = scmp.eq.s32.totalorder %s24, 1
      %p67 = por %p65, %p66
      %p68 = scmp.ne.s32.totalorder %s60, %s63
      %p69 = scmp.eq.s32.totalorder %s24, 0
      %p70 = por %p68, %p69
      %p71 = scmp.ne.s32.totalorder %s60, %s63
      %p72 = scmp.eq.s32.totalorder %s29, 1
      %p73 = por %p71, %p72
      %p74 = scmp.ne.s32.totalorder %s63, %s64
      %p75 = scmp.eq.s32.totalorder %s29, 0
      %p76 = por %p74, %p75
      %p77 = scmp.ne.s32.totalorder %s63, %s64
      %p78 = scmp.eq.s32.totalorder %s30, 1
      %p79 = por %p77, %p78
      %p81 = scmp.ne.s32.totalorder %s64, %s80
      %p82 = scmp.eq.s32.totalorder %s30, 0
      %p83 = por %p81, %p82
      %s84 = ssub.s32 %s24, %s31
      %p85 = scmp.eq.s32.totalorder %s84, 0
      %s87 = sadd.s32 %s86, 1
      %s88 = scalar_select %p85, %s86, %s87
      %p91 = pneg %p85
      %p92 = scmp.eq.s32.totalorder %s24, 1
      %p93 = por %p91, %p92
      %p94 = scmp.ne.s32.totalorder %s86, %s89
      %p95 = scmp.eq.s32.totalorder %s24, 0
      %p96 = por %p94, %p95
      %p97 = scmp.ne.s32.totalorder %s86, %s89
      %p98 = scmp.eq.s32.totalorder %s29, 1
      %p99 = por %p97, %p98
      %p100 = scmp.ne.s32.totalorder %s89, %s90
      %p101 = scmp.eq.s32.totalorder %s29, 0
      %p102 = por %p100, %p101
      %p103 = scmp.ne.s32.totalorder %s89, %s90
      %p104 = scmp.eq.s32.totalorder %s30, 1
      %p105 = por %p103, %p104
      %p107 = scmp.ne.s32.totalorder %s90, %s106
      %p108 = scmp.eq.s32.totalorder %s30, 0
      %p109 = por %p107, %p108
      %s110 = ssub.s32 %s24, %s31
      %p111 = scmp.eq.s32.totalorder %s110, 0
      %s113 = sadd.s32 %s112, 1
      %s114 = scalar_select %p111, %s112, %s113
      %p117 = pneg %p111
      %p118 = scmp.eq.s32.totalorder %s24, 1
      %p119 = por %p117, %p118
      %p120 = scmp.ne.s32.totalorder %s112, %s115
      %p121 = scmp.eq.s32.totalorder %s24, 0
      %p122 = por %p120, %p121
      %p123 = scmp.ne.s32.totalorder %s112, %s115
      %p124 = scmp.eq.s32.totalorder %s29, 1
      %p125 = por %p123, %p124
      %p126 = scmp.ne.s32.totalorder %s115, %s116
      %p127 = scmp.eq.s32.totalorder %s29, 0
      %p128 = por %p126, %p127
      %p129 = scmp.ne.s32.totalorder %s115, %s116
      %p130 = scmp.eq.s32.totalorder %s30, 1
      %p131 = por %p129, %p130
      %p133 = scmp.ne.s32.totalorder %s116, %s132
      %p134 = scmp.eq.s32.totalorder %s30, 0
      %p135 = por %p133, %p134
      %s136 = ssub.s32 %s24, %s31
      %p137 = scmp.eq.s32.totalorder %s136, 0
      %s139 = sadd.s32 %s138, 1
      %s140 = scalar_select %p137, %s138, %s139
      %p143 = pneg %p137
      %p144 = scmp.eq.s32.totalorder %s24, 1
      %p145 = por %p143, %p144
      %p146 = scmp.ne.s32.totalorder %s138, %s141
      %p147 = scmp.eq.s32.totalorder %s24, 0
      %p148 = por %p146, %p147
      %p149 = scmp.ne.s32.totalorder %s138, %s141
      %p150 = scmp.eq.s32.totalorder %s29, 1
      %p151 = por %p149, %p150
      %p152 = scmp.ne.s32.totalorder %s141, %s142
      %p153 = scmp.eq.s32.totalorder %s29, 0
      %p154 = por %p152, %p153
      %p155 = scmp.ne.s32.totalorder %s141, %s142
      %p156 = scmp.eq.s32.totalorder %s30, 1
      %p157 = por %p155, %p156
      %p159 = scmp.ne.s32.totalorder %s142, %s158
      %p160 = scmp.eq.s32.totalorder %s30, 0
      %p161 = por %p159, %p160
      %p162 = scmp.le.s32.totalorder 1, %s24
      %p163 = scmp.lt.s32.totalorder %s24, 3
      %p164 = pnand %p162, %p163
      %p165 = pneg %p164
      // Predicated region
      $region9: #{_postprocess_batch.1} parent=5 // pred_check
        _
      $region10: #{_postprocess_batch.1} parent=5 // pred_check_branch
        %167 = sbr.rel (%p164) target = $region12
      $region11: #{_postprocess_batch.1} parent=5 // pred_region
        %s168 = ssub.s32 %s24, 1
      $region12: #{_postprocess_batch.1} parent=5 // pred_fallthru
        _
      %p169 = scmp.lt.s32.totalorder %s24, 2
      // Predicated region
      $region13: #{_postprocess_batch.1} parent=5 // pred_check
        %p170 = pneg %p169
      $region14: #{_postprocess_batch.1} parent=5 // pred_check_branch
        %172 = sbr.rel (%p170) target = $region16
      $region15: #{_postprocess_batch.1} parent=5 // pred_region
        // Predicated region
        $region17: #{_postprocess_batch.1} parent=15 // pred_check
          %p173 = pneg %p44
        $region18: #{_postprocess_batch.1} parent=15 // pred_check_branch
          %175 = sbr.rel (%p173) target = $region20
        $region19: #{_postprocess_batch.1} parent=15 // pred_region
          %p176 = scmp.lt.s32.totalorder %s24, 1
          %s177 = scalar_select %p176, %s24, 1
          %s178 = smul.addr %s177, 8
          %s179 = scalar_lea.vmem %s1, %s178
        $region20: #{_postprocess_batch.1} parent=15 // pred_fallthru
          _
        // Predicated region
        $region21: #{_postprocess_batch.1} parent=15 // pred_check
          %p180 = pneg %p70
        $region22: #{_postprocess_batch.1} parent=15 // pred_check_branch
          %182 = sbr.rel (%p180) target = $region24
        $region23: #{_postprocess_batch.1} parent=15 // pred_region
          %p183 = scmp.lt.s32.totalorder %s24, 1
          %s184 = scalar_select %p183, %s24, 1
          %s185 = smul.addr %s184, 4
          %s186 = smul.addr %s185, 8
          %s187 = scalar_lea.vmem %s2, %s186
        $region24: #{_postprocess_batch.1} parent=15 // pred_fallthru
          _
        // Predicated region
        $region25: #{_postprocess_batch.1} parent=15 // pred_check
          %p188 = pneg %p96
        $region26: #{_postprocess_batch.1} parent=15 // pred_check_branch
          %190 = sbr.rel (%p188) target = $region28
        $region27: #{_postprocess_batch.1} parent=15 // pred_region
          %p191 = scmp.lt.s32.totalorder %s24, 1
          %s192 = scalar_select %p191, %s24, 1
          %s193 = smul.addr %s192, 4
          %s194 = scalar_lea.vmem %s3, %s193
        $region28: #{_postprocess_batch.1} parent=15 // pred_fallthru
          _
      $region16: #{_postprocess_batch.1} parent=5 // pred_fallthru
        _
      %p195 = scmp.le.s32.totalorder 1, %s24
      %p196 = scmp.lt.s32.totalorder %s24, 3
      %p197 = pnand %p195, %p196
      %p198 = pneg %p197
      // Predicated region
      $region29: #{_postprocess_batch.1} parent=5 // pred_check
        _
      $region30: #{_postprocess_batch.1} parent=5 // pred_check_branch
        %200 = sbr.rel (%p197) target = $region32
      $region31: #{_postprocess_batch.1} parent=5 // pred_region
        %s201 = ssub.s32 %s24, 1
        %p202 = scmp.lt.s32.totalorder %s29, 1
        %s203 = scalar_select %p202, %s29, 1
        %s204 = smul.addr %s203, 8
        %s205 = scalar_lea.vmem %s1, %s204
        %p206 = pneg %p50
        %p207 = pneg %p47
        %p208 = scmp.lt.s32.totalorder %s29, 1
        %s209 = scalar_select %p208, %s29, 1
        %s210 = smul.addr %s209, 4
        %s211 = smul.addr %s210, 8
        %s212 = scalar_lea.vmem %s2, %s211
        %p213 = pneg %p76
        %p214 = pneg %p73
        %p215 = scmp.lt.s32.totalorder %s29, 1
        %s216 = scalar_select %p215, %s29, 1
        %s217 = smul.addr %s216, 4
        %s218 = scalar_lea.vmem %s3, %s217
        %p219 = pneg %p102
        %p220 = pneg %p99
        %p221 = pneg %p128
        %p222 = pneg %p125
        %s223 = sand.u32 %s115, 1
        %s224 = scalar_lea.sflag [#allocation5], %s223
        %s225 = sand.u32 %s115, 1
        %s226 = smul.addr %s225, 32
        %s227 = scalar_lea.vmem [#allocation4], %s226
        %p228 = pneg %p154
        %p229 = pneg %p151
        %s230 = sand.u32 %s141, 1
        %s231 = scalar_lea.sflag [#allocation7], %s230
        %s232 = sand.u32 %s141, 1
        %s233 = smul.addr %s232, 8
        %s234 = scalar_lea.vmem [#allocation6], %s233
        %p235 = scmp.lt.s32.totalorder %s29, 1
        %s236 = scalar_select %p235, %s29, 1
        %s237 = smul.addr %s236, 8
        %s238 = scalar_lea.vmem %s1, %s237
        %p239 = scmp.lt.s32.totalorder %s29, 1
        %s240 = scalar_select %p239, %s29, 1
        %s241 = smul.addr %s240, 4
        %s242 = smul.addr %s241, 8
        %s243 = scalar_lea.vmem %s2, %s242
        %p244 = scmp.lt.s32.totalorder %s29, 1
        %s245 = scalar_select %p244, %s29, 1
        %s246 = smul.addr %s245, 4
        %s247 = scalar_lea.vmem %s3, %s246
        %s248 = smul.u32 %s29, 128
        %s249 = sld [smem:[#allocation3 + %s248]]
        %s250 = scvt.s32.f32 %s249
        %s251 = sadd.s32 %s248, 1
        %s252 = sld [smem:[#allocation3 + %s251]]
        %s253 = scvt.s32.f32 %s252
        %v254 = vld [vmem:[%s238] sm:$0xff]
        %vm255 = vcmask 130048
        %v256 = vsel %vm255, %v254, -inf
        %v257 = vrot.slane %v256, 4
        %v258 = vmax.f32 %v256, %v257
        %v259 = vrot.slane %v258, 2
        %v260 = vmax.f32 %v258, %v259
        %v261 = vrot.slane %v260, 1
        %v262 = vmax.f32 %v260, %v261
        %v263 = vsub.f32 %v254, %v262
        %v264 = vmul.f32 %v263, 1.442695
        %v265 = vpow.pop %v264
        %v266 = vsel %vm255, %v265, 0.0
        %v267 = vrot.slane %v266, 4
        %v268 = vadd.f32 %v266, %v267
        %v269 = vrot.slane %v268, 2
        %v270 = vadd.f32 %v268, %v269
        %v271 = vrot.slane %v270, 1
        %v272 = vadd.f32 %v270, %v271
        %v273 = vrcp.pop %v272
        %v274 = vmul.f32 %v265, %v273
        %v275 = vld [vmem:[%s247] sm:$0xf]
        %v277 = vrot.slane %v275, 6
        %v279 = vsub.f32 %v275, %v277
        %v280 = vadd.f32 %v279, 1.0
        %v281 = vmul.f32 %v280, 0.5
        %v283 = vrot.slane %v281, 2
        %v285 = vadd.f32 %v275, %v283
        %v286 = vld [vmem:[%s243] sm:$0xff]
        %v287 = vld [vmem:[%s243 + $0x8] sm:$0xff]
        %v288 = vld [vmem:[%s243 + $0x10] sm:$0xff]
        %v289 = vld [vmem:[%s243 + $0x18] sm:$0xff]
        %v290 = vmul.f32 %v286, 0.1
        %v291 = vmul.f32 %v287, 0.1
        %v292 = vmul.f32 %v288, 0.2
        %v293 = vmin.f32 %v292, 4.1351666
        %v294 = vmul.f32 %v289, 0.2
        %v295 = vmin.f32 %v294, 4.1351666
        %v296 = vlaneseq
        %v297 = vshrl.u32 %v296, 7
        %v298 = vsub.s32 2, %v297
        %v299 = vrot.slane %v280, %v298
        %v300 = vmul.f32 %v290, %v299
        %v301 = vlaneseq
        %v302 = vshrl.u32 %v301, 7
        %v303 = vsub.s32 0, %v302
        %v304 = vrot.slane %v285, %v303
        %v305 = vadd.f32 %v300, %v304
        %v306 = vlaneseq
        %v307 = vshrl.u32 %v306, 7
        %v308 = vsub.s32 3, %v307
        %v309 = vrot.slane %v280, %v308
        %v310 = vmul.f32 %v291, %v309
        %v311 = vlaneseq
        %v312 = vshrl.u32 %v311, 7
        %v313 = vsub.s32 1, %v312
        %v314 = vrot.slane %v285, %v313
        %v315 = vadd.f32 %v310, %v314
        %v316 = vmul.f32 %v293, 1.442695
        %v317 = vpow.pop %v316
        %v318 = vmul.f32 %v317, %v299
        %v319 = vmul.f32 %v295, 1.442695
        %v320 = vpow.pop %v319
        %v321 = vmul.f32 %v320, %v309
        %v322 = vmul.f32 %v318, 0.5
        %v323 = vsub.f32 %v305, %v322
        %s324 = ssub.f32 %s250, 1.0
        %v325 = vmax.f32 %v323, 0.0
        %v326 = vstv %s324
        %v327 = vmin.f32 %v326, %v325
        %v328 = vmul.f32 %v321, 0.5
        %v329 = vsub.f32 %v315, %v328
        %s330 = ssub.f32 %s253, 1.0
        %v331 = vmax.f32 %v329, 0.0
        %v332 = vstv %s330
        %v333 = vmin.f32 %v332, %v331
        %v334 = vadd.f32 %v305, %v322
        %v335 = vsub.f32 %v334, 1.0
        %v336 = vmax.f32 %v335, 0.0
        %v337 = vmin.f32 %v326, %v336
        %v338 = vadd.f32 %v315, %v328
        %v339 = vsub.f32 %v338, 1.0
        %v340 = vmax.f32 %v339, 0.0
        %v341 = vmin.f32 %v332, %v340
        %342 = vst.msk [vmem:[%s227] sm:$0xff] %vm255, %v327
        %s343 = scalar_lea.vmem %s227, 8 [#allocation4]
        %344 = vst.msk [vmem:[%s343] sm:$0xff] %vm255, %v333
        %s345 = scalar_lea.vmem %s227, 16 [#allocation4]
        %346 = vst.msk [vmem:[%s345] sm:$0xff] %vm255, %v337
        %s347 = scalar_lea.vmem %s227, 24 [#allocation4]
        %348 = vst.msk [vmem:[%s347] sm:$0xff] %vm255, %v341
        %v349 = vsub.f32 %v337, %v327
        %v350 = vadd.f32 %v349, 1.0
        %v351 = vsub.f32 %v341, %v333
        %v352 = vadd.f32 %v351, 1.0
        %v353 = vmul.f32 %v350, %v352
        %v354 = vlaneseq
        %v355 = vand.u32 %v354, 127
        %v356 = vlaneseq
        %v357 = vshrl.u32 %v356, 7
        %v359 = vshra.s32 %v274, 4
        %v360 = vshll.u32 %v359, 4
        %v361 = vsub.s32 15, %v355
        %v362 = vor.u32 %v360, %v361
        %vm363 = vcmp.gt.s32.totalorder %v357, 0
        %vm364 = vcmp.gt.f32.partialorder %v274, 0.05
        %vm365 = vmand %vm363, %vm364
        %v366 = vsel %vm365, 1.0, 0.0
        %vm367 = vcmp.gt.f32.partialorder %v366, 0.0
        %v368 = vsel %vm367, %v362, 4294967295
        %v369 = vsel %vm255, %v368, 2147483648
        %v370 = vand.u32 %v369, 65535
        %v371 = vshra.s32 %v369, 16
        %v372 = vcvt.s32.f32 %v370
        %v373 = vcvt.s32.f32 %v371
        %374 = vmax.xlane.f32.xlu0 %v373
        %v375 = vpop.xlane.xlu0 %374
        %vm376 = vcmp.eq.f32.partialorder %v373, %v375
        %v377 = vsel %vm376, %v372, -inf
        %378 = vmax.xlane.f32.xlu0 %v377
        %v379 = vpop.xlane.xlu0 %378
        %v380 = vcvt.f32.s32 %v379
        %v381 = vcvt.f32.s32 %v375
        %v382 = vshll.u32 %v381, 16
        %v383 = vadd.s32 %v382, %v380
        %vm384 = vcmp.ge.s32.totalorder %v383, 0
        %vm385 = vcmp.eq.s32.totalorder %v368, %v383
        %v386 = vsel %vm384, 1, 0
        %vm387 = vcmp.eq.s32.totalorder %v386, 1
        %vm388 = vmand %vm385, %vm387
        %v389 = vsel %vm388, 1, 0
        %vm390 = vcmp.eq.s32.totalorder %v389, 1
        %v391 = vsel %vm390, %v327, 0.0
        %v392 = vsel %vm390, %v333, 0.0
        %v393 = vsel %vm390, %v337, 0.0
        %v394 = vsel %vm390, %v341, 0.0
        %v395 = vsel %vm390, %v353, 0.0
        %v396 = vsel %vm255, %v391, 0.0
        %397 = vadd.xlane.f32.xlu0 %v396
        %v398 = vpop.xlane.xlu0 %397
        %v399 = vsel %vm255, %v392, 0.0
        %400 = vadd.xlane.f32.xlu0 %v399
        %v401 = vpop.xlane.xlu0 %400
        %v402 = vsel %vm255, %v393, 0.0
        %403 = vadd.xlane.f32.xlu0 %v402
        %v404 = vpop.xlane.xlu0 %403
        %v405 = vsel %vm255, %v394, 0.0
        %406 = vadd.xlane.f32.xlu0 %v405
        %v407 = vpop.xlane.xlu0 %406
        %v408 = vsel %vm255, %v395, 0.0
        %409 = vadd.xlane.f32.xlu0 %v408
        %v410 = vpop.xlane.xlu0 %409
        %v411 = vmax.f32 %v327, %v398
        %v412 = vmax.f32 %v333, %v401
        %v413 = vmin.f32 %v337, %v404
        %v414 = vmin.f32 %v341, %v407
        %v415 = vsub.f32 %v413, %v411
        %v416 = vadd.f32 %v415, 1.0
        %v417 = vmax.f32 %v416, 0.0
        %v418 = vsub.f32 %v414, %v412
        %v419 = vadd.f32 %v418, 1.0
        %v420 = vmax.f32 %v419, 0.0
        %v421 = vmul.f32 %v417, %v420
        %v422 = vadd.f32 %v353, %v410
        %v423 = vsub.f32 %v422, %v421
        %v424 = vmul.f32 %v423, 0.5
        %vm425 = vcmp.gt.f32.partialorder %v421, %v424
        %vm426 = vcmp.gt.f32.partialorder %v423, 0.0
        %vm427 = vmand %vm425, %vm426
        %vm428 = vmor %vm427, %vm388
        %v429 = vsel %vm428, 0.0, %v366
        %v430 = vsel %vm388, 1.0, 0.0
        %vm431 = vcmp.gt.f32.partialorder %v429, 0.0
        %v432 = vsel %vm431, %v362, 4294967295
        %v433 = vsel %vm255, %v432, 2147483648
        %v434 = vand.u32 %v433, 65535
        %v435 = vshra.s32 %v433, 16
        %v436 = vcvt.s32.f32 %v434
        %v437 = vcvt.s32.f32 %v435
        %438 = vmax.xlane.f32.xlu0 %v437
        %v439 = vpop.xlane.xlu0 %438
        %vm440 = vcmp.eq.f32.partialorder %v437, %v439
        %v441 = vsel %vm440, %v436, -inf
        %442 = vmax.xlane.f32.xlu0 %v441
        %v443 = vpop.xlane.xlu0 %442
        %v444 = vcvt.f32.s32 %v443
        %v445 = vcvt.f32.s32 %v439
        %v446 = vshll.u32 %v445, 16
        %v447 = vadd.s32 %v446, %v444
        %vm448 = vcmp.ge.s32.totalorder %v447, 0
        %vm449 = vcmp.eq.s32.totalorder %v432, %v447
        %v450 = vsel %vm448, 1, 0
        %vm451 = vcmp.eq.s32.totalorder %v450, 1
        %vm452 = vmand %vm449, %vm451
        %v453 = vsel %vm452, 1, 0
        %vm454 = vcmp.eq.s32.totalorder %v453, 1
        %v455 = vsel %vm454, %v327, 0.0
        %v456 = vsel %vm454, %v333, 0.0
        %v457 = vsel %vm454, %v337, 0.0
        %v458 = vsel %vm454, %v341, 0.0
        %v459 = vsel %vm454, %v353, 0.0
        %v460 = vsel %vm255, %v455, 0.0
        %461 = vadd.xlane.f32.xlu0 %v460
        %v462 = vpop.xlane.xlu0 %461
        %v463 = vsel %vm255, %v456, 0.0
        %464 = vadd.xlane.f32.xlu0 %v463
        %v465 = vpop.xlane.xlu0 %464
        %v466 = vsel %vm255, %v457, 0.0
        %467 = vadd.xlane.f32.xlu0 %v466
        %v468 = vpop.xlane.xlu0 %467
        %v469 = vsel %vm255, %v458, 0.0
        %470 = vadd.xlane.f32.xlu0 %v469
        %v471 = vpop.xlane.xlu0 %470
        %v472 = vsel %vm255, %v459, 0.0
        %473 = vadd.xlane.f32.xlu0 %v472
        %v474 = vpop.xlane.xlu0 %473
        %v475 = vmax.f32 %v327, %v462
        %v476 = vmax.f32 %v333, %v465
        %v477 = vmin.f32 %v337, %v468
        %v478 = vmin.f32 %v341, %v471
        %v479 = vsub.f32 %v477, %v475
        %v480 = vadd.f32 %v479, 1.0
        %v481 = vmax.f32 %v480, 0.0
        %v482 = vsub.f32 %v478, %v476
        %v483 = vadd.f32 %v482, 1.0
        %v484 = vmax.f32 %v483, 0.0
        %v485 = vmul.f32 %v481, %v484
        %v486 = vadd.f32 %v353, %v474
        %v487 = vsub.f32 %v486, %v485
        %v488 = vmul.f32 %v487, 0.5
        %vm489 = vcmp.gt.f32.partialorder %v485, %v488
        %vm490 = vcmp.gt.f32.partialorder %v487, 0.0
        %vm491 = vmand %vm489, %vm490
        %vm492 = vmor %vm491, %vm452
        %v493 = vsel %vm492, 0.0, %v429
        %v494 = vsel %vm452, 1.0, %v430
        %vm495 = vcmp.gt.f32.partialorder %v493, 0.0
        %v496 = vsel %vm495, %v362, 4294967295
        %v497 = vsel %vm255, %v496, 2147483648
        %v498 = vand.u32 %v497, 65535
        %v499 = vshra.s32 %v497, 16
        %v500 = vcvt.s32.f32 %v498
        %v501 = vcvt.s32.f32 %v499
        %502 = vmax.xlane.f32.xlu0 %v501
        %v503 = vpop.xlane.xlu0 %502
        %vm504 = vcmp.eq.f32.partialorder %v501, %v503
        %v505 = vsel %vm504, %v500, -inf
        %506 = vmax.xlane.f32.xlu0 %v505
        %v507 = vpop.xlane.xlu0 %506
        %v508 = vcvt.f32.s32 %v507
        %v509 = vcvt.f32.s32 %v503
        %v510 = vshll.u32 %v509, 16
        %v511 = vadd.s32 %v510, %v508
        %vm512 = vcmp.ge.s32.totalorder %v511, 0
        %vm513 = vcmp.eq.s32.totalorder %v496, %v511
        %v514 = vsel %vm512, 1, 0
        %vm515 = vcmp.eq.s32.totalorder %v514, 1
        %vm516 = vmand %vm513, %vm515
        %v517 = vsel %vm516, 1, 0
        %vm518 = vcmp.eq.s32.totalorder %v517, 1
        %v519 = vsel %vm518, %v327, 0.0
        %v520 = vsel %vm518, %v333, 0.0
        %v521 = vsel %vm518, %v337, 0.0
        %v522 = vsel %vm518, %v341, 0.0
        %v523 = vsel %vm518, %v353, 0.0
        %v524 = vsel %vm255, %v519, 0.0
        %525 = vadd.xlane.f32.xlu0 %v524
        %v526 = vpop.xlane.xlu0 %525
        %v527 = vsel %vm255, %v520, 0.0
        %528 = vadd.xlane.f32.xlu0 %v527
        %v529 = vpop.xlane.xlu0 %528
        %v530 = vsel %vm255, %v521, 0.0
        %531 = vadd.xlane.f32.xlu0 %v530
        %v532 = vpop.xlane.xlu0 %531
        %v533 = vsel %vm255, %v522, 0.0
        %534 = vadd.xlane.f32.xlu0 %v533
        %v535 = vpop.xlane.xlu0 %534
        %v536 = vsel %vm255, %v523, 0.0
        %537 = vadd.xlane.f32.xlu0 %v536
        %v538 = vpop.xlane.xlu0 %537
        %v539 = vmax.f32 %v327, %v526
        %v540 = vmax.f32 %v333, %v529
        %v541 = vmin.f32 %v337, %v532
        %v542 = vmin.f32 %v341, %v535
        %v543 = vsub.f32 %v541, %v539
        %v544 = vadd.f32 %v543, 1.0
        %v545 = vmax.f32 %v544, 0.0
        %v546 = vsub.f32 %v542, %v540
        %v547 = vadd.f32 %v546, 1.0
        %v548 = vmax.f32 %v547, 0.0
        %v549 = vmul.f32 %v545, %v548
        %v550 = vadd.f32 %v353, %v538
        %v551 = vsub.f32 %v550, %v549
        %v552 = vmul.f32 %v551, 0.5
        %vm553 = vcmp.gt.f32.partialorder %v549, %v552
        %vm554 = vcmp.gt.f32.partialorder %v551, 0.0
        %vm555 = vmand %vm553, %vm554
        %vm556 = vmor %vm555, %vm516
        %v557 = vsel %vm556, 0.0, %v493
        %v558 = vsel %vm516, 1.0, %v494
        %vm559 = vcmp.gt.f32.partialorder %v557, 0.0
        %v560 = vsel %vm559, %v362, 4294967295
        %v561 = vsel %vm255, %v560, 2147483648
        %v562 = vand.u32 %v561, 65535
        %v563 = vshra.s32 %v561, 16
        %v564 = vcvt.s32.f32 %v562
        %v565 = vcvt.s32.f32 %v563
        %566 = vmax.xlane.f32.xlu0 %v565
        %v567 = vpop.xlane.xlu0 %566
        %vm568 = vcmp.eq.f32.partialorder %v565, %v567
        %v569 = vsel %vm568, %v564, -inf
        %570 = vmax.xlane.f32.xlu0 %v569
        %v571 = vpop.xlane.xlu0 %570
        %v572 = vcvt.f32.s32 %v571
        %v573 = vcvt.f32.s32 %v567
        %v574 = vshll.u32 %v573, 16
        %v575 = vadd.s32 %v574, %v572
        %vm576 = vcmp.ge.s32.totalorder %v575, 0
        %vm577 = vcmp.eq.s32.totalorder %v560, %v575
        %v578 = vsel %vm576, 1, 0
        %vm579 = vcmp.eq.s32.totalorder %v578, 1
        %vm580 = vmand %vm577, %vm579
        %v581 = vsel %vm580, 1, 0
        %vm582 = vcmp.eq.s32.totalorder %v581, 1
        %v583 = vsel %vm582, %v327, 0.0
        %v584 = vsel %vm582, %v333, 0.0
        %v585 = vsel %vm582, %v337, 0.0
        %v586 = vsel %vm582, %v341, 0.0
        %v587 = vsel %vm582, %v353, 0.0
        %v588 = vsel %vm255, %v583, 0.0
        %589 = vadd.xlane.f32.xlu0 %v588
        %v590 = vpop.xlane.xlu0 %589
        %v591 = vsel %vm255, %v584, 0.0
        %592 = vadd.xlane.f32.xlu0 %v591
        %v593 = vpop.xlane.xlu0 %592
        %v594 = vsel %vm255, %v585, 0.0
        %595 = vadd.xlane.f32.xlu0 %v594
        %v596 = vpop.xlane.xlu0 %595
        %v597 = vsel %vm255, %v586, 0.0
        %598 = vadd.xlane.f32.xlu0 %v597
        %v599 = vpop.xlane.xlu0 %598
        %v600 = vsel %vm255, %v587, 0.0
        %601 = vadd.xlane.f32.xlu0 %v600
        %v602 = vpop.xlane.xlu0 %601
        %v603 = vmax.f32 %v327, %v590
        %v604 = vmax.f32 %v333, %v593
        %v605 = vmin.f32 %v337, %v596
        %v606 = vmin.f32 %v341, %v599
        %v607 = vsub.f32 %v605, %v603
        %v608 = vadd.f32 %v607, 1.0
        %v609 = vmax.f32 %v608, 0.0
        %v610 = vsub.f32 %v606, %v604
        %v611 = vadd.f32 %v610, 1.0
        %v612 = vmax.f32 %v611, 0.0
        %v613 = vmul.f32 %v609, %v612
        %v614 = vadd.f32 %v353, %v602
        %v615 = vsub.f32 %v614, %v613
        %v616 = vmul.f32 %v615, 0.5
        %vm617 = vcmp.gt.f32.partialorder %v613, %v616
        %vm618 = vcmp.gt.f32.partialorder %v615, 0.0
        %vm619 = vmand %vm617, %vm618
        %vm620 = vmor %vm619, %vm580
        %v621 = vsel %vm620, 0.0, %v557
        %v622 = vsel %vm580, 1.0, %v558
        %vm623 = vcmp.gt.f32.partialorder %v621, 0.0
        %v624 = vsel %vm623, %v362, 4294967295
        %v625 = vsel %vm255, %v624, 2147483648
        %v626 = vand.u32 %v625, 65535
        %v627 = vshra.s32 %v625, 16
        %v628 = vcvt.s32.f32 %v626
        %v629 = vcvt.s32.f32 %v627
        %630 = vmax.xlane.f32.xlu0 %v629
        %v631 = vpop.xlane.xlu0 %630
        %vm632 = vcmp.eq.f32.partialorder %v629, %v631
        %v633 = vsel %vm632, %v628, -inf
        %634 = vmax.xlane.f32.xlu0 %v633
        %v635 = vpop.xlane.xlu0 %634
        %v636 = vcvt.f32.s32 %v635
        %v637 = vcvt.f32.s32 %v631
        %v638 = vshll.u32 %v637, 16
        %v639 = vadd.s32 %v638, %v636
        %vm640 = vcmp.ge.s32.totalorder %v639, 0
        %vm641 = vcmp.eq.s32.totalorder %v624, %v639
        %v642 = vsel %vm640, 1, 0
        %vm643 = vcmp.eq.s32.totalorder %v642, 1
        %vm644 = vmand %vm641, %vm643
        %v645 = vsel %vm644, 1, 0
        %vm646 = vcmp.eq.s32.totalorder %v645, 1
        %v647 = vsel %vm646, %v327, 0.0
        %v648 = vsel %vm646, %v333, 0.0
        %v649 = vsel %vm646, %v337, 0.0
        %v650 = vsel %vm646, %v341, 0.0
        %v651 = vsel %vm646, %v353, 0.0
        %v652 = vsel %vm255, %v647, 0.0
        %653 = vadd.xlane.f32.xlu0 %v652
        %v654 = vpop.xlane.xlu0 %653
        %v655 = vsel %vm255, %v648, 0.0
        %656 = vadd.xlane.f32.xlu0 %v655
        %v657 = vpop.xlane.xlu0 %656
        %v658 = vsel %vm255, %v649, 0.0
        %659 = vadd.xlane.f32.xlu0 %v658
        %v660 = vpop.xlane.xlu0 %659
        %v661 = vsel %vm255, %v650, 0.0
        %662 = vadd.xlane.f32.xlu0 %v661
        %v663 = vpop.xlane.xlu0 %662
        %v664 = vsel %vm255, %v651, 0.0
        %665 = vadd.xlane.f32.xlu0 %v664
        %v666 = vpop.xlane.xlu0 %665
        %v667 = vmax.f32 %v327, %v654
        %v668 = vmax.f32 %v333, %v657
        %v669 = vmin.f32 %v337, %v660
        %v670 = vmin.f32 %v341, %v663
        %v671 = vsub.f32 %v669, %v667
        %v672 = vadd.f32 %v671, 1.0
        %v673 = vmax.f32 %v672, 0.0
        %v674 = vsub.f32 %v670, %v668
        %v675 = vadd.f32 %v674, 1.0
        %v676 = vmax.f32 %v675, 0.0
        %v677 = vmul.f32 %v673, %v676
        %v678 = vadd.f32 %v353, %v666
        %v679 = vsub.f32 %v678, %v677
        %v680 = vmul.f32 %v679, 0.5
        %vm681 = vcmp.gt.f32.partialorder %v677, %v680
        %vm682 = vcmp.gt.f32.partialorder %v679, 0.0
        %vm683 = vmand %vm681, %vm682
        %vm684 = vmor %vm683, %vm644
        %v685 = vsel %vm684, 0.0, %v621
        %v686 = vsel %vm644, 1.0, %v622
        %vm687 = vcmp.gt.f32.partialorder %v685, 0.0
        %v688 = vsel %vm687, %v362, 4294967295
        %v689 = vsel %vm255, %v688, 2147483648
        %v690 = vand.u32 %v689, 65535
        %v691 = vshra.s32 %v689, 16
        %v692 = vcvt.s32.f32 %v690
        %v693 = vcvt.s32.f32 %v691
        %694 = vmax.xlane.f32.xlu0 %v693
        %v695 = vpop.xlane.xlu0 %694
        %vm696 = vcmp.eq.f32.partialorder %v693, %v695
        %v697 = vsel %vm696, %v692, -inf
        %698 = vmax.xlane.f32.xlu0 %v697
        %v699 = vpop.xlane.xlu0 %698
        %v700 = vcvt.f32.s32 %v699
        %v701 = vcvt.f32.s32 %v695
        %v702 = vshll.u32 %v701, 16
        %v703 = vadd.s32 %v702, %v700
        %vm704 = vcmp.ge.s32.totalorder %v703, 0
        %vm705 = vcmp.eq.s32.totalorder %v688, %v703
        %v706 = vsel %vm704, 1, 0
        %vm707 = vcmp.eq.s32.totalorder %v706, 1
        %vm708 = vmand %vm705, %vm707
        %v709 = vsel %vm708, 1, 0
        %vm710 = vcmp.eq.s32.totalorder %v709, 1
        %v711 = vsel %vm710, %v327, 0.0
        %v712 = vsel %vm710, %v333, 0.0
        %v713 = vsel %vm710, %v337, 0.0
        %v714 = vsel %vm710, %v341, 0.0
        %v715 = vsel %vm710, %v353, 0.0
        %v716 = vsel %vm255, %v711, 0.0
        %717 = vadd.xlane.f32.xlu0 %v716
        %v718 = vpop.xlane.xlu0 %717
        %v719 = vsel %vm255, %v712, 0.0
        %720 = vadd.xlane.f32.xlu0 %v719
        %v721 = vpop.xlane.xlu0 %720
        %v722 = vsel %vm255, %v713, 0.0
        %723 = vadd.xlane.f32.xlu0 %v722
        %v724 = vpop.xlane.xlu0 %723
        %v725 = vsel %vm255, %v714, 0.0
        %726 = vadd.xlane.f32.xlu0 %v725
        %v727 = vpop.xlane.xlu0 %726
        %v728 = vsel %vm255, %v715, 0.0
        %729 = vadd.xlane.f32.xlu0 %v728
        %v730 = vpop.xlane.xlu0 %729
        %v731 = vmax.f32 %v327, %v718
        %v732 = vmax.f32 %v333, %v721
        %v733 = vmin.f32 %v337, %v724
        %v734 = vmin.f32 %v341, %v727
        %v735 = vsub.f32 %v733, %v731
        %v736 = vadd.f32 %v735, 1.0
        %v737 = vmax.f32 %v736, 0.0
        %v738 = vsub.f32 %v734, %v732
        %v739 = vadd.f32 %v738, 1.0
        %v740 = vmax.f32 %v739, 0.0
        %v741 = vmul.f32 %v737, %v740
        %v742 = vadd.f32 %v353, %v730
        %v743 = vsub.f32 %v742, %v741
        %v744 = vmul.f32 %v743, 0.5
        %vm745 = vcmp.gt.f32.partialorder %v741, %v744
        %vm746 = vcmp.gt.f32.partialorder %v743, 0.0
        %vm747 = vmand %vm745, %vm746
        %vm748 = vmor %vm747, %vm708
        %v749 = vsel %vm748, 0.0, %v685
        %v750 = vsel %vm708, 1.0, %v686
        %vm751 = vcmp.gt.f32.partialorder %v749, 0.0
        %v752 = vsel %vm751, %v362, 4294967295
        %v753 = vsel %vm255, %v752, 2147483648
        %v754 = vand.u32 %v753, 65535
        %v755 = vshra.s32 %v753, 16
        %v756 = vcvt.s32.f32 %v754
        %v757 = vcvt.s32.f32 %v755
        %758 = vmax.xlane.f32.xlu0 %v757
        %v759 = vpop.xlane.xlu0 %758
        %vm760 = vcmp.eq.f32.partialorder %v757, %v759
        %v761 = vsel %vm760, %v756, -inf
        %762 = vmax.xlane.f32.xlu0 %v761
        %v763 = vpop.xlane.xlu0 %762
        %v764 = vcvt.f32.s32 %v763
        %v765 = vcvt.f32.s32 %v759
        %v766 = vshll.u32 %v765, 16
        %v767 = vadd.s32 %v766, %v764
        %vm768 = vcmp.ge.s32.totalorder %v767, 0
        %vm769 = vcmp.eq.s32.totalorder %v752, %v767
        %v770 = vsel %vm768, 1, 0
        %vm771 = vcmp.eq.s32.totalorder %v770, 1
        %vm772 = vmand %vm769, %vm771
        %v773 = vsel %vm772, 1, 0
        %vm774 = vcmp.eq.s32.totalorder %v773, 1
        %v775 = vsel %vm774, %v327, 0.0
        %v776 = vsel %vm774, %v333, 0.0
        %v777 = vsel %vm774, %v337, 0.0
        %v778 = vsel %vm774, %v341, 0.0
        %v779 = vsel %vm774, %v353, 0.0
        %v780 = vsel %vm255, %v775, 0.0
        %781 = vadd.xlane.f32.xlu0 %v780
        %v782 = vpop.xlane.xlu0 %781
        %v783 = vsel %vm255, %v776, 0.0
        %784 = vadd.xlane.f32.xlu0 %v783
        %v785 = vpop.xlane.xlu0 %784
        %v786 = vsel %vm255, %v777, 0.0
        %787 = vadd.xlane.f32.xlu0 %v786
        %v788 = vpop.xlane.xlu0 %787
        %v789 = vsel %vm255, %v778, 0.0
        %790 = vadd.xlane.f32.xlu0 %v789
        %v791 = vpop.xlane.xlu0 %790
        %v792 = vsel %vm255, %v779, 0.0
        %793 = vadd.xlane.f32.xlu0 %v792
        %v794 = vpop.xlane.xlu0 %793
        %v795 = vmax.f32 %v327, %v782
        %v796 = vmax.f32 %v333, %v785
        %v797 = vmin.f32 %v337, %v788
        %v798 = vmin.f32 %v341, %v791
        %v799 = vsub.f32 %v797, %v795
        %v800 = vadd.f32 %v799, 1.0
        %v801 = vmax.f32 %v800, 0.0
        %v802 = vsub.f32 %v798, %v796
        %v803 = vadd.f32 %v802, 1.0
        %v804 = vmax.f32 %v803, 0.0
        %v805 = vmul.f32 %v801, %v804
        %v806 = vadd.f32 %v353, %v794
        %v807 = vsub.f32 %v806, %v805
        %v808 = vmul.f32 %v807, 0.5
        %vm809 = vcmp.gt.f32.partialorder %v805, %v808
        %vm810 = vcmp.gt.f32.partialorder %v807, 0.0
        %vm811 = vmand %vm809, %vm810
        %vm812 = vmor %vm811, %vm772
        %v813 = vsel %vm812, 0.0, %v749
        %v814 = vsel %vm772, 1.0, %v750
        %vm815 = vcmp.gt.f32.partialorder %v813, 0.0
        %v816 = vsel %vm815, %v362, 4294967295
        %v817 = vsel %vm255, %v816, 2147483648
        %v818 = vand.u32 %v817, 65535
        %v819 = vshra.s32 %v817, 16
        %v820 = vcvt.s32.f32 %v818
        %v821 = vcvt.s32.f32 %v819
        %822 = vmax.xlane.f32.xlu0 %v821
        %v823 = vpop.xlane.xlu0 %822
        %vm824 = vcmp.eq.f32.partialorder %v821, %v823
        %v825 = vsel %vm824, %v820, -inf
        %826 = vmax.xlane.f32.xlu0 %v825
        %v827 = vpop.xlane.xlu0 %826
        %v828 = vcvt.f32.s32 %v827
        %v829 = vcvt.f32.s32 %v823
        %v830 = vshll.u32 %v829, 16
        %v831 = vadd.s32 %v830, %v828
        %vm832 = vcmp.ge.s32.totalorder %v831, 0
        %vm833 = vcmp.eq.s32.totalorder %v816, %v831
        %v834 = vsel %vm832, 1, 0
        %vm835 = vcmp.eq.s32.totalorder %v834, 1
        %vm836 = vmand %vm833, %vm835
        %v837 = vsel %vm836, 1, 0
        %vm838 = vcmp.eq.s32.totalorder %v837, 1
        %v839 = vsel %vm838, %v327, 0.0
        %v840 = vsel %vm838, %v333, 0.0
        %v841 = vsel %vm838, %v337, 0.0
        %v842 = vsel %vm838, %v341, 0.0
        %v843 = vsel %vm838, %v353, 0.0
        %v844 = vsel %vm255, %v839, 0.0
        %845 = vadd.xlane.f32.xlu0 %v844
        %v846 = vpop.xlane.xlu0 %845
        %v847 = vsel %vm255, %v840, 0.0
        %848 = vadd.xlane.f32.xlu0 %v847
        %v849 = vpop.xlane.xlu0 %848
        %v850 = vsel %vm255, %v841, 0.0
        %851 = vadd.xlane.f32.xlu0 %v850
        %v852 = vpop.xlane.xlu0 %851
        %v853 = vsel %vm255, %v842, 0.0
        %854 = vadd.xlane.f32.xlu0 %v853
        %v855 = vpop.xlane.xlu0 %854
        %v856 = vsel %vm255, %v843, 0.0
        %857 = vadd.xlane.f32.xlu0 %v856
        %v858 = vpop.xlane.xlu0 %857
        %v859 = vmax.f32 %v327, %v846
        %v860 = vmax.f32 %v333, %v849
        %v861 = vmin.f32 %v337, %v852
        %v862 = vmin.f32 %v341, %v855
        %v863 = vsub.f32 %v861, %v859
        %v864 = vadd.f32 %v863, 1.0
        %v865 = vmax.f32 %v864, 0.0
        %v866 = vsub.f32 %v862, %v860
        %v867 = vadd.f32 %v866, 1.0
        %v868 = vmax.f32 %v867, 0.0
        %v869 = vmul.f32 %v865, %v868
        %v870 = vadd.f32 %v353, %v858
        %v871 = vsub.f32 %v870, %v869
        %v872 = vmul.f32 %v871, 0.5
        %vm873 = vcmp.gt.f32.partialorder %v869, %v872
        %vm874 = vcmp.gt.f32.partialorder %v871, 0.0
        %vm875 = vmand %vm873, %vm874
        %vm876 = vmor %vm875, %vm836
        %v877 = vsel %vm876, 0.0, %v813
        %v878 = vsel %vm836, 1.0, %v814
        %vm879 = vcmp.gt.f32.partialorder %v877, 0.0
        %v880 = vsel %vm879, %v362, 4294967295
        %v881 = vsel %vm255, %v880, 2147483648
        %v882 = vand.u32 %v881, 65535
        %v883 = vshra.s32 %v881, 16
        %v884 = vcvt.s32.f32 %v882
        %v885 = vcvt.s32.f32 %v883
        %886 = vmax.xlane.f32.xlu0 %v885
        %v887 = vpop.xlane.xlu0 %886
        %vm888 = vcmp.eq.f32.partialorder %v885, %v887
        %v889 = vsel %vm888, %v884, -inf
        %890 = vmax.xlane.f32.xlu0 %v889
        %v891 = vpop.xlane.xlu0 %890
        %v892 = vcvt.f32.s32 %v891
        %v893 = vcvt.f32.s32 %v887
        %v894 = vshll.u32 %v893, 16
        %v895 = vadd.s32 %v894, %v892
        %vm896 = vcmp.ge.s32.totalorder %v895, 0
        %vm897 = vcmp.eq.s32.totalorder %v880, %v895
        %v898 = vsel %vm896, 1, 0
        %vm899 = vcmp.eq.s32.totalorder %v898, 1
        %vm900 = vmand %vm897, %vm899
        %v901 = vsel %vm900, 1, 0
        %vm902 = vcmp.eq.s32.totalorder %v901, 1
        %v903 = vsel %vm902, %v327, 0.0
        %v904 = vsel %vm902, %v333, 0.0
        %v905 = vsel %vm902, %v337, 0.0
        %v906 = vsel %vm902, %v341, 0.0
        %v907 = vsel %vm902, %v353, 0.0
        %v908 = vsel %vm255, %v903, 0.0
        %909 = vadd.xlane.f32.xlu0 %v908
        %v910 = vpop.xlane.xlu0 %909
        %v911 = vsel %vm255, %v904, 0.0
        %912 = vadd.xlane.f32.xlu0 %v911
        %v913 = vpop.xlane.xlu0 %912
        %v914 = vsel %vm255, %v905, 0.0
        %915 = vadd.xlane.f32.xlu0 %v914
        %v916 = vpop.xlane.xlu0 %915
        %v917 = vsel %vm255, %v906, 0.0
        %918 = vadd.xlane.f32.xlu0 %v917
        %v919 = vpop.xlane.xlu0 %918
        %v920 = vsel %vm255, %v907, 0.0
        %921 = vadd.xlane.f32.xlu0 %v920
        %v922 = vpop.xlane.xlu0 %921
        %v923 = vmax.f32 %v327, %v910
        %v924 = vmax.f32 %v333, %v913
        %v925 = vmin.f32 %v337, %v916
        %v926 = vmin.f32 %v341, %v919
        %v927 = vsub.f32 %v925, %v923
        %v928 = vadd.f32 %v927, 1.0
        %v929 = vmax.f32 %v928, 0.0
        %v930 = vsub.f32 %v926, %v924
        %v931 = vadd.f32 %v930, 1.0
        %v932 = vmax.f32 %v931, 0.0
        %v933 = vmul.f32 %v929, %v932
        %v934 = vadd.f32 %v353, %v922
        %v935 = vsub.f32 %v934, %v933
        %v936 = vmul.f32 %v935, 0.5
        %vm937 = vcmp.gt.f32.partialorder %v933, %v936
        %vm938 = vcmp.gt.f32.partialorder %v935, 0.0
        %vm939 = vmand %vm937, %vm938
        %vm940 = vmor %vm939, %vm900
        %v941 = vsel %vm940, 0.0, %v877
        %v942 = vsel %vm900, 1.0, %v878
        %vm943 = vcmp.gt.f32.partialorder %v941, 0.0
        %v944 = vsel %vm943, %v362, 4294967295
        %v945 = vsel %vm255, %v944, 2147483648
        %v946 = vand.u32 %v945, 65535
        %v947 = vshra.s32 %v945, 16
        %v948 = vcvt.s32.f32 %v946
        %v949 = vcvt.s32.f32 %v947
        %950 = vmax.xlane.f32.xlu0 %v949
        %v951 = vpop.xlane.xlu0 %950
        %vm952 = vcmp.eq.f32.partialorder %v949, %v951
        %v953 = vsel %vm952, %v948, -inf
        %954 = vmax.xlane.f32.xlu0 %v953
        %v955 = vpop.xlane.xlu0 %954
        %v956 = vcvt.f32.s32 %v955
        %v957 = vcvt.f32.s32 %v951
        %v958 = vshll.u32 %v957, 16
        %v959 = vadd.s32 %v958, %v956
        %vm960 = vcmp.ge.s32.totalorder %v959, 0
        %vm961 = vcmp.eq.s32.totalorder %v944, %v959
        %v962 = vsel %vm960, 1, 0
        %vm963 = vcmp.eq.s32.totalorder %v962, 1
        %vm964 = vmand %vm961, %vm963
        %v965 = vsel %vm964, 1, 0
        %vm966 = vcmp.eq.s32.totalorder %v965, 1
        %v967 = vsel %vm966, %v327, 0.0
        %v968 = vsel %vm966, %v333, 0.0
        %v969 = vsel %vm966, %v337, 0.0
        %v970 = vsel %vm966, %v341, 0.0
        %v971 = vsel %vm966, %v353, 0.0
        %v972 = vsel %vm255, %v967, 0.0
        %973 = vadd.xlane.f32.xlu0 %v972
        %v974 = vpop.xlane.xlu0 %973
        %v975 = vsel %vm255, %v968, 0.0
        %976 = vadd.xlane.f32.xlu0 %v975
        %v977 = vpop.xlane.xlu0 %976
        %v978 = vsel %vm255, %v969, 0.0
        %979 = vadd.xlane.f32.xlu0 %v978
        %v980 = vpop.xlane.xlu0 %979
        %v981 = vsel %vm255, %v970, 0.0
        %982 = vadd.xlane.f32.xlu0 %v981
        %v983 = vpop.xlane.xlu0 %982
        %v984 = vsel %vm255, %v971, 0.0
        %985 = vadd.xlane.f32.xlu0 %v984
        %v986 = vpop.xlane.xlu0 %985
        %v987 = vmax.f32 %v327, %v974
        %v988 = vmax.f32 %v333, %v977
        %v989 = vmin.f32 %v337, %v980
        %v990 = vmin.f32 %v341, %v983
        %v991 = vsub.f32 %v989, %v987
        %v992 = vadd.f32 %v991, 1.0
        %v993 = vmax.f32 %v992, 0.0
        %v994 = vsub.f32 %v990, %v988
        %v995 = vadd.f32 %v994, 1.0
        %v996 = vmax.f32 %v995, 0.0
        %v997 = vmul.f32 %v993, %v996
        %v998 = vadd.f32 %v353, %v986
        %v999 = vsub.f32 %v998, %v997
        %v1000 = vmul.f32 %v999, 0.5
        %vm1001 = vcmp.gt.f32.partialorder %v997, %v1000
        %vm1002 = vcmp.gt.f32.partialorder %v999, 0.0
        %vm1003 = vmand %vm1001, %vm1002
        %vm1004 = vmor %vm1003, %vm964
        %v1005 = vsel %vm1004, 0.0, %v941
        %v1006 = vsel %vm964, 1.0, %v942
        %vm1007 = vcmp.gt.f32.partialorder %v1005, 0.0
        %v1008 = vsel %vm1007, %v362, 4294967295
        %v1009 = vsel %vm255, %v1008, 2147483648
        %v1010 = vand.u32 %v1009, 65535
        %v1011 = vshra.s32 %v1009, 16
        %v1012 = vcvt.s32.f32 %v1010
        %v1013 = vcvt.s32.f32 %v1011
        %1014 = vmax.xlane.f32.xlu0 %v1013
        %v1015 = vpop.xlane.xlu0 %1014
        %vm1016 = vcmp.eq.f32.partialorder %v1013, %v1015
        %v1017 = vsel %vm1016, %v1012, -inf
        %1018 = vmax.xlane.f32.xlu0 %v1017
        %v1019 = vpop.xlane.xlu0 %1018
        %v1020 = vcvt.f32.s32 %v1019
        %v1021 = vcvt.f32.s32 %v1015
        %v1022 = vshll.u32 %v1021, 16
        %v1023 = vadd.s32 %v1022, %v1020
        %vm1024 = vcmp.ge.s32.totalorder %v1023, 0
        %vm1025 = vcmp.eq.s32.totalorder %v1008, %v1023
        %v1026 = vsel %vm1024, 1, 0
        %vm1027 = vcmp.eq.s32.totalorder %v1026, 1
        %vm1028 = vmand %vm1025, %vm1027
        %v1029 = vsel %vm1028, 1, 0
        %vm1030 = vcmp.eq.s32.totalorder %v1029, 1
        %v1031 = vsel %vm1030, %v327, 0.0
        %v1032 = vsel %vm1030, %v333, 0.0
        %v1033 = vsel %vm1030, %v337, 0.0
        %v1034 = vsel %vm1030, %v341, 0.0
        %v1035 = vsel %vm1030, %v353, 0.0
        %v1036 = vsel %vm255, %v1031, 0.0
        %1037 = vadd.xlane.f32.xlu0 %v1036
        %v1038 = vpop.xlane.xlu0 %1037
        %v1039 = vsel %vm255, %v1032, 0.0
        %1040 = vadd.xlane.f32.xlu0 %v1039
        %v1041 = vpop.xlane.xlu0 %1040
        %v1042 = vsel %vm255, %v1033, 0.0
        %1043 = vadd.xlane.f32.xlu0 %v1042
        %v1044 = vpop.xlane.xlu0 %1043
        %v1045 = vsel %vm255, %v1034, 0.0
        %1046 = vadd.xlane.f32.xlu0 %v1045
        %v1047 = vpop.xlane.xlu0 %1046
        %v1048 = vsel %vm255, %v1035, 0.0
        %1049 = vadd.xlane.f32.xlu0 %v1048
        %v1050 = vpop.xlane.xlu0 %1049
        %v1051 = vmax.f32 %v327, %v1038
        %v1052 = vmax.f32 %v333, %v1041
        %v1053 = vmin.f32 %v337, %v1044
        %v1054 = vmin.f32 %v341, %v1047
        %v1055 = vsub.f32 %v1053, %v1051
        %v1056 = vadd.f32 %v1055, 1.0
        %v1057 = vmax.f32 %v1056, 0.0
        %v1058 = vsub.f32 %v1054, %v1052
        %v1059 = vadd.f32 %v1058, 1.0
        %v1060 = vmax.f32 %v1059, 0.0
        %v1061 = vmul.f32 %v1057, %v1060
        %v1062 = vadd.f32 %v353, %v1050
        %v1063 = vsub.f32 %v1062, %v1061
        %v1064 = vmul.f32 %v1063, 0.5
        %vm1065 = vcmp.gt.f32.partialorder %v1061, %v1064
        %vm1066 = vcmp.gt.f32.partialorder %v1063, 0.0
        %vm1067 = vmand %vm1065, %vm1066
        %vm1068 = vmor %vm1067, %vm1028
        %v1069 = vsel %vm1068, 0.0, %v1005
        %v1070 = vsel %vm1028, 1.0, %v1006
        %vm1071 = vcmp.gt.f32.partialorder %v1069, 0.0
        %v1072 = vsel %vm1071, %v362, 4294967295
        %v1073 = vsel %vm255, %v1072, 2147483648
        %v1074 = vand.u32 %v1073, 65535
        %v1075 = vshra.s32 %v1073, 16
        %v1076 = vcvt.s32.f32 %v1074
        %v1077 = vcvt.s32.f32 %v1075
        %1078 = vmax.xlane.f32.xlu0 %v1077
        %v1079 = vpop.xlane.xlu0 %1078
        %vm1080 = vcmp.eq.f32.partialorder %v1077, %v1079
        %v1081 = vsel %vm1080, %v1076, -inf
        %1082 = vmax.xlane.f32.xlu0 %v1081
        %v1083 = vpop.xlane.xlu0 %1082
        %v1084 = vcvt.f32.s32 %v1083
        %v1085 = vcvt.f32.s32 %v1079
        %v1086 = vshll.u32 %v1085, 16
        %v1087 = vadd.s32 %v1086, %v1084
        %vm1088 = vcmp.ge.s32.totalorder %v1087, 0
        %vm1089 = vcmp.eq.s32.totalorder %v1072, %v1087
        %v1090 = vsel %vm1088, 1, 0
        %vm1091 = vcmp.eq.s32.totalorder %v1090, 1
        %vm1092 = vmand %vm1089, %vm1091
        %v1093 = vsel %vm1092, 1, 0
        %vm1094 = vcmp.eq.s32.totalorder %v1093, 1
        %v1095 = vsel %vm1094, %v327, 0.0
        %v1096 = vsel %vm1094, %v333, 0.0
        %v1097 = vsel %vm1094, %v337, 0.0
        %v1098 = vsel %vm1094, %v341, 0.0
        %v1099 = vsel %vm1094, %v353, 0.0
        %v1100 = vsel %vm255, %v1095, 0.0
        %1101 = vadd.xlane.f32.xlu0 %v1100
        %v1102 = vpop.xlane.xlu0 %1101
        %v1103 = vsel %vm255, %v1096, 0.0
        %1104 = vadd.xlane.f32.xlu0 %v1103
        %v1105 = vpop.xlane.xlu0 %1104
        %v1106 = vsel %vm255, %v1097, 0.0
        %1107 = vadd.xlane.f32.xlu0 %v1106
        %v1108 = vpop.xlane.xlu0 %1107
        %v1109 = vsel %vm255, %v1098, 0.0
        %1110 = vadd.xlane.f32.xlu0 %v1109
        %v1111 = vpop.xlane.xlu0 %1110
        %v1112 = vsel %vm255, %v1099, 0.0
        %1113 = vadd.xlane.f32.xlu0 %v1112
        %v1114 = vpop.xlane.xlu0 %1113
        %v1115 = vmax.f32 %v327, %v1102
        %v1116 = vmax.f32 %v333, %v1105
        %v1117 = vmin.f32 %v337, %v1108
        %v1118 = vmin.f32 %v341, %v1111
        %v1119 = vsub.f32 %v1117, %v1115
        %v1120 = vadd.f32 %v1119, 1.0
        %v1121 = vmax.f32 %v1120, 0.0
        %v1122 = vsub.f32 %v1118, %v1116
        %v1123 = vadd.f32 %v1122, 1.0
        %v1124 = vmax.f32 %v1123, 0.0
        %v1125 = vmul.f32 %v1121, %v1124
        %v1126 = vadd.f32 %v353, %v1114
        %v1127 = vsub.f32 %v1126, %v1125
        %v1128 = vmul.f32 %v1127, 0.5
        %vm1129 = vcmp.gt.f32.partialorder %v1125, %v1128
        %vm1130 = vcmp.gt.f32.partialorder %v1127, 0.0
        %vm1131 = vmand %vm1129, %vm1130
        %vm1132 = vmor %vm1131, %vm1092
        %v1133 = vsel %vm1132, 0.0, %v1069
        %v1134 = vsel %vm1092, 1.0, %v1070
        %vm1135 = vcmp.gt.f32.partialorder %v1133, 0.0
        %v1136 = vsel %vm1135, %v362, 4294967295
        %v1137 = vsel %vm255, %v1136, 2147483648
        %v1138 = vand.u32 %v1137, 65535
        %v1139 = vshra.s32 %v1137, 16
        %v1140 = vcvt.s32.f32 %v1138
        %v1141 = vcvt.s32.f32 %v1139
        %1142 = vmax.xlane.f32.xlu0 %v1141
        %v1143 = vpop.xlane.xlu0 %1142
        %vm1144 = vcmp.eq.f32.partialorder %v1141, %v1143
        %v1145 = vsel %vm1144, %v1140, -inf
        %1146 = vmax.xlane.f32.xlu0 %v1145
        %v1147 = vpop.xlane.xlu0 %1146
        %v1148 = vcvt.f32.s32 %v1147
        %v1149 = vcvt.f32.s32 %v1143
        %v1150 = vshll.u32 %v1149, 16
        %v1151 = vadd.s32 %v1150, %v1148
        %vm1152 = vcmp.ge.s32.totalorder %v1151, 0
        %vm1153 = vcmp.eq.s32.totalorder %v1136, %v1151
        %v1154 = vsel %vm1152, 1, 0
        %vm1155 = vcmp.eq.s32.totalorder %v1154, 1
        %vm1156 = vmand %vm1153, %vm1155
        %v1157 = vsel %vm1156, 1, 0
        %vm1158 = vcmp.eq.s32.totalorder %v1157, 1
        %v1159 = vsel %vm1158, %v327, 0.0
        %v1160 = vsel %vm1158, %v333, 0.0
        %v1161 = vsel %vm1158, %v337, 0.0
        %v1162 = vsel %vm1158, %v341, 0.0
        %v1163 = vsel %vm1158, %v353, 0.0
        %v1164 = vsel %vm255, %v1159, 0.0
        %1165 = vadd.xlane.f32.xlu0 %v1164
        %v1166 = vpop.xlane.xlu0 %1165
        %v1167 = vsel %vm255, %v1160, 0.0
        %1168 = vadd.xlane.f32.xlu0 %v1167
        %v1169 = vpop.xlane.xlu0 %1168
        %v1170 = vsel %vm255, %v1161, 0.0
        %1171 = vadd.xlane.f32.xlu0 %v1170
        %v1172 = vpop.xlane.xlu0 %1171
        %v1173 = vsel %vm255, %v1162, 0.0
        %1174 = vadd.xlane.f32.xlu0 %v1173
        %v1175 = vpop.xlane.xlu0 %1174
        %v1176 = vsel %vm255, %v1163, 0.0
        %1177 = vadd.xlane.f32.xlu0 %v1176
        %v1178 = vpop.xlane.xlu0 %1177
        %v1179 = vmax.f32 %v327, %v1166
        %v1180 = vmax.f32 %v333, %v1169
        %v1181 = vmin.f32 %v337, %v1172
        %v1182 = vmin.f32 %v341, %v1175
        %v1183 = vsub.f32 %v1181, %v1179
        %v1184 = vadd.f32 %v1183, 1.0
        %v1185 = vmax.f32 %v1184, 0.0
        %v1186 = vsub.f32 %v1182, %v1180
        %v1187 = vadd.f32 %v1186, 1.0
        %v1188 = vmax.f32 %v1187, 0.0
        %v1189 = vmul.f32 %v1185, %v1188
        %v1190 = vadd.f32 %v353, %v1178
        %v1191 = vsub.f32 %v1190, %v1189
        %v1192 = vmul.f32 %v1191, 0.5
        %vm1193 = vcmp.gt.f32.partialorder %v1189, %v1192
        %vm1194 = vcmp.gt.f32.partialorder %v1191, 0.0
        %vm1195 = vmand %vm1193, %vm1194
        %vm1196 = vmor %vm1195, %vm1156
        %v1197 = vsel %vm1196, 0.0, %v1133
        %v1198 = vsel %vm1156, 1.0, %v1134
        %vm1199 = vcmp.gt.f32.partialorder %v1197, 0.0
        %v1200 = vsel %vm1199, %v362, 4294967295
        %v1201 = vsel %vm255, %v1200, 2147483648
        %v1202 = vand.u32 %v1201, 65535
        %v1203 = vshra.s32 %v1201, 16
        %v1204 = vcvt.s32.f32 %v1202
        %v1205 = vcvt.s32.f32 %v1203
        %1206 = vmax.xlane.f32.xlu0 %v1205
        %v1207 = vpop.xlane.xlu0 %1206
        %vm1208 = vcmp.eq.f32.partialorder %v1205, %v1207
        %v1209 = vsel %vm1208, %v1204, -inf
        %1210 = vmax.xlane.f32.xlu0 %v1209
        %v1211 = vpop.xlane.xlu0 %1210
        %v1212 = vcvt.f32.s32 %v1211
        %v1213 = vcvt.f32.s32 %v1207
        %v1214 = vshll.u32 %v1213, 16
        %v1215 = vadd.s32 %v1214, %v1212
        %vm1216 = vcmp.ge.s32.totalorder %v1215, 0
        %vm1217 = vcmp.eq.s32.totalorder %v1200, %v1215
        %v1218 = vsel %vm1216, 1, 0
        %vm1219 = vcmp.eq.s32.totalorder %v1218, 1
        %vm1220 = vmand %vm1217, %vm1219
        %v1221 = vsel %vm1220, 1, 0
        %vm1222 = vcmp.eq.s32.totalorder %v1221, 1
        %v1223 = vsel %vm1222, %v327, 0.0
        %v1224 = vsel %vm1222, %v333, 0.0
        %v1225 = vsel %vm1222, %v337, 0.0
        %v1226 = vsel %vm1222, %v341, 0.0
        %v1227 = vsel %vm1222, %v353, 0.0
        %v1228 = vsel %vm255, %v1223, 0.0
        %1229 = vadd.xlane.f32.xlu0 %v1228
        %v1230 = vpop.xlane.xlu0 %1229
        %v1231 = vsel %vm255, %v1224, 0.0
        %1232 = vadd.xlane.f32.xlu0 %v1231
        %v1233 = vpop.xlane.xlu0 %1232
        %v1234 = vsel %vm255, %v1225, 0.0
        %1235 = vadd.xlane.f32.xlu0 %v1234
        %v1236 = vpop.xlane.xlu0 %1235
        %v1237 = vsel %vm255, %v1226, 0.0
        %1238 = vadd.xlane.f32.xlu0 %v1237
        %v1239 = vpop.xlane.xlu0 %1238
        %v1240 = vsel %vm255, %v1227, 0.0
        %1241 = vadd.xlane.f32.xlu0 %v1240
        %v1242 = vpop.xlane.xlu0 %1241
        %v1243 = vmax.f32 %v327, %v1230
        %v1244 = vmax.f32 %v333, %v1233
        %v1245 = vmin.f32 %v337, %v1236
        %v1246 = vmin.f32 %v341, %v1239
        %v1247 = vsub.f32 %v1245, %v1243
        %v1248 = vadd.f32 %v1247, 1.0
        %v1249 = vmax.f32 %v1248, 0.0
        %v1250 = vsub.f32 %v1246, %v1244
        %v1251 = vadd.f32 %v1250, 1.0
        %v1252 = vmax.f32 %v1251, 0.0
        %v1253 = vmul.f32 %v1249, %v1252
        %v1254 = vadd.f32 %v353, %v1242
        %v1255 = vsub.f32 %v1254, %v1253
        %v1256 = vmul.f32 %v1255, 0.5
        %vm1257 = vcmp.gt.f32.partialorder %v1253, %v1256
        %vm1258 = vcmp.gt.f32.partialorder %v1255, 0.0
        %vm1259 = vmand %vm1257, %vm1258
        %vm1260 = vmor %vm1259, %vm1220
        %v1261 = vsel %vm1260, 0.0, %v1197
        %v1262 = vsel %vm1220, 1.0, %v1198
        %vm1263 = vcmp.gt.f32.partialorder %v1261, 0.0
        %v1264 = vsel %vm1263, %v362, 4294967295
        %v1265 = vsel %vm255, %v1264, 2147483648
        %v1266 = vand.u32 %v1265, 65535
        %v1267 = vshra.s32 %v1265, 16
        %v1268 = vcvt.s32.f32 %v1266
        %v1269 = vcvt.s32.f32 %v1267
        %1270 = vmax.xlane.f32.xlu0 %v1269
        %v1271 = vpop.xlane.xlu0 %1270
        %vm1272 = vcmp.eq.f32.partialorder %v1269, %v1271
        %v1273 = vsel %vm1272, %v1268, -inf
        %1274 = vmax.xlane.f32.xlu0 %v1273
        %v1275 = vpop.xlane.xlu0 %1274
        %v1276 = vcvt.f32.s32 %v1275
        %v1277 = vcvt.f32.s32 %v1271
        %v1278 = vshll.u32 %v1277, 16
        %v1279 = vadd.s32 %v1278, %v1276
        %vm1280 = vcmp.ge.s32.totalorder %v1279, 0
        %vm1281 = vcmp.eq.s32.totalorder %v1264, %v1279
        %v1282 = vsel %vm1280, 1, 0
        %vm1283 = vcmp.eq.s32.totalorder %v1282, 1
        %vm1284 = vmand %vm1281, %vm1283
        %v1285 = vsel %vm1284, 1, 0
        %vm1286 = vcmp.eq.s32.totalorder %v1285, 1
        %v1287 = vsel %vm1286, %v327, 0.0
        %v1288 = vsel %vm1286, %v333, 0.0
        %v1289 = vsel %vm1286, %v337, 0.0
        %v1290 = vsel %vm1286, %v341, 0.0
        %v1291 = vsel %vm1286, %v353, 0.0
        %v1292 = vsel %vm255, %v1287, 0.0
        %1293 = vadd.xlane.f32.xlu0 %v1292
        %v1294 = vpop.xlane.xlu0 %1293
        %v1295 = vsel %vm255, %v1288, 0.0
        %1296 = vadd.xlane.f32.xlu0 %v1295
        %v1297 = vpop.xlane.xlu0 %1296
        %v1298 = vsel %vm255, %v1289, 0.0
        %1299 = vadd.xlane.f32.xlu0 %v1298
        %v1300 = vpop.xlane.xlu0 %1299
        %v1301 = vsel %vm255, %v1290, 0.0
        %1302 = vadd.xlane.f32.xlu0 %v1301
        %v1303 = vpop.xlane.xlu0 %1302
        %v1304 = vsel %vm255, %v1291, 0.0
        %1305 = vadd.xlane.f32.xlu0 %v1304
        %v1306 = vpop.xlane.xlu0 %1305
        %v1307 = vmax.f32 %v327, %v1294
        %v1308 = vmax.f32 %v333, %v1297
        %v1309 = vmin.f32 %v337, %v1300
        %v1310 = vmin.f32 %v341, %v1303
        %v1311 = vsub.f32 %v1309, %v1307
        %v1312 = vadd.f32 %v1311, 1.0
        %v1313 = vmax.f32 %v1312, 0.0
        %v1314 = vsub.f32 %v1310, %v1308
        %v1315 = vadd.f32 %v1314, 1.0
        %v1316 = vmax.f32 %v1315, 0.0
        %v1317 = vmul.f32 %v1313, %v1316
        %v1318 = vadd.f32 %v353, %v1306
        %v1319 = vsub.f32 %v1318, %v1317
        %v1320 = vmul.f32 %v1319, 0.5
        %vm1321 = vcmp.gt.f32.partialorder %v1317, %v1320
        %vm1322 = vcmp.gt.f32.partialorder %v1319, 0.0
        %vm1323 = vmand %vm1321, %vm1322
        %vm1324 = vmor %vm1323, %vm1284
        %v1325 = vsel %vm1324, 0.0, %v1261
        %v1326 = vsel %vm1284, 1.0, %v1262
        %vm1327 = vcmp.gt.f32.partialorder %v1325, 0.0
        %v1328 = vsel %vm1327, %v362, 4294967295
        %v1329 = vsel %vm255, %v1328, 2147483648
        %v1330 = vand.u32 %v1329, 65535
        %v1331 = vshra.s32 %v1329, 16
        %v1332 = vcvt.s32.f32 %v1330
        %v1333 = vcvt.s32.f32 %v1331
        %1334 = vmax.xlane.f32.xlu0 %v1333
        %v1335 = vpop.xlane.xlu0 %1334
        %vm1336 = vcmp.eq.f32.partialorder %v1333, %v1335
        %v1337 = vsel %vm1336, %v1332, -inf
        %1338 = vmax.xlane.f32.xlu0 %v1337
        %v1339 = vpop.xlane.xlu0 %1338
        %v1340 = vcvt.f32.s32 %v1339
        %v1341 = vcvt.f32.s32 %v1335
        %v1342 = vshll.u32 %v1341, 16
        %v1343 = vadd.s32 %v1342, %v1340
        %vm1344 = vcmp.ge.s32.totalorder %v1343, 0
        %vm1345 = vcmp.eq.s32.totalorder %v1328, %v1343
        %v1346 = vsel %vm1344, 1, 0
        %vm1347 = vcmp.eq.s32.totalorder %v1346, 1
        %vm1348 = vmand %vm1345, %vm1347
        %v1349 = vsel %vm1348, 1.0, %v1326
        %v1350 = vmul.f32 %v274, %v1349
        %v1351 = vsel %vm255, %v1350, -inf
        %v1352 = vrot.slane %v1351, 4
        %v1353 = vmax.f32 %v1351, %v1352
        %v1354 = vrot.slane %v1353, 2
        %v1355 = vmax.f32 %v1353, %v1354
        %v1356 = vrot.slane %v1355, 1
        %v1357 = vmax.f32 %v1355, %v1356
        %vm1358 = vcmp.eq.f32.partialorder %v1350, %v1357
        %v1359 = vsel %vm1358, %v357, 8
        %v1360 = vsel %vm255, %v1359, 2147483647
        %v1361 = vrot.slane %v1360, 4
        %vm1362 = vcmp.lt.s32.totalorder %v1360, %v1361
        %v1363 = vsel %vm1362, %v1360, %v1361
        %v1364 = vrot.slane %v1363, 2
        %vm1365 = vcmp.lt.s32.totalorder %v1363, %v1364
        %v1366 = vsel %vm1365, %v1363, %v1364
        %v1367 = vrot.slane %v1366, 1
        %vm1368 = vcmp.lt.s32.totalorder %v1366, %v1367
        %v1369 = vsel %vm1368, %v1366, %v1367
        %vm1370 = vcmp.eq.s32.totalorder %v357, %v1369
        %v1371 = vsel %vm1370, 1, 0
        %vm1372 = vcmp.eq.s32.totalorder %v1371, 1
        %v1373 = vsel %vm1372, %v327, 0.0
        %v1374 = vsel %vm1372, %v333, 0.0
        %v1375 = vsel %vm1372, %v337, 0.0
        %v1376 = vsel %vm1372, %v341, 0.0
        %v1377 = vsel %vm255, %v1373, 0.0
        %v1378 = vrot.slane %v1377, 4
        %v1379 = vadd.f32 %v1377, %v1378
        %v1380 = vrot.slane %v1379, 2
        %v1381 = vadd.f32 %v1379, %v1380
        %v1382 = vrot.slane %v1381, 1
        %v1383 = vadd.f32 %v1381, %v1382
        %v1384 = vsel %vm255, %v1374, 0.0
        %v1385 = vrot.slane %v1384, 4
        %v1386 = vadd.f32 %v1384, %v1385
        %v1387 = vrot.slane %v1386, 2
        %v1388 = vadd.f32 %v1386, %v1387
        %v1389 = vrot.slane %v1388, 1
        %v1390 = vadd.f32 %v1388, %v1389
        %v1391 = vsel %vm255, %v1375, 0.0
        %v1392 = vrot.slane %v1391, 4
        %v1393 = vadd.f32 %v1391, %v1392
        %v1394 = vrot.slane %v1393, 2
        %v1395 = vadd.f32 %v1393, %v1394
        %v1396 = vrot.slane %v1395, 1
        %v1397 = vadd.f32 %v1395, %v1396
        %v1398 = vsel %vm255, %v1376, 0.0
        %v1399 = vrot.slane %v1398, 4
        %v1400 = vadd.f32 %v1398, %v1399
        %v1401 = vrot.slane %v1400, 2
        %v1402 = vadd.f32 %v1400, %v1401
        %v1403 = vrot.slane %v1402, 1
        %v1404 = vadd.f32 %v1402, %v1403
        %v1405 = vcvt.s32.f32 %v1369
        %vm1410 = vcmask 1043459
        %v1411 = vsel %vm1410, %v1390, %v1383
        %vm1412 = vcmask 1044484
        %v1413 = vsel %vm1412, %v1397, %v1411
        %vm1414 = vcmask 1045509
        %v1415 = vsel %vm1414, %v1404, %v1413
        %vm1417 = vcmask 1040384
        %v1418 = vsel %vm1417, %v1357, %v1405
        %vm1419 = vcmask 1041408
        %v1420 = vsel %vm1419, %v1418, %v1415
        %vm1421 = vcmask 1045504
        %v1422 = vsel %vm1421, %v1420, 0.0
        %1423 = vst.msk [vmem:[%s234] sm:$0xff] %vm255, %v1422
        %s1424 = sand.u32 %s115, 1
        %s1425 = scalar_lea.sflag [#allocation5], %s1424
        %s1426 = sand.u32 %s115, 1
        %s1427 = smul.addr %s1426, 32
        %s1428 = scalar_lea.vmem [#allocation4], %s1427
        %s1429 = sand.u32 %s141, 1
        %s1430 = scalar_lea.sflag [#allocation7], %s1429
        %s1431 = sand.u32 %s141, 1
        %s1432 = smul.addr %s1431, 8
        %s1433 = scalar_lea.vmem [#allocation6], %s1432
        // Predicated region
        $region33: #{_postprocess_batch.1} parent=31 // pred_check
          %p1434 = pneg %p125
        $region34: #{_postprocess_batch.1} parent=31 // pred_check_branch
          %1436 = sbr.rel (%p1434) target = $region36
        $region35: #{_postprocess_batch.1} parent=31 // pred_region
          %s1438 = ssub.s32 512, 512
          %1439 = vsyncadd %s1425, %s1438
          %s1440 = smul.addr %s29, 4
          %s1441 = smul.addr %s1440, 128
          %s1442 = scalar_lea.hbm %s4, %s1441
          %s1443 = sshll.u32 %s1428, 4
          %s1444 = int_to_ptr.vmem [resolvable:$true] %s1443
          %1449 = dma.vmem_to_hbm [thread:$0]  %s1444, 512, %s1442, %s1425, 128, 128, 8
        $region36: #{_postprocess_batch.1} parent=31 // pred_fallthru
          _
        // Predicated region
        $region37: #{_postprocess_batch.1} parent=31 // pred_check
          %p1450 = pneg %p151
        $region38: #{_postprocess_batch.1} parent=31 // pred_check_branch
          %1452 = sbr.rel (%p1450) target = $region40
        $region39: #{_postprocess_batch.1} parent=31 // pred_region
          %s1454 = ssub.s32 128, 128
          %1455 = vsyncadd %s1430, %s1454
          %s1456 = smul.addr %s29, 128
          %s1457 = scalar_lea.hbm %s5, %s1456
          %s1459 = sshll.u32 %s1433, 4
          %s1460 = int_to_ptr.vmem [resolvable:$true] %s1459
          %1462 = dma.vmem_to_hbm [thread:$0]  %s1460, 128, %s1457, %s1430
        $region40: #{_postprocess_batch.1} parent=31 // pred_fallthru
          _
      $region32: #{_postprocess_batch.1} parent=5 // pred_fallthru
        _
      %p1463 = scmp.le.s32.totalorder 2, %s24
      // Predicated region
      $region41: #{_postprocess_batch.1} parent=5 // pred_check
        %p1464 = pneg %p1463
      $region42: #{_postprocess_batch.1} parent=5 // pred_check_branch
        %1466 = sbr.rel (%p1464) target = $region44
      $region43: #{_postprocess_batch.1} parent=5 // pred_region
        %s1467 = ssub.s32 %s24, 2
        // Predicated region
        $region45: #{_postprocess_batch.1} parent=43 // pred_check
          %p1468 = pneg %p131
        $region46: #{_postprocess_batch.1} parent=43 // pred_check_branch
          %1470 = sbr.rel (%p1468) target = $region48
        $region47: #{_postprocess_batch.1} parent=43 // pred_region
          %s1471 = sand.u32 %s116, 1
          %s1472 = scalar_lea.sflag [#allocation5], %s1471
          %s1473 = sand.u32 %s116, 1
          %s1474 = smul.addr %s1473, 32
          %s1475 = scalar_lea.vmem [#allocation4], %s1474
          %1476 = dma.done %s1472, 512
        $region48: #{_postprocess_batch.1} parent=43 // pred_fallthru
          _
        // Predicated region
        $region49: #{_postprocess_batch.1} parent=43 // pred_check
          %p1477 = pneg %p157
        $region50: #{_postprocess_batch.1} parent=43 // pred_check_branch
          %1479 = sbr.rel (%p1477) target = $region52
        $region51: #{_postprocess_batch.1} parent=43 // pred_region
          %s1480 = sand.u32 %s142, 1
          %s1481 = scalar_lea.sflag [#allocation7], %s1480
          %s1482 = sand.u32 %s142, 1
          %s1483 = smul.addr %s1482, 8
          %s1484 = scalar_lea.vmem [#allocation6], %s1483
          %1485 = dma.done %s1481, 128
        $region52: #{_postprocess_batch.1} parent=43 // pred_fallthru
          _
      $region44: #{_postprocess_batch.1} parent=5 // pred_fallthru
        _
    $region6: #{_postprocess_batch.1} parent=1 // loop_footer
      %s28 = sadd.s32 1, %s24
    $region7: #{_postprocess_batch.1} parent=1 // loop_footer_branch
      %23 = sbr.rel target = $region3
    $region8: #{_postprocess_batch.1} parent=1 // loop_exit
      _
    %1486 = vsyncpa [#allocation5], 1
    %s1487 = scalar_lea.sflag [#allocation5], 1
    %1488 = vsyncpa %s1487, 1
    %1489 = vsyncpa [#allocation7], 1
    %s1490 = scalar_lea.sflag [#allocation7], 1
    %1491 = vsyncpa %s1490, 1

</llo_original>
